<compile_context>
chip_gen: v6e
topology: v6e:2x2x1
jax: 0.10.0
libtpu: 0.0.40
codegen_flags: <defaults>
</compile_context>

<pallas_src>
import jax
import jax.numpy as jnp
from jax import lax
from jax.experimental import pallas as pl
from jax.experimental.pallas import tpu as pltpu

# ---------------- small config (structure of DogeConfig) ----------------
B = 2
S = 16
HIDDEN = 64
NUM_HEADS = 4
NUM_KV_HEADS = 2
HEAD_DIM = HIDDEN // NUM_HEADS            # 16
GROUPS = NUM_HEADS // NUM_KV_HEADS        # 2
NQ = NUM_HEADS * HEAD_DIM                 # 64
NKV = NUM_KV_HEADS * HEAD_DIM             # 32
RMS_EPS = 1e-6
ROPE_THETA = 10000.0
KEEP_WINDOW_SIZE = 2048                   # > S -> top-k branch is a no-op
SCALING = HEAD_DIM ** -0.5                # 0.25 (exact power of two)
INV_SCALING = 1.0 / SCALING               # 4.0
MIN_VAL = float(jnp.finfo(jnp.float32).min)


# ---------------- the fused Pallas kernel ----------------
def _doge_attention_kernel(hs_ref, wqkv_ref, wdt_ref, wo_ref, a_ref,
                           qnw_ref, knw_ref, cos_ref, sin_ref, mask_ref,
                           out_ref, w_ref):
    f32 = jnp.float32

    # ---- fused QKV projection: (B*S, HIDDEN) @ (HIDDEN, NQ+2*NKV) ----
    qkv = jnp.dot(hs_ref[...], wqkv_ref[...], preferred_element_type=f32)

    # ---- dt_states = exp(A * softplus(v_flat @ w_dt))  -> (B*S, KVH) ----
    v_flat = qkv[:, NQ + NKV:]
    dt_raw = jnp.dot(v_flat, wdt_ref[...], preferred_element_type=f32)
    softplus = jnp.maximum(dt_raw, 0.0) + jnp.log(1.0 + jnp.exp(-jnp.abs(dt_raw)))
    dt = jnp.exp(a_ref[...] * softplus)                       # (B*S, KVH)

    cos = cos_ref[...]                                        # (B*S, D)
    sin = sin_ref[...]
    qnw = qnw_ref[...]                                        # (1, D)
    knw = knw_ref[...]
    half = HEAD_DIM // 2

    def norm_rope(x, w):
        # per-head RMSNorm (f32) followed by rotary embedding; x: (B*S, D)
        var = jnp.mean(x * x, axis=-1, keepdims=True)
        xn = x * lax.rsqrt(var + RMS_EPS) * w
        rot = jnp.concatenate([-xn[:, half:], xn[:, :half]], axis=-1)
        return xn * cos + rot * sin

    q_heads = [norm_rope(qkv[:, h * HEAD_DIM:(h + 1) * HEAD_DIM], qnw)
               for h in range(NUM_HEADS)]
    k_heads = [norm_rope(qkv[:, NQ + h * HEAD_DIM:NQ + (h + 1) * HEAD_DIM], knw)
               for h in range(NUM_KV_HEADS)]
    v_heads = [qkv[:, NQ + NKV + h * HEAD_DIM:NQ + NKV + (h + 1) * HEAD_DIM]
               for h in range(NUM_KV_HEADS)]

    mask = mask_ref[...]                                      # (B*S, S): rows (b, i)
    ones_col = jnp.ones((GROUPS * S, 1), dtype=f32)

    w_rows = [None] * (B * NUM_HEADS)
    head_out = [[None] * NUM_HEADS for _ in range(B)]

    # Statically unrolled over (batch, kv head): 2 x 2 tiny 2-D tiles.
    for b in range(B):
        r0 = b * S
        m_b = jnp.concatenate([mask[r0:r0 + S, :]] * GROUPS, axis=0)   # (G*S, S)
        for kvh in range(NUM_KV_HEADS):
            k_t = k_heads[kvh][r0:r0 + S, :]                  # (S, D)
            v_t = v_heads[kvh][r0:r0 + S, :]                  # (S, D)
            dt_col = dt[r0:r0 + S, kvh:kvh + 1]               # (S, 1): dt per key pos

            # GQA: the G query heads sharing this kv head, stacked on the M dim.
            q_grp = jnp.concatenate(
                [q_heads[kvh * GROUPS + g][r0:r0 + S, :] for g in range(GROUPS)],
                axis=0)                                       # (G*S, D)

            # Fold per-key dynamic-mask bias into the contraction:
            #   [q | 1] . [k | dt/scale] * scale = q.k*scale + dt[j]
            q_aug = jnp.concatenate([q_grp, ones_col], axis=1)             # (G*S, D+1)
            k_aug = jnp.concatenate([k_t, dt_col * INV_SCALING], axis=1)   # (S,   D+1)
            scores = lax.dot_general(
                q_aug, k_aug, (((1,), (1,)), ((), ())),
                preferred_element_type=f32) * SCALING                      # (G*S, S)

            # prepare_dynamic_mask semantics: any nonzero additive-mask entry
            # is fully masked (matches the reference masked_fill(mask != 0)).
            scores = jnp.where(m_b != 0.0, MIN_VAL, scores)
            scores = scores - jnp.max(scores, axis=-1, keepdims=True)
            p = jnp.exp(scores)
            p = p / jnp.sum(p, axis=-1, keepdims=True)        # exact divide
            o_grp = jnp.dot(p, v_t, preferred_element_type=f32)            # (G*S, D)

            for g in range(GROUPS):
                h = kvh * GROUPS + g
                p_g = p[g * S:(g + 1) * S, :]                 # (S, S)
                # lane-dense (1, S*S) row of the attn-weights slab
                w_rows[b * NUM_HEADS + h] = jnp.concatenate(
                    [p_g[i:i + 1, :] for i in range(S)], axis=1)
                head_out[b][h] = o_grp[g * S:(g + 1) * S, :]

    # (B*H, S*S) lane-dense attention-weights output
    w_ref[...] = jnp.concatenate(w_rows, axis=0)

    # attn_out assembled directly in the (B*S, H*D) layout o_proj needs.
    attn_out = jnp.concatenate(
        [jnp.concatenate(head_out[b], axis=1) for b in range(B)], axis=0)
    out_ref[...] = jnp.dot(attn_out, wo_ref[...], preferred_element_type=f32)


# ---------------- wrapper: one pallas_call, free reshapes only ----------------
@jax.jit
def doge_attention_forward(params, hidden_states, cos, sin, attention_mask):
    Bb, Ss, hidden = hidden_states.shape
    hs2 = hidden_states.reshape(Bb * Ss, hidden)
    cos2 = cos.reshape(Bb * Ss, HEAD_DIM)
    sin2 = sin.reshape(Bb * Ss, HEAD_DIM)
    mask2 = attention_mask.reshape(Bb * Ss, Ss)        # (B,1,S,S) -> (B*S, S)

    vmem = pl.BlockSpec(memory_space=pltpu.MemorySpace.VMEM)
    out2, w2 = pl.pallas_call(
        _doge_attention_kernel,
        out_shape=(
            jax.ShapeDtypeStruct((Bb * Ss, hidden), jnp.float32),
            jax.ShapeDtypeStruct((Bb * NUM_HEADS, Ss * Ss), jnp.float32),
        ),
        in_specs=[vmem] * 10,
        out_specs=(vmem, vmem),
    )(hs2, params["w_qkv"], params["w_dt"], params["w_o"], params["A"],
      params["q_norm_w"], params["k_norm_w"], cos2, sin2, mask2)

    attn_output = out2.reshape(Bb, Ss, hidden)
    attn_weights = w2.reshape(Bb, NUM_HEADS, Ss, Ss)   # contiguous -> free reshape
    return attn_output, attn_weights


# ---------------- pure-JAX reference (for correctness check) ----------------
def _softplus(x):
    return jnp.maximum(x, 0.0) + jnp.log(1.0 + jnp.exp(-jnp.abs(x)))


@jax.jit
def reference_forward(params, hidden_states, cos, sin, attention_mask):
    HI = lax.Precision.HIGHEST
    Bb, Ss, hidden = hidden_states.shape
    x = hidden_states.reshape(Bb * Ss, hidden)
    qkv = jnp.dot(x, params["w_qkv"], precision=HI)
    q = qkv[:, :NQ].reshape(Bb, Ss, NUM_HEADS, HEAD_DIM)
    k = qkv[:, NQ:NQ + NKV].reshape(Bb, Ss, NUM_KV_HEADS, HEAD_DIM)
    v_flat = qkv[:, NQ + NKV:]
    v = v_flat.reshape(Bb, Ss, NUM_KV_HEADS, HEAD_DIM)

    def rms(t, w):
        var = jnp.mean(t * t, axis=-1, keepdims=True)
        return t * lax.rsqrt(var + RMS_EPS) * w.reshape(-1)

    def rot_half(t):
        h = HEAD_DIM // 2
        return jnp.concatenate([-t[..., h:], t[..., :h]], axis=-1)

    q = rms(q, params["q_norm_w"]).transpose(0, 2, 1, 3)       # (B,H,S,D)
    k = rms(k, params["k_norm_w"]).transpose(0, 2, 1, 3)       # (B,KVH,S,D)
    v = v.transpose(0, 2, 1, 3)

    cos4 = cos[:, None, :, :]
    sin4 = sin[:, None, :, :]
    q = q * cos4 + rot_half(q) * sin4
    k = k * cos4 + rot_half(k) * sin4

    dt = jnp.exp(params["A"].reshape(-1) *
                 _softplus(jnp.dot(v_flat, params["w_dt"], precision=HI)))
    dt = dt.reshape(Bb, Ss, NUM_KV_HEADS).transpose(0, 2, 1)   # (B,KVH,S)

    k_rep = jnp.repeat(k, GROUPS, axis=1)
    v_rep = jnp.repeat(v, GROUPS, axis=1)
    dt_rep = jnp.repeat(dt, GROUPS, axis=1)                    # (B,H,S)

    bias = jnp.where(attention_mask != 0.0, MIN_VAL, dt_rep[:, :, None, :])
    scores = jnp.einsum("bhqd,bhkd->bhqk", q, k_rep, precision=HI) * SCALING + bias
    scores = scores - jnp.max(scores, axis=-1, keepdims=True)
    p = jnp.exp(scores)
    p = p / jnp.sum(p, axis=-1, keepdims=True)
    o = jnp.einsum("bhqk,bhkd->bhqd", p, v_rep, precision=HI)
    o = o.transpose(0, 2, 1, 3).reshape(Bb * Ss, NUM_HEADS * HEAD_DIM)
    out = jnp.dot(o, params["w_o"], precision=HI)
    return out.reshape(Bb, Ss, hidden), p


# ---------------- deterministic parameter / input setup ----------------
def make_params(key):
    ks = jax.random.split(key, 6)

    def init_w(k, shape):
        return jax.random.normal(k, shape, jnp.float32) * 0.02

    wq = init_w(ks[0], (HIDDEN, NQ))
    wk = init_w(ks[1], (HIDDEN, NKV))
    wv = init_w(ks[2], (HIDDEN, NKV))
    return dict(
        # fused QKV weight built ONCE here (not per forward call)
        w_qkv=jnp.concatenate([wq, wk, wv], axis=1),           # (HIDDEN, 128)
        w_dt=init_w(ks[3], (NKV, NUM_KV_HEADS)),               # (32, 2)
        w_o=init_w(ks[4], (NQ, HIDDEN)),                       # (64, 64)
        A=jax.random.normal(ks[5], (1, NUM_KV_HEADS), jnp.float32) * 0.1,
        q_norm_w=jnp.ones((1, HEAD_DIM), jnp.float32),
        k_norm_w=jnp.ones((1, HEAD_DIM), jnp.float32),
    )


def make_rope(batch, seq):
    inv_freq = 1.0 / (ROPE_THETA ** (jnp.arange(0, HEAD_DIM, 2,
                                                 dtype=jnp.float32) / HEAD_DIM))
    pos = jnp.arange(seq, dtype=jnp.float32)
    freqs = pos[:, None] * inv_freq[None, :]
    emb = jnp.concatenate([freqs, freqs], axis=-1)             # (S, D)
    cos = jnp.broadcast_to(jnp.cos(emb)[None], (batch, seq, HEAD_DIM))
    sin = jnp.broadcast_to(jnp.sin(emb)[None], (batch, seq, HEAD_DIM))
    return cos, sin


if __name__ == "__main__":
    root = jax.random.PRNGKey(0)
    pkey, xkey = jax.random.split(root)

    params = make_params(pkey)
    hidden_states = jax.random.normal(xkey, (B, S, HIDDEN), jnp.float32)
    cos, sin = make_rope(B, S)

    # standard additive causal mask (B, 1, S, S): 0 allowed, MIN_VAL masked
    causal = jnp.tril(jnp.ones((S, S), dtype=bool))
    attention_mask = jnp.where(causal, 0.0, MIN_VAL)[None, None].astype(jnp.float32)
    attention_mask = jnp.broadcast_to(attention_mask, (B, 1, S, S))

    out, attn_w = doge_attention_forward(params, hidden_states, cos, sin,
                                         attention_mask)
    jax.block_until_ready(out)
    jax.block_until_ready(attn_w)

    assert out.shape == (B, S, HIDDEN)
    assert attn_w.shape == (B, NUM_HEADS, S, S)
    assert bool(jnp.all(jnp.isfinite(out)))
    assert bool(jnp.all(jnp.isfinite(attn_w)))

    # exact-divide softmax -> rows sum to 1
    assert bool(jnp.allclose(attn_w.sum(-1), 1.0, atol=1e-3))

    # correctness vs. pure-JAX reference of the same forward
    ref_out, ref_w = reference_forward(params, hidden_states, cos, sin,
                                       attention_mask)
    assert bool(jnp.allclose(out, ref_out, atol=5e-3, rtol=5e-2))
    assert bool(jnp.allclose(attn_w, ref_w, atol=5e-3, rtol=5e-2))

    print("KERNEL_OK")
</pallas_src>

<mosaic_0001>
module attributes {stable_mosaic.version = 11 : i64} {
  func.func @_doge_attention_kernel(%arg0: memref<32x64xf32, #tpu.memory_space<vmem>>, %arg1: memref<64x128xf32, #tpu.memory_space<vmem>>, %arg2: memref<32x2xf32, #tpu.memory_space<vmem>>, %arg3: memref<64x64xf32, #tpu.memory_space<vmem>>, %arg4: memref<1x2xf32, #tpu.memory_space<vmem>>, %arg5: memref<1x16xf32, #tpu.memory_space<vmem>>, %arg6: memref<1x16xf32, #tpu.memory_space<vmem>>, %arg7: memref<32x16xf32, #tpu.memory_space<vmem>>, %arg8: memref<32x16xf32, #tpu.memory_space<vmem>>, %arg9: memref<32x16xf32, #tpu.memory_space<vmem>>, %arg10: memref<32x64xf32, #tpu.memory_space<vmem>>, %arg11: memref<8x256xf32, #tpu.memory_space<vmem>>) attributes {dimension_semantics = [], scalar_prefetch = 0 : i64, scratch_operands = 0 : i64, tpu.core_type = #tpu.core_type<tc>} {
    %c0 = arith.constant 0 : index
    %c0_0 = arith.constant 0 : index
    %0 = vector.load %arg0[%c0, %c0_0] : memref<32x64xf32, #tpu.memory_space<vmem>>, vector<32x64xf32>
    %c0_1 = arith.constant 0 : index
    %c0_2 = arith.constant 0 : index
    %1 = vector.load %arg1[%c0_1, %c0_2] : memref<64x128xf32, #tpu.memory_space<vmem>>, vector<64x128xf32>
    %cst = arith.constant dense<0.000000e+00> : vector<32x128xf32>
    %2 = tpu.matmul %0, %1, %cst {dimension_numbers = #tpu.dot_dimension_numbers<[1], [0], [0], [1], [0, 0, 1, 1], [], []>} : vector<32x64xf32>, vector<64x128xf32>, vector<32x128xf32> -> vector<32x128xf32>
    %3 = vector.extract_strided_slice %2 {offsets = [0, 96], sizes = [32, 32], strides = [1, 1]} : vector<32x128xf32> to vector<32x32xf32>
    %c0_3 = arith.constant 0 : index
    %c0_4 = arith.constant 0 : index
    %4 = vector.load %arg2[%c0_3, %c0_4] : memref<32x2xf32, #tpu.memory_space<vmem>>, vector<32x2xf32>
    %cst_5 = arith.constant dense<0.000000e+00> : vector<32x2xf32>
    %5 = tpu.matmul %3, %4, %cst_5 {dimension_numbers = #tpu.dot_dimension_numbers<[1], [0], [0], [1], [0, 0, 1, 1], [], []>} : vector<32x32xf32>, vector<32x2xf32>, vector<32x2xf32> -> vector<32x2xf32>
    %cst_6 = arith.constant 0.000000e+00 : f32
    %6 = vector.broadcast %cst_6 : f32 to vector<32x2xf32>
    %7 = arith.maximumf %5, %6 : vector<32x2xf32>
    %8 = math.absf %5 : vector<32x2xf32>
    %cst_7 = arith.constant 0.000000e+00 : f32
    %9 = vector.broadcast %cst_7 : f32 to vector<32x2xf32>
    %10 = arith.subf %9, %8 : vector<32x2xf32>
    %11 = math.exp %10 : vector<32x2xf32>
    %cst_8 = arith.constant 1.000000e+00 : f32
    %12 = vector.broadcast %cst_8 : f32 to vector<32x2xf32>
    %13 = arith.addf %12, %11 : vector<32x2xf32>
    %14 = math.log %13 : vector<32x2xf32>
    %15 = arith.addf %7, %14 : vector<32x2xf32>
    %c0_9 = arith.constant 0 : index
    %c0_10 = arith.constant 0 : index
    %16 = vector.load %arg4[%c0_9, %c0_10] : memref<1x2xf32, #tpu.memory_space<vmem>>, vector<1x2xf32>
    %17 = vector.broadcast %16 : vector<1x2xf32> to vector<32x2xf32>
    %18 = arith.mulf %17, %15 : vector<32x2xf32>
    %19 = math.exp %18 : vector<32x2xf32>
    %c0_11 = arith.constant 0 : index
    %c0_12 = arith.constant 0 : index
    %20 = vector.load %arg7[%c0_11, %c0_12] : memref<32x16xf32, #tpu.memory_space<vmem>>, vector<32x16xf32>
    %c0_13 = arith.constant 0 : index
    %c0_14 = arith.constant 0 : index
    %21 = vector.load %arg8[%c0_13, %c0_14] : memref<32x16xf32, #tpu.memory_space<vmem>>, vector<32x16xf32>
    %c0_15 = arith.constant 0 : index
    %c0_16 = arith.constant 0 : index
    %22 = vector.load %arg5[%c0_15, %c0_16] : memref<1x16xf32, #tpu.memory_space<vmem>>, vector<1x16xf32>
    %c0_17 = arith.constant 0 : index
    %c0_18 = arith.constant 0 : index
    %23 = vector.load %arg6[%c0_17, %c0_18] : memref<1x16xf32, #tpu.memory_space<vmem>>, vector<1x16xf32>
    %24 = vector.extract_strided_slice %2 {offsets = [0, 0], sizes = [32, 16], strides = [1, 1]} : vector<32x128xf32> to vector<32x16xf32>
    %25 = arith.mulf %24, %24 : vector<32x16xf32>
    %cst_19 = arith.constant dense<0.000000e+00> : vector<32xf32>
    %26 = vector.multi_reduction <add>, %25, %cst_19 [1] : vector<32x16xf32> to vector<32xf32>
    %27 = vector.shape_cast %26 : vector<32xf32> to vector<32x1xf32>
    %cst_20 = arith.constant 1.600000e+01 : f32
    %28 = vector.broadcast %cst_20 : f32 to vector<32x1xf32>
    %29 = arith.divf %27, %28 : vector<32x1xf32>
    %cst_21 = arith.constant 9.99999997E-7 : f32
    %30 = vector.broadcast %cst_21 : f32 to vector<32x1xf32>
    %31 = arith.addf %29, %30 : vector<32x1xf32>
    %32 = math.rsqrt %31 : vector<32x1xf32>
    %33 = vector.broadcast %32 : vector<32x1xf32> to vector<32x16xf32>
    %34 = arith.mulf %24, %33 : vector<32x16xf32>
    %35 = vector.broadcast %22 : vector<1x16xf32> to vector<32x16xf32>
    %36 = arith.mulf %34, %35 : vector<32x16xf32>
    %37 = vector.extract_strided_slice %36 {offsets = [0, 8], sizes = [32, 8], strides = [1, 1]} : vector<32x16xf32> to vector<32x8xf32>
    %cst_22 = arith.constant 0.000000e+00 : f32
    %38 = vector.broadcast %cst_22 : f32 to vector<32x8xf32>
    %39 = arith.subf %38, %37 : vector<32x8xf32>
    %40 = vector.extract_strided_slice %36 {offsets = [0, 0], sizes = [32, 8], strides = [1, 1]} : vector<32x16xf32> to vector<32x8xf32>
    %41 = tpu.concatenate %39, %40 in 1 : vector<32x8xf32>, vector<32x8xf32> -> vector<32x16xf32>
    %42 = arith.mulf %36, %20 : vector<32x16xf32>
    %43 = arith.mulf %41, %21 : vector<32x16xf32>
    %44 = arith.addf %42, %43 : vector<32x16xf32>
    %45 = vector.extract_strided_slice %2 {offsets = [0, 16], sizes = [32, 16], strides = [1, 1]} : vector<32x128xf32> to vector<32x16xf32>
    %46 = arith.mulf %45, %45 : vector<32x16xf32>
    %cst_23 = arith.constant dense<0.000000e+00> : vector<32xf32>
    %47 = vector.multi_reduction <add>, %46, %cst_23 [1] : vector<32x16xf32> to vector<32xf32>
    %48 = vector.shape_cast %47 : vector<32xf32> to vector<32x1xf32>
    %cst_24 = arith.constant 1.600000e+01 : f32
    %49 = vector.broadcast %cst_24 : f32 to vector<32x1xf32>
    %50 = arith.divf %48, %49 : vector<32x1xf32>
    %cst_25 = arith.constant 9.99999997E-7 : f32
    %51 = vector.broadcast %cst_25 : f32 to vector<32x1xf32>
    %52 = arith.addf %50, %51 : vector<32x1xf32>
    %53 = math.rsqrt %52 : vector<32x1xf32>
    %54 = vector.broadcast %53 : vector<32x1xf32> to vector<32x16xf32>
    %55 = arith.mulf %45, %54 : vector<32x16xf32>
    %56 = vector.broadcast %22 : vector<1x16xf32> to vector<32x16xf32>
    %57 = arith.mulf %55, %56 : vector<32x16xf32>
    %58 = vector.extract_strided_slice %57 {offsets = [0, 8], sizes = [32, 8], strides = [1, 1]} : vector<32x16xf32> to vector<32x8xf32>
    %cst_26 = arith.constant 0.000000e+00 : f32
    %59 = vector.broadcast %cst_26 : f32 to vector<32x8xf32>
    %60 = arith.subf %59, %58 : vector<32x8xf32>
    %61 = vector.extract_strided_slice %57 {offsets = [0, 0], sizes = [32, 8], strides = [1, 1]} : vector<32x16xf32> to vector<32x8xf32>
    %62 = tpu.concatenate %60, %61 in 1 : vector<32x8xf32>, vector<32x8xf32> -> vector<32x16xf32>
    %63 = arith.mulf %57, %20 : vector<32x16xf32>
    %64 = arith.mulf %62, %21 : vector<32x16xf32>
    %65 = arith.addf %63, %64 : vector<32x16xf32>
    %66 = vector.extract_strided_slice %2 {offsets = [0, 32], sizes = [32, 16], strides = [1, 1]} : vector<32x128xf32> to vector<32x16xf32>
    %67 = arith.mulf %66, %66 : vector<32x16xf32>
    %cst_27 = arith.constant dense<0.000000e+00> : vector<32xf32>
    %68 = vector.multi_reduction <add>, %67, %cst_27 [1] : vector<32x16xf32> to vector<32xf32>
    %69 = vector.shape_cast %68 : vector<32xf32> to vector<32x1xf32>
    %cst_28 = arith.constant 1.600000e+01 : f32
    %70 = vector.broadcast %cst_28 : f32 to vector<32x1xf32>
    %71 = arith.divf %69, %70 : vector<32x1xf32>
    %cst_29 = arith.constant 9.99999997E-7 : f32
    %72 = vector.broadcast %cst_29 : f32 to vector<32x1xf32>
    %73 = arith.addf %71, %72 : vector<32x1xf32>
    %74 = math.rsqrt %73 : vector<32x1xf32>
    %75 = vector.broadcast %74 : vector<32x1xf32> to vector<32x16xf32>
    %76 = arith.mulf %66, %75 : vector<32x16xf32>
    %77 = vector.broadcast %22 : vector<1x16xf32> to vector<32x16xf32>
    %78 = arith.mulf %76, %77 : vector<32x16xf32>
    %79 = vector.extract_strided_slice %78 {offsets = [0, 8], sizes = [32, 8], strides = [1, 1]} : vector<32x16xf32> to vector<32x8xf32>
    %cst_30 = arith.constant 0.000000e+00 : f32
    %80 = vector.broadcast %cst_30 : f32 to vector<32x8xf32>
    %81 = arith.subf %80, %79 : vector<32x8xf32>
    %82 = vector.extract_strided_slice %78 {offsets = [0, 0], sizes = [32, 8], strides = [1, 1]} : vector<32x16xf32> to vector<32x8xf32>
    %83 = tpu.concatenate %81, %82 in 1 : vector<32x8xf32>, vector<32x8xf32> -> vector<32x16xf32>
    %84 = arith.mulf %78, %20 : vector<32x16xf32>
    %85 = arith.mulf %83, %21 : vector<32x16xf32>
    %86 = arith.addf %84, %85 : vector<32x16xf32>
    %87 = vector.extract_strided_slice %2 {offsets = [0, 48], sizes = [32, 16], strides = [1, 1]} : vector<32x128xf32> to vector<32x16xf32>
    %88 = arith.mulf %87, %87 : vector<32x16xf32>
    %cst_31 = arith.constant dense<0.000000e+00> : vector<32xf32>
    %89 = vector.multi_reduction <add>, %88, %cst_31 [1] : vector<32x16xf32> to vector<32xf32>
    %90 = vector.shape_cast %89 : vector<32xf32> to vector<32x1xf32>
    %cst_32 = arith.constant 1.600000e+01 : f32
    %91 = vector.broadcast %cst_32 : f32 to vector<32x1xf32>
    %92 = arith.divf %90, %91 : vector<32x1xf32>
    %cst_33 = arith.constant 9.99999997E-7 : f32
    %93 = vector.broadcast %cst_33 : f32 to vector<32x1xf32>
    %94 = arith.addf %92, %93 : vector<32x1xf32>
    %95 = math.rsqrt %94 : vector<32x1xf32>
    %96 = vector.broadcast %95 : vector<32x1xf32> to vector<32x16xf32>
    %97 = arith.mulf %87, %96 : vector<32x16xf32>
    %98 = vector.broadcast %22 : vector<1x16xf32> to vector<32x16xf32>
    %99 = arith.mulf %97, %98 : vector<32x16xf32>
    %100 = vector.extract_strided_slice %99 {offsets = [0, 8], sizes = [32, 8], strides = [1, 1]} : vector<32x16xf32> to vector<32x8xf32>
    %cst_34 = arith.constant 0.000000e+00 : f32
    %101 = vector.broadcast %cst_34 : f32 to vector<32x8xf32>
    %102 = arith.subf %101, %100 : vector<32x8xf32>
    %103 = vector.extract_strided_slice %99 {offsets = [0, 0], sizes = [32, 8], strides = [1, 1]} : vector<32x16xf32> to vector<32x8xf32>
    %104 = tpu.concatenate %102, %103 in 1 : vector<32x8xf32>, vector<32x8xf32> -> vector<32x16xf32>
    %105 = arith.mulf %99, %20 : vector<32x16xf32>
    %106 = arith.mulf %104, %21 : vector<32x16xf32>
    %107 = arith.addf %105, %106 : vector<32x16xf32>
    %108 = vector.extract_strided_slice %2 {offsets = [0, 64], sizes = [32, 16], strides = [1, 1]} : vector<32x128xf32> to vector<32x16xf32>
    %109 = arith.mulf %108, %108 : vector<32x16xf32>
    %cst_35 = arith.constant dense<0.000000e+00> : vector<32xf32>
    %110 = vector.multi_reduction <add>, %109, %cst_35 [1] : vector<32x16xf32> to vector<32xf32>
    %111 = vector.shape_cast %110 : vector<32xf32> to vector<32x1xf32>
    %cst_36 = arith.constant 1.600000e+01 : f32
    %112 = vector.broadcast %cst_36 : f32 to vector<32x1xf32>
    %113 = arith.divf %111, %112 : vector<32x1xf32>
    %cst_37 = arith.constant 9.99999997E-7 : f32
    %114 = vector.broadcast %cst_37 : f32 to vector<32x1xf32>
    %115 = arith.addf %113, %114 : vector<32x1xf32>
    %116 = math.rsqrt %115 : vector<32x1xf32>
    %117 = vector.broadcast %116 : vector<32x1xf32> to vector<32x16xf32>
    %118 = arith.mulf %108, %117 : vector<32x16xf32>
    %119 = vector.broadcast %23 : vector<1x16xf32> to vector<32x16xf32>
    %120 = arith.mulf %118, %119 : vector<32x16xf32>
    %121 = vector.extract_strided_slice %120 {offsets = [0, 8], sizes = [32, 8], strides = [1, 1]} : vector<32x16xf32> to vector<32x8xf32>
    %cst_38 = arith.constant 0.000000e+00 : f32
    %122 = vector.broadcast %cst_38 : f32 to vector<32x8xf32>
    %123 = arith.subf %122, %121 : vector<32x8xf32>
    %124 = vector.extract_strided_slice %120 {offsets = [0, 0], sizes = [32, 8], strides = [1, 1]} : vector<32x16xf32> to vector<32x8xf32>
    %125 = tpu.concatenate %123, %124 in 1 : vector<32x8xf32>, vector<32x8xf32> -> vector<32x16xf32>
    %126 = arith.mulf %120, %20 : vector<32x16xf32>
    %127 = arith.mulf %125, %21 : vector<32x16xf32>
    %128 = arith.addf %126, %127 : vector<32x16xf32>
    %129 = vector.extract_strided_slice %2 {offsets = [0, 80], sizes = [32, 16], strides = [1, 1]} : vector<32x128xf32> to vector<32x16xf32>
    %130 = arith.mulf %129, %129 : vector<32x16xf32>
    %cst_39 = arith.constant dense<0.000000e+00> : vector<32xf32>
    %131 = vector.multi_reduction <add>, %130, %cst_39 [1] : vector<32x16xf32> to vector<32xf32>
    %132 = vector.shape_cast %131 : vector<32xf32> to vector<32x1xf32>
    %cst_40 = arith.constant 1.600000e+01 : f32
    %133 = vector.broadcast %cst_40 : f32 to vector<32x1xf32>
    %134 = arith.divf %132, %133 : vector<32x1xf32>
    %cst_41 = arith.constant 9.99999997E-7 : f32
    %135 = vector.broadcast %cst_41 : f32 to vector<32x1xf32>
    %136 = arith.addf %134, %135 : vector<32x1xf32>
    %137 = math.rsqrt %136 : vector<32x1xf32>
    %138 = vector.broadcast %137 : vector<32x1xf32> to vector<32x16xf32>
    %139 = arith.mulf %129, %138 : vector<32x16xf32>
    %140 = vector.broadcast %23 : vector<1x16xf32> to vector<32x16xf32>
    %141 = arith.mulf %139, %140 : vector<32x16xf32>
    %142 = vector.extract_strided_slice %141 {offsets = [0, 8], sizes = [32, 8], strides = [1, 1]} : vector<32x16xf32> to vector<32x8xf32>
    %cst_42 = arith.constant 0.000000e+00 : f32
    %143 = vector.broadcast %cst_42 : f32 to vector<32x8xf32>
    %144 = arith.subf %143, %142 : vector<32x8xf32>
    %145 = vector.extract_strided_slice %141 {offsets = [0, 0], sizes = [32, 8], strides = [1, 1]} : vector<32x16xf32> to vector<32x8xf32>
    %146 = tpu.concatenate %144, %145 in 1 : vector<32x8xf32>, vector<32x8xf32> -> vector<32x16xf32>
    %147 = arith.mulf %141, %20 : vector<32x16xf32>
    %148 = arith.mulf %146, %21 : vector<32x16xf32>
    %149 = arith.addf %147, %148 : vector<32x16xf32>
    %150 = vector.extract_strided_slice %2 {offsets = [0, 96], sizes = [32, 16], strides = [1, 1]} : vector<32x128xf32> to vector<32x16xf32>
    %151 = vector.extract_strided_slice %2 {offsets = [0, 112], sizes = [32, 16], strides = [1, 1]} : vector<32x128xf32> to vector<32x16xf32>
    %c0_43 = arith.constant 0 : index
    %c0_44 = arith.constant 0 : index
    %152 = vector.load %arg9[%c0_43, %c0_44] : memref<32x16xf32, #tpu.memory_space<vmem>>, vector<32x16xf32>
    %cst_45 = arith.constant 1.000000e+00 : f32
    %153 = vector.broadcast %cst_45 : f32 to vector<32x1xf32>
    %154 = vector.extract_strided_slice %152 {offsets = [0, 0], sizes = [16, 16], strides = [1, 1]} : vector<32x16xf32> to vector<16x16xf32>
    %155 = tpu.concatenate %154, %154 in 0 : vector<16x16xf32>, vector<16x16xf32> -> vector<32x16xf32>
    %156 = vector.extract_strided_slice %128 {offsets = [0, 0], sizes = [16, 16], strides = [1, 1]} : vector<32x16xf32> to vector<16x16xf32>
    %157 = vector.extract_strided_slice %150 {offsets = [0, 0], sizes = [16, 16], strides = [1, 1]} : vector<32x16xf32> to vector<16x16xf32>
    %158 = vector.extract_strided_slice %19 {offsets = [0, 0], sizes = [16, 1], strides = [1, 1]} : vector<32x2xf32> to vector<16x1xf32>
    %159 = vector.extract_strided_slice %44 {offsets = [0, 0], sizes = [16, 16], strides = [1, 1]} : vector<32x16xf32> to vector<16x16xf32>
    %160 = vector.extract_strided_slice %65 {offsets = [0, 0], sizes = [16, 16], strides = [1, 1]} : vector<32x16xf32> to vector<16x16xf32>
    %161 = tpu.concatenate %159, %160 in 0 : vector<16x16xf32>, vector<16x16xf32> -> vector<32x16xf32>
    %162 = tpu.concatenate %161, %153 in 1 : vector<32x16xf32>, vector<32x1xf32> -> vector<32x17xf32>
    %cst_46 = arith.constant 4.000000e+00 : f32
    %163 = vector.broadcast %cst_46 : f32 to vector<16x1xf32>
    %164 = arith.mulf %158, %163 : vector<16x1xf32>
    %165 = tpu.concatenate %156, %164 in 1 : vector<16x16xf32>, vector<16x1xf32> -> vector<16x17xf32>
    %cst_47 = arith.constant dense<0.000000e+00> : vector<32x16xf32>
    %166 = tpu.matmul %162, %165, %cst_47 {dimension_numbers = #tpu.dot_dimension_numbers<[1], [1], [0], [0], [0, 0, 1, 0], [], []>} : vector<32x17xf32>, vector<16x17xf32>, vector<32x16xf32> -> vector<32x16xf32>
    %cst_48 = arith.constant 2.500000e-01 : f32
    %167 = vector.broadcast %cst_48 : f32 to vector<32x16xf32>
    %168 = arith.mulf %166, %167 : vector<32x16xf32>
    %cst_49 = arith.constant 0.000000e+00 : f32
    %169 = vector.broadcast %cst_49 : f32 to vector<32x16xf32>
    %170 = arith.cmpf one, %155, %169 : vector<32x16xf32>
    %cst_50 = arith.constant -3.40282347E+38 : f32
    %171 = vector.broadcast %cst_50 : f32 to vector<32x16xf32>
    %172 = arith.select %170, %171, %168 : vector<32x16xi1>, vector<32x16xf32>
    %cst_51 = arith.constant dense<0xFF800000> : vector<32xf32>
    %173 = vector.multi_reduction <maximumf>, %172, %cst_51 [1] : vector<32x16xf32> to vector<32xf32>
    %174 = vector.shape_cast %173 : vector<32xf32> to vector<32x1xf32>
    %175 = vector.broadcast %174 : vector<32x1xf32> to vector<32x16xf32>
    %176 = arith.subf %172, %175 : vector<32x16xf32>
    %177 = math.exp %176 : vector<32x16xf32>
    %cst_52 = arith.constant dense<0.000000e+00> : vector<32xf32>
    %178 = vector.multi_reduction <add>, %177, %cst_52 [1] : vector<32x16xf32> to vector<32xf32>
    %179 = vector.shape_cast %178 : vector<32xf32> to vector<32x1xf32>
    %180 = vector.broadcast %179 : vector<32x1xf32> to vector<32x16xf32>
    %181 = arith.divf %177, %180 : vector<32x16xf32>
    %cst_53 = arith.constant dense<0.000000e+00> : vector<32x16xf32>
    %182 = tpu.matmul %181, %157, %cst_53 {dimension_numbers = #tpu.dot_dimension_numbers<[1], [0], [0], [1], [0, 0, 1, 1], [], []>} : vector<32x16xf32>, vector<16x16xf32>, vector<32x16xf32> -> vector<32x16xf32>
    %183 = vector.extract_strided_slice %181 {offsets = [0, 0], sizes = [16, 16], strides = [1, 1]} : vector<32x16xf32> to vector<16x16xf32>
    %184 = vector.extract_strided_slice %183 {offsets = [0, 0], sizes = [1, 16], strides = [1, 1]} : vector<16x16xf32> to vector<1x16xf32>
    %185 = vector.extract_strided_slice %183 {offsets = [1, 0], sizes = [1, 16], strides = [1, 1]} : vector<16x16xf32> to vector<1x16xf32>
    %186 = vector.extract_strided_slice %183 {offsets = [2, 0], sizes = [1, 16], strides = [1, 1]} : vector<16x16xf32> to vector<1x16xf32>
    %187 = vector.extract_strided_slice %183 {offsets = [3, 0], sizes = [1, 16], strides = [1, 1]} : vector<16x16xf32> to vector<1x16xf32>
    %188 = vector.extract_strided_slice %183 {offsets = [4, 0], sizes = [1, 16], strides = [1, 1]} : vector<16x16xf32> to vector<1x16xf32>
    %189 = vector.extract_strided_slice %183 {offsets = [5, 0], sizes = [1, 16], strides = [1, 1]} : vector<16x16xf32> to vector<1x16xf32>
    %190 = vector.extract_strided_slice %183 {offsets = [6, 0], sizes = [1, 16], strides = [1, 1]} : vector<16x16xf32> to vector<1x16xf32>
    %191 = vector.extract_strided_slice %183 {offsets = [7, 0], sizes = [1, 16], strides = [1, 1]} : vector<16x16xf32> to vector<1x16xf32>
    %192 = vector.extract_strided_slice %183 {offsets = [8, 0], sizes = [1, 16], strides = [1, 1]} : vector<16x16xf32> to vector<1x16xf32>
    %193 = vector.extract_strided_slice %183 {offsets = [9, 0], sizes = [1, 16], strides = [1, 1]} : vector<16x16xf32> to vector<1x16xf32>
    %194 = vector.extract_strided_slice %183 {offsets = [10, 0], sizes = [1, 16], strides = [1, 1]} : vector<16x16xf32> to vector<1x16xf32>
    %195 = vector.extract_strided_slice %183 {offsets = [11, 0], sizes = [1, 16], strides = [1, 1]} : vector<16x16xf32> to vector<1x16xf32>
    %196 = vector.extract_strided_slice %183 {offsets = [12, 0], sizes = [1, 16], strides = [1, 1]} : vector<16x16xf32> to vector<1x16xf32>
    %197 = vector.extract_strided_slice %183 {offsets = [13, 0], sizes = [1, 16], strides = [1, 1]} : vector<16x16xf32> to vector<1x16xf32>
    %198 = vector.extract_strided_slice %183 {offsets = [14, 0], sizes = [1, 16], strides = [1, 1]} : vector<16x16xf32> to vector<1x16xf32>
    %199 = vector.extract_strided_slice %183 {offsets = [15, 0], sizes = [1, 16], strides = [1, 1]} : vector<16x16xf32> to vector<1x16xf32>
    %200 = tpu.concatenate %184, %185, %186, %187, %188, %189, %190, %191, %192, %193, %194, %195, %196, %197, %198, %199 in 1 : vector<1x16xf32>, vector<1x16xf32>, vector<1x16xf32>, vector<1x16xf32>, vector<1x16xf32>, vector<1x16xf32>, vector<1x16xf32>, vector<1x16xf32>, vector<1x16xf32>, vector<1x16xf32>, vector<1x16xf32>, vector<1x16xf32>, vector<1x16xf32>, vector<1x16xf32>, vector<1x16xf32>, vector<1x16xf32> -> vector<1x256xf32>
    %201 = vector.extract_strided_slice %182 {offsets = [0, 0], sizes = [16, 16], strides = [1, 1]} : vector<32x16xf32> to vector<16x16xf32>
    %202 = vector.extract_strided_slice %181 {offsets = [16, 0], sizes = [16, 16], strides = [1, 1]} : vector<32x16xf32> to vector<16x16xf32>
    %203 = vector.extract_strided_slice %202 {offsets = [0, 0], sizes = [1, 16], strides = [1, 1]} : vector<16x16xf32> to vector<1x16xf32>
    %204 = vector.extract_strided_slice %202 {offsets = [1, 0], sizes = [1, 16], strides = [1, 1]} : vector<16x16xf32> to vector<1x16xf32>
    %205 = vector.extract_strided_slice %202 {offsets = [2, 0], sizes = [1, 16], strides = [1, 1]} : vector<16x16xf32> to vector<1x16xf32>
    %206 = vector.extract_strided_slice %202 {offsets = [3, 0], sizes = [1, 16], strides = [1, 1]} : vector<16x16xf32> to vector<1x16xf32>
    %207 = vector.extract_strided_slice %202 {offsets = [4, 0], sizes = [1, 16], strides = [1, 1]} : vector<16x16xf32> to vector<1x16xf32>
    %208 = vector.extract_strided_slice %202 {offsets = [5, 0], sizes = [1, 16], strides = [1, 1]} : vector<16x16xf32> to vector<1x16xf32>
    %209 = vector.extract_strided_slice %202 {offsets = [6, 0], sizes = [1, 16], strides = [1, 1]} : vector<16x16xf32> to vector<1x16xf32>
    %210 = vector.extract_strided_slice %202 {offsets = [7, 0], sizes = [1, 16], strides = [1, 1]} : vector<16x16xf32> to vector<1x16xf32>
    %211 = vector.extract_strided_slice %202 {offsets = [8, 0], sizes = [1, 16], strides = [1, 1]} : vector<16x16xf32> to vector<1x16xf32>
    %212 = vector.extract_strided_slice %202 {offsets = [9, 0], sizes = [1, 16], strides = [1, 1]} : vector<16x16xf32> to vector<1x16xf32>
    %213 = vector.extract_strided_slice %202 {offsets = [10, 0], sizes = [1, 16], strides = [1, 1]} : vector<16x16xf32> to vector<1x16xf32>
    %214 = vector.extract_strided_slice %202 {offsets = [11, 0], sizes = [1, 16], strides = [1, 1]} : vector<16x16xf32> to vector<1x16xf32>
    %215 = vector.extract_strided_slice %202 {offsets = [12, 0], sizes = [1, 16], strides = [1, 1]} : vector<16x16xf32> to vector<1x16xf32>
    %216 = vector.extract_strided_slice %202 {offsets = [13, 0], sizes = [1, 16], strides = [1, 1]} : vector<16x16xf32> to vector<1x16xf32>
    %217 = vector.extract_strided_slice %202 {offsets = [14, 0], sizes = [1, 16], strides = [1, 1]} : vector<16x16xf32> to vector<1x16xf32>
    %218 = vector.extract_strided_slice %202 {offsets = [15, 0], sizes = [1, 16], strides = [1, 1]} : vector<16x16xf32> to vector<1x16xf32>
    %219 = tpu.concatenate %203, %204, %205, %206, %207, %208, %209, %210, %211, %212, %213, %214, %215, %216, %217, %218 in 1 : vector<1x16xf32>, vector<1x16xf32>, vector<1x16xf32>, vector<1x16xf32>, vector<1x16xf32>, vector<1x16xf32>, vector<1x16xf32>, vector<1x16xf32>, vector<1x16xf32>, vector<1x16xf32>, vector<1x16xf32>, vector<1x16xf32>, vector<1x16xf32>, vector<1x16xf32>, vector<1x16xf32>, vector<1x16xf32> -> vector<1x256xf32>
    %220 = vector.extract_strided_slice %182 {offsets = [16, 0], sizes = [16, 16], strides = [1, 1]} : vector<32x16xf32> to vector<16x16xf32>
    %221 = vector.extract_strided_slice %149 {offsets = [0, 0], sizes = [16, 16], strides = [1, 1]} : vector<32x16xf32> to vector<16x16xf32>
    %222 = vector.extract_strided_slice %151 {offsets = [0, 0], sizes = [16, 16], strides = [1, 1]} : vector<32x16xf32> to vector<16x16xf32>
    %223 = vector.extract_strided_slice %19 {offsets = [0, 1], sizes = [16, 1], strides = [1, 1]} : vector<32x2xf32> to vector<16x1xf32>
    %224 = vector.extract_strided_slice %86 {offsets = [0, 0], sizes = [16, 16], strides = [1, 1]} : vector<32x16xf32> to vector<16x16xf32>
    %225 = vector.extract_strided_slice %107 {offsets = [0, 0], sizes = [16, 16], strides = [1, 1]} : vector<32x16xf32> to vector<16x16xf32>
    %226 = tpu.concatenate %224, %225 in 0 : vector<16x16xf32>, vector<16x16xf32> -> vector<32x16xf32>
    %227 = tpu.concatenate %226, %153 in 1 : vector<32x16xf32>, vector<32x1xf32> -> vector<32x17xf32>
    %cst_54 = arith.constant 4.000000e+00 : f32
    %228 = vector.broadcast %cst_54 : f32 to vector<16x1xf32>
    %229 = arith.mulf %223, %228 : vector<16x1xf32>
    %230 = tpu.concatenate %221, %229 in 1 : vector<16x16xf32>, vector<16x1xf32> -> vector<16x17xf32>
    %cst_55 = arith.constant dense<0.000000e+00> : vector<32x16xf32>
    %231 = tpu.matmul %227, %230, %cst_55 {dimension_numbers = #tpu.dot_dimension_numbers<[1], [1], [0], [0], [0, 0, 1, 0], [], []>} : vector<32x17xf32>, vector<16x17xf32>, vector<32x16xf32> -> vector<32x16xf32>
    %cst_56 = arith.constant 2.500000e-01 : f32
    %232 = vector.broadcast %cst_56 : f32 to vector<32x16xf32>
    %233 = arith.mulf %231, %232 : vector<32x16xf32>
    %cst_57 = arith.constant 0.000000e+00 : f32
    %234 = vector.broadcast %cst_57 : f32 to vector<32x16xf32>
    %235 = arith.cmpf one, %155, %234 : vector<32x16xf32>
    %cst_58 = arith.constant -3.40282347E+38 : f32
    %236 = vector.broadcast %cst_58 : f32 to vector<32x16xf32>
    %237 = arith.select %235, %236, %233 : vector<32x16xi1>, vector<32x16xf32>
    %cst_59 = arith.constant dense<0xFF800000> : vector<32xf32>
    %238 = vector.multi_reduction <maximumf>, %237, %cst_59 [1] : vector<32x16xf32> to vector<32xf32>
    %239 = vector.shape_cast %238 : vector<32xf32> to vector<32x1xf32>
    %240 = vector.broadcast %239 : vector<32x1xf32> to vector<32x16xf32>
    %241 = arith.subf %237, %240 : vector<32x16xf32>
    %242 = math.exp %241 : vector<32x16xf32>
    %cst_60 = arith.constant dense<0.000000e+00> : vector<32xf32>
    %243 = vector.multi_reduction <add>, %242, %cst_60 [1] : vector<32x16xf32> to vector<32xf32>
    %244 = vector.shape_cast %243 : vector<32xf32> to vector<32x1xf32>
    %245 = vector.broadcast %244 : vector<32x1xf32> to vector<32x16xf32>
    %246 = arith.divf %242, %245 : vector<32x16xf32>
    %cst_61 = arith.constant dense<0.000000e+00> : vector<32x16xf32>
    %247 = tpu.matmul %246, %222, %cst_61 {dimension_numbers = #tpu.dot_dimension_numbers<[1], [0], [0], [1], [0, 0, 1, 1], [], []>} : vector<32x16xf32>, vector<16x16xf32>, vector<32x16xf32> -> vector<32x16xf32>
    %248 = vector.extract_strided_slice %246 {offsets = [0, 0], sizes = [16, 16], strides = [1, 1]} : vector<32x16xf32> to vector<16x16xf32>
    %249 = vector.extract_strided_slice %248 {offsets = [0, 0], sizes = [1, 16], strides = [1, 1]} : vector<16x16xf32> to vector<1x16xf32>
    %250 = vector.extract_strided_slice %248 {offsets = [1, 0], sizes = [1, 16], strides = [1, 1]} : vector<16x16xf32> to vector<1x16xf32>
    %251 = vector.extract_strided_slice %248 {offsets = [2, 0], sizes = [1, 16], strides = [1, 1]} : vector<16x16xf32> to vector<1x16xf32>
    %252 = vector.extract_strided_slice %248 {offsets = [3, 0], sizes = [1, 16], strides = [1, 1]} : vector<16x16xf32> to vector<1x16xf32>
    %253 = vector.extract_strided_slice %248 {offsets = [4, 0], sizes = [1, 16], strides = [1, 1]} : vector<16x16xf32> to vector<1x16xf32>
    %254 = vector.extract_strided_slice %248 {offsets = [5, 0], sizes = [1, 16], strides = [1, 1]} : vector<16x16xf32> to vector<1x16xf32>
    %255 = vector.extract_strided_slice %248 {offsets = [6, 0], sizes = [1, 16], strides = [1, 1]} : vector<16x16xf32> to vector<1x16xf32>
    %256 = vector.extract_strided_slice %248 {offsets = [7, 0], sizes = [1, 16], strides = [1, 1]} : vector<16x16xf32> to vector<1x16xf32>
    %257 = vector.extract_strided_slice %248 {offsets = [8, 0], sizes = [1, 16], strides = [1, 1]} : vector<16x16xf32> to vector<1x16xf32>
    %258 = vector.extract_strided_slice %248 {offsets = [9, 0], sizes = [1, 16], strides = [1, 1]} : vector<16x16xf32> to vector<1x16xf32>
    %259 = vector.extract_strided_slice %248 {offsets = [10, 0], sizes = [1, 16], strides = [1, 1]} : vector<16x16xf32> to vector<1x16xf32>
    %260 = vector.extract_strided_slice %248 {offsets = [11, 0], sizes = [1, 16], strides = [1, 1]} : vector<16x16xf32> to vector<1x16xf32>
    %261 = vector.extract_strided_slice %248 {offsets = [12, 0], sizes = [1, 16], strides = [1, 1]} : vector<16x16xf32> to vector<1x16xf32>
    %262 = vector.extract_strided_slice %248 {offsets = [13, 0], sizes = [1, 16], strides = [1, 1]} : vector<16x16xf32> to vector<1x16xf32>
    %263 = vector.extract_strided_slice %248 {offsets = [14, 0], sizes = [1, 16], strides = [1, 1]} : vector<16x16xf32> to vector<1x16xf32>
    %264 = vector.extract_strided_slice %248 {offsets = [15, 0], sizes = [1, 16], strides = [1, 1]} : vector<16x16xf32> to vector<1x16xf32>
    %265 = tpu.concatenate %249, %250, %251, %252, %253, %254, %255, %256, %257, %258, %259, %260, %261, %262, %263, %264 in 1 : vector<1x16xf32>, vector<1x16xf32>, vector<1x16xf32>, vector<1x16xf32>, vector<1x16xf32>, vector<1x16xf32>, vector<1x16xf32>, vector<1x16xf32>, vector<1x16xf32>, vector<1x16xf32>, vector<1x16xf32>, vector<1x16xf32>, vector<1x16xf32>, vector<1x16xf32>, vector<1x16xf32>, vector<1x16xf32> -> vector<1x256xf32>
    %266 = vector.extract_strided_slice %247 {offsets = [0, 0], sizes = [16, 16], strides = [1, 1]} : vector<32x16xf32> to vector<16x16xf32>
    %267 = vector.extract_strided_slice %246 {offsets = [16, 0], sizes = [16, 16], strides = [1, 1]} : vector<32x16xf32> to vector<16x16xf32>
    %268 = vector.extract_strided_slice %267 {offsets = [0, 0], sizes = [1, 16], strides = [1, 1]} : vector<16x16xf32> to vector<1x16xf32>
    %269 = vector.extract_strided_slice %267 {offsets = [1, 0], sizes = [1, 16], strides = [1, 1]} : vector<16x16xf32> to vector<1x16xf32>
    %270 = vector.extract_strided_slice %267 {offsets = [2, 0], sizes = [1, 16], strides = [1, 1]} : vector<16x16xf32> to vector<1x16xf32>
    %271 = vector.extract_strided_slice %267 {offsets = [3, 0], sizes = [1, 16], strides = [1, 1]} : vector<16x16xf32> to vector<1x16xf32>
    %272 = vector.extract_strided_slice %267 {offsets = [4, 0], sizes = [1, 16], strides = [1, 1]} : vector<16x16xf32> to vector<1x16xf32>
    %273 = vector.extract_strided_slice %267 {offsets = [5, 0], sizes = [1, 16], strides = [1, 1]} : vector<16x16xf32> to vector<1x16xf32>
    %274 = vector.extract_strided_slice %267 {offsets = [6, 0], sizes = [1, 16], strides = [1, 1]} : vector<16x16xf32> to vector<1x16xf32>
    %275 = vector.extract_strided_slice %267 {offsets = [7, 0], sizes = [1, 16], strides = [1, 1]} : vector<16x16xf32> to vector<1x16xf32>
    %276 = vector.extract_strided_slice %267 {offsets = [8, 0], sizes = [1, 16], strides = [1, 1]} : vector<16x16xf32> to vector<1x16xf32>
    %277 = vector.extract_strided_slice %267 {offsets = [9, 0], sizes = [1, 16], strides = [1, 1]} : vector<16x16xf32> to vector<1x16xf32>
    %278 = vector.extract_strided_slice %267 {offsets = [10, 0], sizes = [1, 16], strides = [1, 1]} : vector<16x16xf32> to vector<1x16xf32>
    %279 = vector.extract_strided_slice %267 {offsets = [11, 0], sizes = [1, 16], strides = [1, 1]} : vector<16x16xf32> to vector<1x16xf32>
    %280 = vector.extract_strided_slice %267 {offsets = [12, 0], sizes = [1, 16], strides = [1, 1]} : vector<16x16xf32> to vector<1x16xf32>
    %281 = vector.extract_strided_slice %267 {offsets = [13, 0], sizes = [1, 16], strides = [1, 1]} : vector<16x16xf32> to vector<1x16xf32>
    %282 = vector.extract_strided_slice %267 {offsets = [14, 0], sizes = [1, 16], strides = [1, 1]} : vector<16x16xf32> to vector<1x16xf32>
    %283 = vector.extract_strided_slice %267 {offsets = [15, 0], sizes = [1, 16], strides = [1, 1]} : vector<16x16xf32> to vector<1x16xf32>
    %284 = tpu.concatenate %268, %269, %270, %271, %272, %273, %274, %275, %276, %277, %278, %279, %280, %281, %282, %283 in 1 : vector<1x16xf32>, vector<1x16xf32>, vector<1x16xf32>, vector<1x16xf32>, vector<1x16xf32>, vector<1x16xf32>, vector<1x16xf32>, vector<1x16xf32>, vector<1x16xf32>, vector<1x16xf32>, vector<1x16xf32>, vector<1x16xf32>, vector<1x16xf32>, vector<1x16xf32>, vector<1x16xf32>, vector<1x16xf32> -> vector<1x256xf32>
    %285 = vector.extract_strided_slice %247 {offsets = [16, 0], sizes = [16, 16], strides = [1, 1]} : vector<32x16xf32> to vector<16x16xf32>
    %286 = vector.extract_strided_slice %152 {offsets = [16, 0], sizes = [16, 16], strides = [1, 1]} : vector<32x16xf32> to vector<16x16xf32>
    %287 = tpu.concatenate %286, %286 in 0 : vector<16x16xf32>, vector<16x16xf32> -> vector<32x16xf32>
    %288 = vector.extract_strided_slice %128 {offsets = [16, 0], sizes = [16, 16], strides = [1, 1]} : vector<32x16xf32> to vector<16x16xf32>
    %289 = vector.extract_strided_slice %150 {offsets = [16, 0], sizes = [16, 16], strides = [1, 1]} : vector<32x16xf32> to vector<16x16xf32>
    %290 = vector.extract_strided_slice %19 {offsets = [16, 0], sizes = [16, 1], strides = [1, 1]} : vector<32x2xf32> to vector<16x1xf32>
    %291 = vector.extract_strided_slice %44 {offsets = [16, 0], sizes = [16, 16], strides = [1, 1]} : vector<32x16xf32> to vector<16x16xf32>
    %292 = vector.extract_strided_slice %65 {offsets = [16, 0], sizes = [16, 16], strides = [1, 1]} : vector<32x16xf32> to vector<16x16xf32>
    %293 = tpu.concatenate %291, %292 in 0 : vector<16x16xf32>, vector<16x16xf32> -> vector<32x16xf32>
    %294 = tpu.concatenate %293, %153 in 1 : vector<32x16xf32>, vector<32x1xf32> -> vector<32x17xf32>
    %cst_62 = arith.constant 4.000000e+00 : f32
    %295 = vector.broadcast %cst_62 : f32 to vector<16x1xf32>
    %296 = arith.mulf %290, %295 : vector<16x1xf32>
    %297 = tpu.concatenate %288, %296 in 1 : vector<16x16xf32>, vector<16x1xf32> -> vector<16x17xf32>
    %cst_63 = arith.constant dense<0.000000e+00> : vector<32x16xf32>
    %298 = tpu.matmul %294, %297, %cst_63 {dimension_numbers = #tpu.dot_dimension_numbers<[1], [1], [0], [0], [0, 0, 1, 0], [], []>} : vector<32x17xf32>, vector<16x17xf32>, vector<32x16xf32> -> vector<32x16xf32>
    %cst_64 = arith.constant 2.500000e-01 : f32
    %299 = vector.broadcast %cst_64 : f32 to vector<32x16xf32>
    %300 = arith.mulf %298, %299 : vector<32x16xf32>
    %cst_65 = arith.constant 0.000000e+00 : f32
    %301 = vector.broadcast %cst_65 : f32 to vector<32x16xf32>
    %302 = arith.cmpf one, %287, %301 : vector<32x16xf32>
    %cst_66 = arith.constant -3.40282347E+38 : f32
    %303 = vector.broadcast %cst_66 : f32 to vector<32x16xf32>
    %304 = arith.select %302, %303, %300 : vector<32x16xi1>, vector<32x16xf32>
    %cst_67 = arith.constant dense<0xFF800000> : vector<32xf32>
    %305 = vector.multi_reduction <maximumf>, %304, %cst_67 [1] : vector<32x16xf32> to vector<32xf32>
    %306 = vector.shape_cast %305 : vector<32xf32> to vector<32x1xf32>
    %307 = vector.broadcast %306 : vector<32x1xf32> to vector<32x16xf32>
    %308 = arith.subf %304, %307 : vector<32x16xf32>
    %309 = math.exp %308 : vector<32x16xf32>
    %cst_68 = arith.constant dense<0.000000e+00> : vector<32xf32>
    %310 = vector.multi_reduction <add>, %309, %cst_68 [1] : vector<32x16xf32> to vector<32xf32>
    %311 = vector.shape_cast %310 : vector<32xf32> to vector<32x1xf32>
    %312 = vector.broadcast %311 : vector<32x1xf32> to vector<32x16xf32>
    %313 = arith.divf %309, %312 : vector<32x16xf32>
    %cst_69 = arith.constant dense<0.000000e+00> : vector<32x16xf32>
    %314 = tpu.matmul %313, %289, %cst_69 {dimension_numbers = #tpu.dot_dimension_numbers<[1], [0], [0], [1], [0, 0, 1, 1], [], []>} : vector<32x16xf32>, vector<16x16xf32>, vector<32x16xf32> -> vector<32x16xf32>
    %315 = vector.extract_strided_slice %313 {offsets = [0, 0], sizes = [16, 16], strides = [1, 1]} : vector<32x16xf32> to vector<16x16xf32>
    %316 = vector.extract_strided_slice %315 {offsets = [0, 0], sizes = [1, 16], strides = [1, 1]} : vector<16x16xf32> to vector<1x16xf32>
    %317 = vector.extract_strided_slice %315 {offsets = [1, 0], sizes = [1, 16], strides = [1, 1]} : vector<16x16xf32> to vector<1x16xf32>
    %318 = vector.extract_strided_slice %315 {offsets = [2, 0], sizes = [1, 16], strides = [1, 1]} : vector<16x16xf32> to vector<1x16xf32>
    %319 = vector.extract_strided_slice %315 {offsets = [3, 0], sizes = [1, 16], strides = [1, 1]} : vector<16x16xf32> to vector<1x16xf32>
    %320 = vector.extract_strided_slice %315 {offsets = [4, 0], sizes = [1, 16], strides = [1, 1]} : vector<16x16xf32> to vector<1x16xf32>
    %321 = vector.extract_strided_slice %315 {offsets = [5, 0], sizes = [1, 16], strides = [1, 1]} : vector<16x16xf32> to vector<1x16xf32>
    %322 = vector.extract_strided_slice %315 {offsets = [6, 0], sizes = [1, 16], strides = [1, 1]} : vector<16x16xf32> to vector<1x16xf32>
    %323 = vector.extract_strided_slice %315 {offsets = [7, 0], sizes = [1, 16], strides = [1, 1]} : vector<16x16xf32> to vector<1x16xf32>
    %324 = vector.extract_strided_slice %315 {offsets = [8, 0], sizes = [1, 16], strides = [1, 1]} : vector<16x16xf32> to vector<1x16xf32>
    %325 = vector.extract_strided_slice %315 {offsets = [9, 0], sizes = [1, 16], strides = [1, 1]} : vector<16x16xf32> to vector<1x16xf32>
    %326 = vector.extract_strided_slice %315 {offsets = [10, 0], sizes = [1, 16], strides = [1, 1]} : vector<16x16xf32> to vector<1x16xf32>
    %327 = vector.extract_strided_slice %315 {offsets = [11, 0], sizes = [1, 16], strides = [1, 1]} : vector<16x16xf32> to vector<1x16xf32>
    %328 = vector.extract_strided_slice %315 {offsets = [12, 0], sizes = [1, 16], strides = [1, 1]} : vector<16x16xf32> to vector<1x16xf32>
    %329 = vector.extract_strided_slice %315 {offsets = [13, 0], sizes = [1, 16], strides = [1, 1]} : vector<16x16xf32> to vector<1x16xf32>
    %330 = vector.extract_strided_slice %315 {offsets = [14, 0], sizes = [1, 16], strides = [1, 1]} : vector<16x16xf32> to vector<1x16xf32>
    %331 = vector.extract_strided_slice %315 {offsets = [15, 0], sizes = [1, 16], strides = [1, 1]} : vector<16x16xf32> to vector<1x16xf32>
    %332 = tpu.concatenate %316, %317, %318, %319, %320, %321, %322, %323, %324, %325, %326, %327, %328, %329, %330, %331 in 1 : vector<1x16xf32>, vector<1x16xf32>, vector<1x16xf32>, vector<1x16xf32>, vector<1x16xf32>, vector<1x16xf32>, vector<1x16xf32>, vector<1x16xf32>, vector<1x16xf32>, vector<1x16xf32>, vector<1x16xf32>, vector<1x16xf32>, vector<1x16xf32>, vector<1x16xf32>, vector<1x16xf32>, vector<1x16xf32> -> vector<1x256xf32>
    %333 = vector.extract_strided_slice %314 {offsets = [0, 0], sizes = [16, 16], strides = [1, 1]} : vector<32x16xf32> to vector<16x16xf32>
    %334 = vector.extract_strided_slice %313 {offsets = [16, 0], sizes = [16, 16], strides = [1, 1]} : vector<32x16xf32> to vector<16x16xf32>
    %335 = vector.extract_strided_slice %334 {offsets = [0, 0], sizes = [1, 16], strides = [1, 1]} : vector<16x16xf32> to vector<1x16xf32>
    %336 = vector.extract_strided_slice %334 {offsets = [1, 0], sizes = [1, 16], strides = [1, 1]} : vector<16x16xf32> to vector<1x16xf32>
    %337 = vector.extract_strided_slice %334 {offsets = [2, 0], sizes = [1, 16], strides = [1, 1]} : vector<16x16xf32> to vector<1x16xf32>
    %338 = vector.extract_strided_slice %334 {offsets = [3, 0], sizes = [1, 16], strides = [1, 1]} : vector<16x16xf32> to vector<1x16xf32>
    %339 = vector.extract_strided_slice %334 {offsets = [4, 0], sizes = [1, 16], strides = [1, 1]} : vector<16x16xf32> to vector<1x16xf32>
    %340 = vector.extract_strided_slice %334 {offsets = [5, 0], sizes = [1, 16], strides = [1, 1]} : vector<16x16xf32> to vector<1x16xf32>
    %341 = vector.extract_strided_slice %334 {offsets = [6, 0], sizes = [1, 16], strides = [1, 1]} : vector<16x16xf32> to vector<1x16xf32>
    %342 = vector.extract_strided_slice %334 {offsets = [7, 0], sizes = [1, 16], strides = [1, 1]} : vector<16x16xf32> to vector<1x16xf32>
    %343 = vector.extract_strided_slice %334 {offsets = [8, 0], sizes = [1, 16], strides = [1, 1]} : vector<16x16xf32> to vector<1x16xf32>
    %344 = vector.extract_strided_slice %334 {offsets = [9, 0], sizes = [1, 16], strides = [1, 1]} : vector<16x16xf32> to vector<1x16xf32>
    %345 = vector.extract_strided_slice %334 {offsets = [10, 0], sizes = [1, 16], strides = [1, 1]} : vector<16x16xf32> to vector<1x16xf32>
    %346 = vector.extract_strided_slice %334 {offsets = [11, 0], sizes = [1, 16], strides = [1, 1]} : vector<16x16xf32> to vector<1x16xf32>
    %347 = vector.extract_strided_slice %334 {offsets = [12, 0], sizes = [1, 16], strides = [1, 1]} : vector<16x16xf32> to vector<1x16xf32>
    %348 = vector.extract_strided_slice %334 {offsets = [13, 0], sizes = [1, 16], strides = [1, 1]} : vector<16x16xf32> to vector<1x16xf32>
    %349 = vector.extract_strided_slice %334 {offsets = [14, 0], sizes = [1, 16], strides = [1, 1]} : vector<16x16xf32> to vector<1x16xf32>
    %350 = vector.extract_strided_slice %334 {offsets = [15, 0], sizes = [1, 16], strides = [1, 1]} : vector<16x16xf32> to vector<1x16xf32>
    %351 = tpu.concatenate %335, %336, %337, %338, %339, %340, %341, %342, %343, %344, %345, %346, %347, %348, %349, %350 in 1 : vector<1x16xf32>, vector<1x16xf32>, vector<1x16xf32>, vector<1x16xf32>, vector<1x16xf32>, vector<1x16xf32>, vector<1x16xf32>, vector<1x16xf32>, vector<1x16xf32>, vector<1x16xf32>, vector<1x16xf32>, vector<1x16xf32>, vector<1x16xf32>, vector<1x16xf32>, vector<1x16xf32>, vector<1x16xf32> -> vector<1x256xf32>
    %352 = vector.extract_strided_slice %314 {offsets = [16, 0], sizes = [16, 16], strides = [1, 1]} : vector<32x16xf32> to vector<16x16xf32>
    %353 = vector.extract_strided_slice %149 {offsets = [16, 0], sizes = [16, 16], strides = [1, 1]} : vector<32x16xf32> to vector<16x16xf32>
    %354 = vector.extract_strided_slice %151 {offsets = [16, 0], sizes = [16, 16], strides = [1, 1]} : vector<32x16xf32> to vector<16x16xf32>
    %355 = vector.extract_strided_slice %19 {offsets = [16, 1], sizes = [16, 1], strides = [1, 1]} : vector<32x2xf32> to vector<16x1xf32>
    %356 = vector.extract_strided_slice %86 {offsets = [16, 0], sizes = [16, 16], strides = [1, 1]} : vector<32x16xf32> to vector<16x16xf32>
    %357 = vector.extract_strided_slice %107 {offsets = [16, 0], sizes = [16, 16], strides = [1, 1]} : vector<32x16xf32> to vector<16x16xf32>
    %358 = tpu.concatenate %356, %357 in 0 : vector<16x16xf32>, vector<16x16xf32> -> vector<32x16xf32>
    %359 = tpu.concatenate %358, %153 in 1 : vector<32x16xf32>, vector<32x1xf32> -> vector<32x17xf32>
    %cst_70 = arith.constant 4.000000e+00 : f32
    %360 = vector.broadcast %cst_70 : f32 to vector<16x1xf32>
    %361 = arith.mulf %355, %360 : vector<16x1xf32>
    %362 = tpu.concatenate %353, %361 in 1 : vector<16x16xf32>, vector<16x1xf32> -> vector<16x17xf32>
    %cst_71 = arith.constant dense<0.000000e+00> : vector<32x16xf32>
    %363 = tpu.matmul %359, %362, %cst_71 {dimension_numbers = #tpu.dot_dimension_numbers<[1], [1], [0], [0], [0, 0, 1, 0], [], []>} : vector<32x17xf32>, vector<16x17xf32>, vector<32x16xf32> -> vector<32x16xf32>
    %cst_72 = arith.constant 2.500000e-01 : f32
    %364 = vector.broadcast %cst_72 : f32 to vector<32x16xf32>
    %365 = arith.mulf %363, %364 : vector<32x16xf32>
    %cst_73 = arith.constant 0.000000e+00 : f32
    %366 = vector.broadcast %cst_73 : f32 to vector<32x16xf32>
    %367 = arith.cmpf one, %287, %366 : vector<32x16xf32>
    %cst_74 = arith.constant -3.40282347E+38 : f32
    %368 = vector.broadcast %cst_74 : f32 to vector<32x16xf32>
    %369 = arith.select %367, %368, %365 : vector<32x16xi1>, vector<32x16xf32>
    %cst_75 = arith.constant dense<0xFF800000> : vector<32xf32>
    %370 = vector.multi_reduction <maximumf>, %369, %cst_75 [1] : vector<32x16xf32> to vector<32xf32>
    %371 = vector.shape_cast %370 : vector<32xf32> to vector<32x1xf32>
    %372 = vector.broadcast %371 : vector<32x1xf32> to vector<32x16xf32>
    %373 = arith.subf %369, %372 : vector<32x16xf32>
    %374 = math.exp %373 : vector<32x16xf32>
    %cst_76 = arith.constant dense<0.000000e+00> : vector<32xf32>
    %375 = vector.multi_reduction <add>, %374, %cst_76 [1] : vector<32x16xf32> to vector<32xf32>
    %376 = vector.shape_cast %375 : vector<32xf32> to vector<32x1xf32>
    %377 = vector.broadcast %376 : vector<32x1xf32> to vector<32x16xf32>
    %378 = arith.divf %374, %377 : vector<32x16xf32>
    %cst_77 = arith.constant dense<0.000000e+00> : vector<32x16xf32>
    %379 = tpu.matmul %378, %354, %cst_77 {dimension_numbers = #tpu.dot_dimension_numbers<[1], [0], [0], [1], [0, 0, 1, 1], [], []>} : vector<32x16xf32>, vector<16x16xf32>, vector<32x16xf32> -> vector<32x16xf32>
    %380 = vector.extract_strided_slice %378 {offsets = [0, 0], sizes = [16, 16], strides = [1, 1]} : vector<32x16xf32> to vector<16x16xf32>
    %381 = vector.extract_strided_slice %380 {offsets = [0, 0], sizes = [1, 16], strides = [1, 1]} : vector<16x16xf32> to vector<1x16xf32>
    %382 = vector.extract_strided_slice %380 {offsets = [1, 0], sizes = [1, 16], strides = [1, 1]} : vector<16x16xf32> to vector<1x16xf32>
    %383 = vector.extract_strided_slice %380 {offsets = [2, 0], sizes = [1, 16], strides = [1, 1]} : vector<16x16xf32> to vector<1x16xf32>
    %384 = vector.extract_strided_slice %380 {offsets = [3, 0], sizes = [1, 16], strides = [1, 1]} : vector<16x16xf32> to vector<1x16xf32>
    %385 = vector.extract_strided_slice %380 {offsets = [4, 0], sizes = [1, 16], strides = [1, 1]} : vector<16x16xf32> to vector<1x16xf32>
    %386 = vector.extract_strided_slice %380 {offsets = [5, 0], sizes = [1, 16], strides = [1, 1]} : vector<16x16xf32> to vector<1x16xf32>
    %387 = vector.extract_strided_slice %380 {offsets = [6, 0], sizes = [1, 16], strides = [1, 1]} : vector<16x16xf32> to vector<1x16xf32>
    %388 = vector.extract_strided_slice %380 {offsets = [7, 0], sizes = [1, 16], strides = [1, 1]} : vector<16x16xf32> to vector<1x16xf32>
    %389 = vector.extract_strided_slice %380 {offsets = [8, 0], sizes = [1, 16], strides = [1, 1]} : vector<16x16xf32> to vector<1x16xf32>
    %390 = vector.extract_strided_slice %380 {offsets = [9, 0], sizes = [1, 16], strides = [1, 1]} : vector<16x16xf32> to vector<1x16xf32>
    %391 = vector.extract_strided_slice %380 {offsets = [10, 0], sizes = [1, 16], strides = [1, 1]} : vector<16x16xf32> to vector<1x16xf32>
    %392 = vector.extract_strided_slice %380 {offsets = [11, 0], sizes = [1, 16], strides = [1, 1]} : vector<16x16xf32> to vector<1x16xf32>
    %393 = vector.extract_strided_slice %380 {offsets = [12, 0], sizes = [1, 16], strides = [1, 1]} : vector<16x16xf32> to vector<1x16xf32>
    %394 = vector.extract_strided_slice %380 {offsets = [13, 0], sizes = [1, 16], strides = [1, 1]} : vector<16x16xf32> to vector<1x16xf32>
    %395 = vector.extract_strided_slice %380 {offsets = [14, 0], sizes = [1, 16], strides = [1, 1]} : vector<16x16xf32> to vector<1x16xf32>
    %396 = vector.extract_strided_slice %380 {offsets = [15, 0], sizes = [1, 16], strides = [1, 1]} : vector<16x16xf32> to vector<1x16xf32>
    %397 = tpu.concatenate %381, %382, %383, %384, %385, %386, %387, %388, %389, %390, %391, %392, %393, %394, %395, %396 in 1 : vector<1x16xf32>, vector<1x16xf32>, vector<1x16xf32>, vector<1x16xf32>, vector<1x16xf32>, vector<1x16xf32>, vector<1x16xf32>, vector<1x16xf32>, vector<1x16xf32>, vector<1x16xf32>, vector<1x16xf32>, vector<1x16xf32>, vector<1x16xf32>, vector<1x16xf32>, vector<1x16xf32>, vector<1x16xf32> -> vector<1x256xf32>
    %398 = vector.extract_strided_slice %379 {offsets = [0, 0], sizes = [16, 16], strides = [1, 1]} : vector<32x16xf32> to vector<16x16xf32>
    %399 = vector.extract_strided_slice %378 {offsets = [16, 0], sizes = [16, 16], strides = [1, 1]} : vector<32x16xf32> to vector<16x16xf32>
    %400 = vector.extract_strided_slice %399 {offsets = [0, 0], sizes = [1, 16], strides = [1, 1]} : vector<16x16xf32> to vector<1x16xf32>
    %401 = vector.extract_strided_slice %399 {offsets = [1, 0], sizes = [1, 16], strides = [1, 1]} : vector<16x16xf32> to vector<1x16xf32>
    %402 = vector.extract_strided_slice %399 {offsets = [2, 0], sizes = [1, 16], strides = [1, 1]} : vector<16x16xf32> to vector<1x16xf32>
    %403 = vector.extract_strided_slice %399 {offsets = [3, 0], sizes = [1, 16], strides = [1, 1]} : vector<16x16xf32> to vector<1x16xf32>
    %404 = vector.extract_strided_slice %399 {offsets = [4, 0], sizes = [1, 16], strides = [1, 1]} : vector<16x16xf32> to vector<1x16xf32>
    %405 = vector.extract_strided_slice %399 {offsets = [5, 0], sizes = [1, 16], strides = [1, 1]} : vector<16x16xf32> to vector<1x16xf32>
    %406 = vector.extract_strided_slice %399 {offsets = [6, 0], sizes = [1, 16], strides = [1, 1]} : vector<16x16xf32> to vector<1x16xf32>
    %407 = vector.extract_strided_slice %399 {offsets = [7, 0], sizes = [1, 16], strides = [1, 1]} : vector<16x16xf32> to vector<1x16xf32>
    %408 = vector.extract_strided_slice %399 {offsets = [8, 0], sizes = [1, 16], strides = [1, 1]} : vector<16x16xf32> to vector<1x16xf32>
    %409 = vector.extract_strided_slice %399 {offsets = [9, 0], sizes = [1, 16], strides = [1, 1]} : vector<16x16xf32> to vector<1x16xf32>
    %410 = vector.extract_strided_slice %399 {offsets = [10, 0], sizes = [1, 16], strides = [1, 1]} : vector<16x16xf32> to vector<1x16xf32>
    %411 = vector.extract_strided_slice %399 {offsets = [11, 0], sizes = [1, 16], strides = [1, 1]} : vector<16x16xf32> to vector<1x16xf32>
    %412 = vector.extract_strided_slice %399 {offsets = [12, 0], sizes = [1, 16], strides = [1, 1]} : vector<16x16xf32> to vector<1x16xf32>
    %413 = vector.extract_strided_slice %399 {offsets = [13, 0], sizes = [1, 16], strides = [1, 1]} : vector<16x16xf32> to vector<1x16xf32>
    %414 = vector.extract_strided_slice %399 {offsets = [14, 0], sizes = [1, 16], strides = [1, 1]} : vector<16x16xf32> to vector<1x16xf32>
    %415 = vector.extract_strided_slice %399 {offsets = [15, 0], sizes = [1, 16], strides = [1, 1]} : vector<16x16xf32> to vector<1x16xf32>
    %416 = tpu.concatenate %400, %401, %402, %403, %404, %405, %406, %407, %408, %409, %410, %411, %412, %413, %414, %415 in 1 : vector<1x16xf32>, vector<1x16xf32>, vector<1x16xf32>, vector<1x16xf32>, vector<1x16xf32>, vector<1x16xf32>, vector<1x16xf32>, vector<1x16xf32>, vector<1x16xf32>, vector<1x16xf32>, vector<1x16xf32>, vector<1x16xf32>, vector<1x16xf32>, vector<1x16xf32>, vector<1x16xf32>, vector<1x16xf32> -> vector<1x256xf32>
    %417 = vector.extract_strided_slice %379 {offsets = [16, 0], sizes = [16, 16], strides = [1, 1]} : vector<32x16xf32> to vector<16x16xf32>
    %418 = tpu.concatenate %200, %219, %265, %284, %332, %351, %397, %416 in 0 : vector<1x256xf32>, vector<1x256xf32>, vector<1x256xf32>, vector<1x256xf32>, vector<1x256xf32>, vector<1x256xf32>, vector<1x256xf32>, vector<1x256xf32> -> vector<8x256xf32>
    %c0_78 = arith.constant 0 : index
    %c0_79 = arith.constant 0 : index
    %419 = vector.load %arg11[%c0_78, %c0_79] : memref<8x256xf32, #tpu.memory_space<vmem>>, vector<8x256xf32>
    tpu.vector_store %arg11[%c0_78, %c0_79], %418 {strides = array<i32>} : memref<8x256xf32, #tpu.memory_space<vmem>>, vector<8x256xf32>,
    %420 = tpu.concatenate %201, %220, %266, %285 in 1 : vector<16x16xf32>, vector<16x16xf32>, vector<16x16xf32>, vector<16x16xf32> -> vector<16x64xf32>
    %421 = tpu.concatenate %333, %352, %398, %417 in 1 : vector<16x16xf32>, vector<16x16xf32>, vector<16x16xf32>, vector<16x16xf32> -> vector<16x64xf32>
    %422 = tpu.concatenate %420, %421 in 0 : vector<16x64xf32>, vector<16x64xf32> -> vector<32x64xf32>
    %c0_80 = arith.constant 0 : index
    %c0_81 = arith.constant 0 : index
    %423 = vector.load %arg3[%c0_80, %c0_81] : memref<64x64xf32, #tpu.memory_space<vmem>>, vector<64x64xf32>
    %cst_82 = arith.constant dense<0.000000e+00> : vector<32x64xf32>
    %424 = tpu.matmul %422, %423, %cst_82 {dimension_numbers = #tpu.dot_dimension_numbers<[1], [0], [0], [1], [0, 0, 1, 1], [], []>} : vector<32x64xf32>, vector<64x64xf32>, vector<32x64xf32> -> vector<32x64xf32>
    %c0_83 = arith.constant 0 : index
    %c0_84 = arith.constant 0 : index
    %425 = vector.load %arg10[%c0_83, %c0_84] : memref<32x64xf32, #tpu.memory_space<vmem>>, vector<32x64xf32>
    tpu.vector_store %arg10[%c0_83, %c0_84], %424 {strides = array<i32>} : memref<32x64xf32, #tpu.memory_space<vmem>>, vector<32x64xf32>,
    return
  }
}

</mosaic_0001>

<llo_original>
// kernel: doge_attention_forward.1
$region0: #{doge_attention_forward.1}
  #allocation0 [shape = 'u32[]', space=smem, size = 0x4, offset = 0x4, fixed_abs, tag = 'smem constant byte address 0x4 - core index']
  #allocation1 [shape = 'u32[144,128]{1,0:T(1,128)}', space=vmem, size = 0x12000, scoped, tag = 'internal scratch']
  %s0 = inlined_call_operand.vmem [shape: f32[32,64], index: 0, kind: input, shape index: {}]
  %s1 = inlined_call_operand.hbm [shape: f32[64,128], index: 1, kind: input, shape index: {}]
  %s2 = inlined_call_operand.vmem [shape: f32[32,2], index: 2, kind: input, shape index: {}]
  %s3 = inlined_call_operand.hbm [shape: f32[64,64], index: 3, kind: input, shape index: {}]
  %s4 = inlined_call_operand.vmem [shape: f32[1,2], index: 4, kind: input, shape index: {}]
  %s5 = inlined_call_operand.vmem [shape: f32[1,16], index: 5, kind: input, shape index: {}]
  %s6 = inlined_call_operand.vmem [shape: f32[1,16], index: 6, kind: input, shape index: {}]
  %s7 = inlined_call_operand.hbm [shape: f32[32,16], index: 7, kind: input, shape index: {}]
  %s8 = inlined_call_operand.hbm [shape: f32[32,16], index: 8, kind: input, shape index: {}]
  %s9 = inlined_call_operand.hbm [shape: f32[32,16], index: 9, kind: input, shape index: {}]
  %s10 = inlined_call_operand.hbm [shape: f32[32,64], index: 10, kind: output, shape index: {0}]
  %s11 = inlined_call_operand.vmem [shape: f32[8,256], index: 11, kind: output, shape index: {1}]
  %12 = xla_tuple %s10, %s11
  %s13 = sld [smem:[#allocation0]]
  $region78: #{doge_attention_forward.1} parent=0
    _
  %s15 = ssub.s32 1, %s13
  %s16 = scalar_select 0, %s15, %s13
  $region1: #{doge_attention_forward.1} parent=0
    #allocation2 [shape = 'u8[32768]{0}', space=vmem, size = 0x8000, scoped, tag = 'input window, operand 1, single buffered']
    #allocation3 [shape = 's32[1]{0}', space=sflag, size = 0x4, scoped, tag = 'scoped memory for doge_attention_forward.1']
    #allocation4 [shape = 's32[1]{0}', space=sflag, size = 0x4, scoped, tag = 'scoped memory for doge_attention_forward.1']
    #allocation5 [shape = 'u8[32768]{0}', space=vmem, size = 0x8000, scoped, tag = 'input window, operand 3, single buffered']
    #allocation6 [shape = 's32[1]{0}', space=sflag, size = 0x4, scoped, tag = 'scoped memory for doge_attention_forward.1']
    #allocation7 [shape = 'u8[16384]{0}', space=vmem, size = 0x4000, scoped, tag = 'input window, operand 7, single buffered']
    #allocation8 [shape = 'u8[16384]{0}', space=vmem, size = 0x4000, scoped, tag = 'input window, operand 8, single buffered']
    #allocation9 [shape = 's32[1]{0}', space=sflag, size = 0x4, scoped, tag = 'scoped memory for doge_attention_forward.1']
    #allocation10 [shape = 'u8[16384]{0}', space=vmem, size = 0x4000, scoped, tag = 'input window, operand 9, single buffered']
    #allocation11 [shape = 'u8[16384]{0}', space=vmem, size = 0x4000, scoped, tag = 'output window, operand 0, single buffered']
    %17 = vsyncpa [#allocation3], 0
    %18 = vsyncpa [#allocation6], 0
    %19 = vsyncpa [#allocation9], 0
    %20 = vsyncpa [#allocation4], 0
    // Predicated region
    $region2: #{doge_attention_forward.1} parent=1 // pred_check
      _
    $region3: #{doge_attention_forward.1} parent=1 // pred_check_branch
      %22 = sbr.rel (0) target = $region5
    $region4: #{doge_attention_forward.1} parent=1 // pred_region
      _
    $region5: #{doge_attention_forward.1} parent=1 // pred_fallthru
      _
    // Predicated region
    $region6: #{doge_attention_forward.1} parent=1 // pred_check
      _
    $region7: #{doge_attention_forward.1} parent=1 // pred_check_branch
      %24 = sbr.rel (0) target = $region9
    $region8: #{doge_attention_forward.1} parent=1 // pred_region
      %s26 = ssub.s32 1024, 1024
      %27 = vsyncadd [#allocation3], %s26
      %s28 = sshll.u32 [#allocation2], 4
      %s29 = int_to_ptr.vmem [resolvable:$true] %s28
      %34 = dma.hbm_to_vmem [thread:$0]  %s1, 1024, %s29, [#allocation3], 128, 128, 8
    $region9: #{doge_attention_forward.1} parent=1 // pred_fallthru
      _
    // Predicated region
    $region10: #{doge_attention_forward.1} parent=1 // pred_check
      _
    $region11: #{doge_attention_forward.1} parent=1 // pred_check_branch
      %36 = sbr.rel (0) target = $region13
    $region12: #{doge_attention_forward.1} parent=1 // pred_region
      _
    $region13: #{doge_attention_forward.1} parent=1 // pred_fallthru
      _
    // Predicated region
    $region14: #{doge_attention_forward.1} parent=1 // pred_check
      _
    $region15: #{doge_attention_forward.1} parent=1 // pred_check_branch
      %38 = sbr.rel (0) target = $region17
    $region16: #{doge_attention_forward.1} parent=1 // pred_region
      %s40 = ssub.s32 1024, 1024
      %41 = vsyncadd [#allocation6], %s40
      %s42 = sshll.u32 [#allocation5], 4
      %s43 = int_to_ptr.vmem [resolvable:$true] %s42
      %48 = dma.hbm_to_vmem [thread:$0]  %s3, 1024, %s43, [#allocation6], 128, 128, 8
    $region17: #{doge_attention_forward.1} parent=1 // pred_fallthru
      _
    // Predicated region
    $region18: #{doge_attention_forward.1} parent=1 // pred_check
      _
    $region19: #{doge_attention_forward.1} parent=1 // pred_check_branch
      %50 = sbr.rel (0) target = $region21
    $region20: #{doge_attention_forward.1} parent=1 // pred_region
      _
    $region21: #{doge_attention_forward.1} parent=1 // pred_fallthru
      _
    // Predicated region
    $region22: #{doge_attention_forward.1} parent=1 // pred_check
      _
    $region23: #{doge_attention_forward.1} parent=1 // pred_check_branch
      %52 = sbr.rel (0) target = $region25
    $region24: #{doge_attention_forward.1} parent=1 // pred_region
      _
    $region25: #{doge_attention_forward.1} parent=1 // pred_fallthru
      _
    // Predicated region
    $region26: #{doge_attention_forward.1} parent=1 // pred_check
      _
    $region27: #{doge_attention_forward.1} parent=1 // pred_check_branch
      %54 = sbr.rel (0) target = $region29
    $region28: #{doge_attention_forward.1} parent=1 // pred_region
      _
    $region29: #{doge_attention_forward.1} parent=1 // pred_fallthru
      _
    // Predicated region
    $region30: #{doge_attention_forward.1} parent=1 // pred_check
      _
    $region31: #{doge_attention_forward.1} parent=1 // pred_check_branch
      %56 = sbr.rel (0) target = $region33
    $region32: #{doge_attention_forward.1} parent=1 // pred_region
      %s58 = ssub.s32 512, 512
      %59 = vsyncadd [#allocation6], %s58
      %s60 = sshll.u32 [#allocation7], 4
      %s61 = int_to_ptr.vmem [resolvable:$true] %s60
      %66 = dma.hbm_to_vmem [thread:$0]  %s7, 512, %s61, [#allocation6], 128, 128, 8
    $region33: #{doge_attention_forward.1} parent=1 // pred_fallthru
      _
    // Predicated region
    $region34: #{doge_attention_forward.1} parent=1 // pred_check
      _
    $region35: #{doge_attention_forward.1} parent=1 // pred_check_branch
      %68 = sbr.rel (0) target = $region37
    $region36: #{doge_attention_forward.1} parent=1 // pred_region
      %s70 = ssub.s32 512, 512
      %71 = vsyncadd [#allocation9], %s70
      %s72 = sshll.u32 [#allocation8], 4
      %s73 = int_to_ptr.vmem [resolvable:$true] %s72
      %78 = dma.hbm_to_vmem [thread:$0]  %s8, 512, %s73, [#allocation9], 128, 128, 8
    $region37: #{doge_attention_forward.1} parent=1 // pred_fallthru
      _
    // Predicated region
    $region38: #{doge_attention_forward.1} parent=1 // pred_check
      _
    $region39: #{doge_attention_forward.1} parent=1 // pred_check_branch
      %80 = sbr.rel (0) target = $region41
    $region40: #{doge_attention_forward.1} parent=1 // pred_region
      %s82 = ssub.s32 512, 512
      %83 = vsyncadd [#allocation9], %s82
      %s84 = sshll.u32 [#allocation10], 4
      %s85 = int_to_ptr.vmem [resolvable:$true] %s84
      %90 = dma.hbm_to_vmem [thread:$0]  %s9, 512, %s85, [#allocation9], 128, 128, 8
    $region41: #{doge_attention_forward.1} parent=1 // pred_fallthru
      _
    // Predicated region
    $region42: #{doge_attention_forward.1} parent=1 // pred_check
      _
    $region43: #{doge_attention_forward.1} parent=1 // pred_check_branch
      %92 = sbr.rel (0) target = $region45
    $region44: #{doge_attention_forward.1} parent=1 // pred_region
      %93 = dma.done [#allocation3], 1024
    $region45: #{doge_attention_forward.1} parent=1 // pred_fallthru
      _
    // Predicated region
    $region46: #{doge_attention_forward.1} parent=1 // pred_check
      _
    $region47: #{doge_attention_forward.1} parent=1 // pred_check_branch
      %95 = sbr.rel (0) target = $region49
    $region48: #{doge_attention_forward.1} parent=1 // pred_region
      %96 = dma.done [#allocation6], 1024
    $region49: #{doge_attention_forward.1} parent=1 // pred_fallthru
      _
    // Predicated region
    $region50: #{doge_attention_forward.1} parent=1 // pred_check
      _
    $region51: #{doge_attention_forward.1} parent=1 // pred_check_branch
      %98 = sbr.rel (0) target = $region53
    $region52: #{doge_attention_forward.1} parent=1 // pred_region
      %99 = dma.done [#allocation6], 512
    $region53: #{doge_attention_forward.1} parent=1 // pred_fallthru
      _
    // Predicated region
    $region54: #{doge_attention_forward.1} parent=1 // pred_check
      _
    $region55: #{doge_attention_forward.1} parent=1 // pred_check_branch
      %101 = sbr.rel (0) target = $region57
    $region56: #{doge_attention_forward.1} parent=1 // pred_region
      %102 = dma.done [#allocation9], 512
    $region57: #{doge_attention_forward.1} parent=1 // pred_fallthru
      _
    // Predicated region
    $region58: #{doge_attention_forward.1} parent=1 // pred_check
      _
    $region59: #{doge_attention_forward.1} parent=1 // pred_check_branch
      %104 = sbr.rel (0) target = $region61
    $region60: #{doge_attention_forward.1} parent=1 // pred_region
      %105 = dma.done [#allocation9], 512
    $region61: #{doge_attention_forward.1} parent=1 // pred_fallthru
      _
    %v106 = vld [vmem:[%s0] sm:$0xff]
    %v107 = vld [vmem:[%s0 + $0x8] sm:$0xff]
    %v108 = vld [vmem:[%s0 + $0x10] sm:$0xff]
    %v109 = vld [vmem:[%s0 + $0x18] sm:$0xff]
    %v110 = vld [vmem:[#allocation2] sm:$0xff]
    %v111 = vld [vmem:[#allocation2 + $0x8] sm:$0xff]
    %v112 = vld [vmem:[#allocation2 + $0x10] sm:$0xff]
    %v113 = vld [vmem:[#allocation2 + $0x18] sm:$0xff]
    %v114 = vld [vmem:[#allocation2 + $0x20] sm:$0xff]
    %v115 = vld [vmem:[#allocation2 + $0x28] sm:$0xff]
    %v116 = vld [vmem:[#allocation2 + $0x30] sm:$0xff]
    %v117 = vld [vmem:[#allocation2 + $0x38] sm:$0xff]
    %vm118 = vcmask 523264
    %v120 = vsel %vm118, %v106, 0
    %v123 = vsel %vm118, %v107, 0
    %v126 = vsel %vm118, %v108, 0
    %v129 = vsel %vm118, %v109, 0
    %131 = vmatprep.subr.mxu0 0.0
    %132 = vmatpush1.msra.mxu0 0.0
    %133 = vmatprep.subr.mxu0 0.0
    %134 = vmatpush1.msra.mxu0 0.0
    %135 = vmatprep.subr.mxu0 0.0
    %136 = vmatpush1.msra.mxu0 0.0
    %137 = vmatprep.subr.mxu0 0.0
    %138 = vmatpush1.msra.mxu0 0.0
    %139 = vmatprep.subr.mxu0 0.0
    %140 = vmatpush1.msra.mxu0 0.0
    %141 = vmatprep.subr.mxu0 0.0
    %142 = vmatpush1.msra.mxu0 0.0
    %143 = vmatprep.subr.mxu0 0.0
    %144 = vmatpush1.msra.mxu0 0.0
    %145 = vmatprep.subr.mxu0 0.0
    %146 = vmatpush1.msra.mxu0 0.0
    %147 = vmatprep.subr.mxu0 0.0
    %148 = vmatpush1.msra.mxu0 %v117
    %149 = vmatprep.subr.mxu0 0.0
    %150 = vmatpush1.msra.mxu0 %v116
    %151 = vmatprep.subr.mxu0 0.0
    %152 = vmatpush1.msra.mxu0 %v115
    %153 = vmatprep.subr.mxu0 0.0
    %154 = vmatpush1.msra.mxu0 %v114
    %155 = vmatprep.subr.mxu0 0.0
    %156 = vmatpush1.msra.mxu0 %v113
    %157 = vmatprep.subr.mxu0 0.0
    %158 = vmatpush1.msra.mxu0 %v112
    %159 = vmatprep.subr.mxu0 0.0
    %160 = vmatpush1.msra.mxu0 %v111
    %161 = vmatprep.subr.mxu0 0.0
    %162 = vmatpush1.msra.mxu0 %v110
    %163 = vmatprep.subr.mxu0 0.0
    %164 = vmatpush2.msra.mxu0 0.0
    %165 = vmatprep.subr.mxu0 0.0
    %166 = vmatpush2.msra.mxu0 0.0
    %167 = vmatprep.subr.mxu0 0.0
    %168 = vmatpush2.msra.mxu0 0.0
    %169 = vmatprep.subr.mxu0 0.0
    %170 = vmatpush2.msra.mxu0 0.0
    %171 = vmatprep.subr.mxu0 0.0
    %172 = vmatpush2.msra.mxu0 0.0
    %173 = vmatprep.subr.mxu0 0.0
    %174 = vmatpush2.msra.mxu0 0.0
    %175 = vmatprep.subr.mxu0 0.0
    %176 = vmatpush2.msra.mxu0 0.0
    %177 = vmatprep.subr.mxu0 0.0
    %178 = vmatpush2.msra.mxu0 0.0
    %179 = vmatprep.subr.mxu0 0.0
    %180 = vmatpush2.msra.mxu0 0.0
    %181 = vmatprep.subr.mxu0 0.0
    %182 = vmatpush2.msra.mxu0 0.0
    %183 = vmatprep.subr.mxu0 0.0
    %184 = vmatpush2.msra.mxu0 0.0
    %185 = vmatprep.subr.mxu0 0.0
    %186 = vmatpush2.msra.mxu0 0.0
    %187 = vmatprep.subr.mxu0 0.0
    %188 = vmatpush2.msra.mxu0 0.0
    %189 = vmatprep.subr.mxu0 0.0
    %190 = vmatpush2.msra.mxu0 0.0
    %191 = vmatprep.subr.mxu0 0.0
    %192 = vmatpush2.msra.mxu0 0.0
    %193 = vmatprep.subr.mxu0 0.0
    %194 = vmatpush2.msra.mxu0 0.0
    %195 = vmatprep.mubr.f32.mxu0 0.0
    %196 = vmatmul.mubr.f32.gmra.mxu0 %v120
    %v197 = vpop.f32.mrf.mxu0
    %v198 = vadd.f32 0.0, %v197
    %v199 = vpop.f32.mrf.mxu0
    %200 = vmatprep.mubr.f32.mxu0 0.0
    %201 = vmatmul.mubr.f32.gmra.mxu0 %v123
    %v202 = vpop.f32.mrf.mxu0
    %v203 = vadd.f32 0.0, %v202
    %v204 = vpop.f32.mrf.mxu0
    %205 = vmatprep.mubr.f32.mxu0 0.0
    %206 = vmatmul.mubr.f32.gmra.mxu0 %v126
    %v207 = vpop.f32.mrf.mxu0
    %v208 = vadd.f32 0.0, %v207
    %v209 = vpop.f32.mrf.mxu0
    %210 = vmatprep.mubr.f32.mxu0 0.0
    %211 = vmatmul.mubr.f32.gmra.mxu0 %v129
    %v212 = vpop.f32.mrf.mxu0
    %v213 = vadd.f32 0.0, %v212
    %v214 = vpop.f32.mrf.mxu0
    %215 = vdwg.mxu0
    %v216 = vld [vmem:[%s2] sm:$0xff]
    %v217 = vld [vmem:[%s2 + $0x8] sm:$0xff]
    %v218 = vld [vmem:[%s2 + $0x10] sm:$0xff]
    %v219 = vld [vmem:[%s2 + $0x18] sm:$0xff]
    %224 = vrot.lane.b32.xlu0 %v198, 32
    %v225 = vpop.permute.xlu0 %224
    %226 = vrot.lane.b32.xlu0 %v203, 32
    %v227 = vpop.permute.xlu0 %226
    %228 = vrot.lane.b32.xlu0 %v208, 32
    %v229 = vpop.permute.xlu0 %228
    %230 = vrot.lane.b32.xlu0 %v213, 32
    %v231 = vpop.permute.xlu0 %230
    %vm232 = vcmask 261120
    %v233 = vsel %vm232, %v225, 0
    %v235 = vsel %vm232, %v227, 0
    %v237 = vsel %vm232, %v229, 0
    %v239 = vsel %vm232, %v231, 0
    %241 = vmatprep.subr.mxu0 0.0
    %242 = vmatpush1.msra.mxu0 0.0
    %243 = vmatprep.subr.mxu0 0.0
    %244 = vmatpush1.msra.mxu0 0.0
    %245 = vmatprep.subr.mxu0 0.0
    %246 = vmatpush1.msra.mxu0 0.0
    %247 = vmatprep.subr.mxu0 0.0
    %248 = vmatpush1.msra.mxu0 0.0
    %249 = vmatprep.subr.mxu0 0.0
    %250 = vmatpush1.msra.mxu0 0.0
    %251 = vmatprep.subr.mxu0 0.0
    %252 = vmatpush1.msra.mxu0 0.0
    %253 = vmatprep.subr.mxu0 0.0
    %254 = vmatpush1.msra.mxu0 0.0
    %255 = vmatprep.subr.mxu0 0.0
    %256 = vmatpush1.msra.mxu0 0.0
    %257 = vmatprep.subr.mxu0 0.0
    %258 = vmatpush1.msra.mxu0 0.0
    %259 = vmatprep.subr.mxu0 0.0
    %260 = vmatpush1.msra.mxu0 0.0
    %261 = vmatprep.subr.mxu0 0.0
    %262 = vmatpush1.msra.mxu0 0.0
    %263 = vmatprep.subr.mxu0 0.0
    %264 = vmatpush1.msra.mxu0 0.0
    %265 = vmatprep.subr.mxu0 0.0
    %266 = vmatpush1.msra.mxu0 %v219
    %267 = vmatprep.subr.mxu0 0.0
    %268 = vmatpush1.msra.mxu0 %v218
    %269 = vmatprep.subr.mxu0 0.0
    %270 = vmatpush1.msra.mxu0 %v217
    %271 = vmatprep.subr.mxu0 0.0
    %272 = vmatpush1.msra.mxu0 %v216
    %273 = vmatprep.subr.mxu0 0.0
    %274 = vmatpush2.msra.mxu0 0.0
    %275 = vmatprep.subr.mxu0 0.0
    %276 = vmatpush2.msra.mxu0 0.0
    %277 = vmatprep.subr.mxu0 0.0
    %278 = vmatpush2.msra.mxu0 0.0
    %279 = vmatprep.subr.mxu0 0.0
    %280 = vmatpush2.msra.mxu0 0.0
    %281 = vmatprep.subr.mxu0 0.0
    %282 = vmatpush2.msra.mxu0 0.0
    %283 = vmatprep.subr.mxu0 0.0
    %284 = vmatpush2.msra.mxu0 0.0
    %285 = vmatprep.subr.mxu0 0.0
    %286 = vmatpush2.msra.mxu0 0.0
    %287 = vmatprep.subr.mxu0 0.0
    %288 = vmatpush2.msra.mxu0 0.0
    %289 = vmatprep.subr.mxu0 0.0
    %290 = vmatpush2.msra.mxu0 0.0
    %291 = vmatprep.subr.mxu0 0.0
    %292 = vmatpush2.msra.mxu0 0.0
    %293 = vmatprep.subr.mxu0 0.0
    %294 = vmatpush2.msra.mxu0 0.0
    %295 = vmatprep.subr.mxu0 0.0
    %296 = vmatpush2.msra.mxu0 0.0
    %297 = vmatprep.subr.mxu0 0.0
    %298 = vmatpush2.msra.mxu0 0.0
    %299 = vmatprep.subr.mxu0 0.0
    %300 = vmatpush2.msra.mxu0 0.0
    %301 = vmatprep.subr.mxu0 0.0
    %302 = vmatpush2.msra.mxu0 0.0
    %303 = vmatprep.subr.mxu0 0.0
    %304 = vmatpush2.msra.mxu0 0.0
    %305 = vmatprep.mubr.f32.mxu0 0.0
    %306 = vmatmul.mubr.f32.gmra.mxu0 %v233
    %v307 = vpop.f32.mrf.mxu0
    %v308 = vadd.f32 0.0, %v307
    %v309 = vpop.f32.mrf.mxu0
    %310 = vmatprep.mubr.f32.mxu0 0.0
    %311 = vmatmul.mubr.f32.gmra.mxu0 %v235
    %v312 = vpop.f32.mrf.mxu0
    %v313 = vadd.f32 0.0, %v312
    %v314 = vpop.f32.mrf.mxu0
    %315 = vmatprep.mubr.f32.mxu0 0.0
    %316 = vmatmul.mubr.f32.gmra.mxu0 %v237
    %v317 = vpop.f32.mrf.mxu0
    %v318 = vadd.f32 0.0, %v317
    %v319 = vpop.f32.mrf.mxu0
    %320 = vmatprep.mubr.f32.mxu0 0.0
    %321 = vmatmul.mubr.f32.gmra.mxu0 %v239
    %v322 = vpop.f32.mrf.mxu0
    %v323 = vadd.f32 0.0, %v322
    %v324 = vpop.f32.mrf.mxu0
    %325 = vdwg.mxu0
    %v326 = vmax.f32 %v308, 0.0
    %v327 = vmax.f32 %v313, 0.0
    %v328 = vmax.f32 %v318, 0.0
    %v329 = vmax.f32 %v323, 0.0
    %v330 = vand.u32 2147483647, %v308
    %v331 = vand.u32 2147483647, %v313
    %v332 = vand.u32 2147483647, %v318
    %v333 = vand.u32 2147483647, %v323
    %v334 = vsub.f32 0.0, %v330
    %v335 = vsub.f32 0.0, %v331
    %v336 = vsub.f32 0.0, %v332
    %v337 = vsub.f32 0.0, %v333
    %v338 = vmul.f32 %v334, 1.442695
    %v339 = vpow.pop %v338
    %v340 = vmul.f32 %v335, 1.442695
    %v341 = vpow.pop %v340
    %v342 = vmul.f32 %v336, 1.442695
    %v343 = vpow.pop %v342
    %v344 = vmul.f32 %v337, 1.442695
    %v345 = vpow.pop %v344
    %v346 = vadd.f32 %v339, 1.0
    %v347 = vadd.f32 %v341, 1.0
    %v348 = vadd.f32 %v343, 1.0
    %v349 = vadd.f32 %v345, 1.0
    %v350 = vlog2.pop %v346
    %v351 = vmul.f32 %v350, 0.6931472
    %v352 = vlog2.pop %v347
    %v353 = vmul.f32 %v352, 0.6931472
    %v354 = vlog2.pop %v348
    %v355 = vmul.f32 %v354, 0.6931472
    %v356 = vlog2.pop %v349
    %v357 = vmul.f32 %v356, 0.6931472
    %v358 = vadd.f32 %v326, %v351
    %v359 = vadd.f32 %v327, %v353
    %v360 = vadd.f32 %v328, %v355
    %v361 = vadd.f32 %v329, %v357
    %v362 = vld [vmem:[%s4] sm:$0x1]
    %v364 = vlaneseq
    %v365 = vshrl.u32 %v364, 7
    %v366 = vsub.s32 0, %v365
    %v367 = vrot.slane %v362, %v366
    %v369 = vmul.f32 %v367, %v358
    %v370 = vmul.f32 %v367, %v359
    %v371 = vmul.f32 %v367, %v360
    %v372 = vmul.f32 %v367, %v361
    %v373 = vmul.f32 %v369, 1.442695
    %v374 = vpow.pop %v373
    %v375 = vmul.f32 %v370, 1.442695
    %v376 = vpow.pop %v375
    %v377 = vmul.f32 %v371, 1.442695
    %v378 = vpow.pop %v377
    %v379 = vmul.f32 %v372, 1.442695
    %v380 = vpow.pop %v379
    %v381 = vld [vmem:[#allocation7] sm:$0xff]
    %v382 = vld [vmem:[#allocation7 + $0x8] sm:$0xff]
    %v383 = vld [vmem:[#allocation7 + $0x10] sm:$0xff]
    %v384 = vld [vmem:[#allocation7 + $0x18] sm:$0xff]
    %v385 = vld [vmem:[#allocation8] sm:$0xff]
    %v386 = vld [vmem:[#allocation8 + $0x8] sm:$0xff]
    %v387 = vld [vmem:[#allocation8 + $0x10] sm:$0xff]
    %v388 = vld [vmem:[#allocation8 + $0x18] sm:$0xff]
    %v389 = vld [vmem:[%s5] sm:$0x1]
    %v390 = vld [vmem:[%s6] sm:$0x1]
    %v391 = vmul.f32 %v198, %v198
    %v392 = vmul.f32 %v203, %v203
    %v393 = vmul.f32 %v208, %v208
    %v394 = vmul.f32 %v213, %v213
    %vm395 = vcmask 130048
    %v396 = vsel %vm395, %v391, 0.0
    %397 = vadd.xlane.f32.xlu0 %v396
    %v398 = vpop.xlane.xlu0 %397
    %v399 = vsel %vm395, %v392, 0.0
    %400 = vadd.xlane.f32.xlu0 %v399
    %v401 = vpop.xlane.xlu0 %400
    %v402 = vsel %vm395, %v393, 0.0
    %403 = vadd.xlane.f32.xlu0 %v402
    %v404 = vpop.xlane.xlu0 %403
    %v405 = vsel %vm395, %v394, 0.0
    %406 = vadd.xlane.f32.xlu0 %v405
    %v407 = vpop.xlane.xlu0 %406
    %v408 = vrcp.pop 16.0
    %v409 = vmul.f32 %v398, %v408
    %v410 = vmul.f32 %v401, %v408
    %v411 = vmul.f32 %v404, %v408
    %v412 = vmul.f32 %v407, %v408
    %v413 = vadd.f32 %v409, 1e-06
    %v414 = vadd.f32 %v410, 1e-06
    %v415 = vadd.f32 %v411, 1e-06
    %v416 = vadd.f32 %v412, 1e-06
    %v417 = vrsqrt.pop %v413
    %v418 = vrsqrt.pop %v414
    %v419 = vrsqrt.pop %v415
    %v420 = vrsqrt.pop %v416
    %v421 = vmul.f32 %v198, %v417
    %v422 = vmul.f32 %v203, %v418
    %v423 = vmul.f32 %v208, %v419
    %v424 = vmul.f32 %v213, %v420
    %v426 = vlaneseq
    %v427 = vshrl.u32 %v426, 7
    %v428 = vsub.s32 0, %v427
    %v429 = vrot.slane %v389, %v428
    %v431 = vmul.f32 %v421, %v429
    %v432 = vmul.f32 %v422, %v429
    %v433 = vmul.f32 %v423, %v429
    %v434 = vmul.f32 %v424, %v429
    %v435 = vsub.f32 0.0, %v431
    %v436 = vsub.f32 0.0, %v432
    %v437 = vsub.f32 0.0, %v433
    %v438 = vsub.f32 0.0, %v434
    %443 = vrot.lane.b32.xlu0 %v435, 120
    %v444 = vpop.permute.xlu0 %443
    %445 = vrot.lane.b32.xlu0 %v436, 120
    %v446 = vpop.permute.xlu0 %445
    %447 = vrot.lane.b32.xlu0 %v437, 120
    %v448 = vpop.permute.xlu0 %447
    %449 = vrot.lane.b32.xlu0 %v438, 120
    %v450 = vpop.permute.xlu0 %449
    %459 = vrot.lane.b32.xlu0 %v431, 8
    %v460 = vpop.permute.xlu0 %459
    %461 = vrot.lane.b32.xlu0 %v432, 8
    %v462 = vpop.permute.xlu0 %461
    %463 = vrot.lane.b32.xlu0 %v433, 8
    %v464 = vpop.permute.xlu0 %463
    %465 = vrot.lane.b32.xlu0 %v434, 8
    %v466 = vpop.permute.xlu0 %465
    %vm471 = vcmask 64512
    %v472 = vsel %vm471, %v444, %v460
    %v473 = vsel %vm471, %v446, %v462
    %v474 = vsel %vm471, %v448, %v464
    %v475 = vsel %vm471, %v450, %v466
    %v476 = vmul.f32 %v431, %v381
    %v477 = vmul.f32 %v432, %v382
    %v478 = vmul.f32 %v433, %v383
    %v479 = vmul.f32 %v434, %v384
    %v480 = vmul.f32 %v472, %v385
    %v481 = vmul.f32 %v473, %v386
    %v482 = vmul.f32 %v474, %v387
    %v483 = vmul.f32 %v475, %v388
    %v484 = vadd.f32 %v476, %v480
    %v485 = vadd.f32 %v477, %v481
    %v486 = vadd.f32 %v478, %v482
    %v487 = vadd.f32 %v479, %v483
    %492 = vrot.lane.b32.xlu0 %v391, 112
    %v493 = vpop.permute.xlu0 %492
    %494 = vrot.lane.b32.xlu0 %v392, 112
    %v495 = vpop.permute.xlu0 %494
    %496 = vrot.lane.b32.xlu0 %v393, 112
    %v497 = vpop.permute.xlu0 %496
    %498 = vrot.lane.b32.xlu0 %v394, 112
    %v499 = vpop.permute.xlu0 %498
    %v504 = vsel %vm395, %v493, 0.0
    %505 = vadd.xlane.f32.xlu0 %v504
    %v506 = vpop.xlane.xlu0 %505
    %v507 = vsel %vm395, %v495, 0.0
    %508 = vadd.xlane.f32.xlu0 %v507
    %v509 = vpop.xlane.xlu0 %508
    %v510 = vsel %vm395, %v497, 0.0
    %511 = vadd.xlane.f32.xlu0 %v510
    %v512 = vpop.xlane.xlu0 %511
    %v513 = vsel %vm395, %v499, 0.0
    %514 = vadd.xlane.f32.xlu0 %v513
    %v515 = vpop.xlane.xlu0 %514
    %v516 = vmul.f32 %v506, %v408
    %v517 = vmul.f32 %v509, %v408
    %v518 = vmul.f32 %v512, %v408
    %v519 = vmul.f32 %v515, %v408
    %v520 = vadd.f32 %v516, 1e-06
    %v521 = vadd.f32 %v517, 1e-06
    %v522 = vadd.f32 %v518, 1e-06
    %v523 = vadd.f32 %v519, 1e-06
    %v524 = vrsqrt.pop %v520
    %v525 = vrsqrt.pop %v521
    %v526 = vrsqrt.pop %v522
    %v527 = vrsqrt.pop %v523
    %v528 = vmul.f32 %v198, %v524
    %v529 = vmul.f32 %v203, %v525
    %v530 = vmul.f32 %v208, %v526
    %v531 = vmul.f32 %v213, %v527
    %532 = vrot.lane.b32.xlu0 %v429, 16
    %v533 = vpop.permute.xlu0 %532
    %v535 = vmul.f32 %v528, %v533
    %v536 = vmul.f32 %v529, %v533
    %v537 = vmul.f32 %v530, %v533
    %v538 = vmul.f32 %v531, %v533
    %v539 = vsub.f32 0.0, %v535
    %v540 = vsub.f32 0.0, %v536
    %v541 = vsub.f32 0.0, %v537
    %v542 = vsub.f32 0.0, %v538
    %547 = vrot.lane.b32.xlu0 %v539, 104
    %v548 = vpop.permute.xlu0 %547
    %549 = vrot.lane.b32.xlu0 %v540, 104
    %v550 = vpop.permute.xlu0 %549
    %551 = vrot.lane.b32.xlu0 %v541, 104
    %v552 = vpop.permute.xlu0 %551
    %553 = vrot.lane.b32.xlu0 %v542, 104
    %v554 = vpop.permute.xlu0 %553
    %563 = vrot.lane.b32.xlu0 %v535, 120
    %v564 = vpop.permute.xlu0 %563
    %565 = vrot.lane.b32.xlu0 %v536, 120
    %v566 = vpop.permute.xlu0 %565
    %567 = vrot.lane.b32.xlu0 %v537, 120
    %v568 = vpop.permute.xlu0 %567
    %569 = vrot.lane.b32.xlu0 %v538, 120
    %v570 = vpop.permute.xlu0 %569
    %v575 = vsel %vm471, %v548, %v564
    %v576 = vsel %vm471, %v550, %v566
    %v577 = vsel %vm471, %v552, %v568
    %v578 = vsel %vm471, %v554, %v570
    %583 = vrot.lane.b32.xlu0 %v381, 16
    %v584 = vpop.permute.xlu0 %583
    %585 = vrot.lane.b32.xlu0 %v382, 16
    %v586 = vpop.permute.xlu0 %585
    %587 = vrot.lane.b32.xlu0 %v383, 16
    %v588 = vpop.permute.xlu0 %587
    %589 = vrot.lane.b32.xlu0 %v384, 16
    %v590 = vpop.permute.xlu0 %589
    %v595 = vmul.f32 %v535, %v584
    %v596 = vmul.f32 %v536, %v586
    %v597 = vmul.f32 %v537, %v588
    %v598 = vmul.f32 %v538, %v590
    %v599 = vmul.f32 %v575, %v385
    %v600 = vmul.f32 %v576, %v386
    %v601 = vmul.f32 %v577, %v387
    %v602 = vmul.f32 %v578, %v388
    %607 = vrot.lane.b32.xlu0 %v599, 16
    %v608 = vpop.permute.xlu0 %607
    %609 = vrot.lane.b32.xlu0 %v600, 16
    %v610 = vpop.permute.xlu0 %609
    %611 = vrot.lane.b32.xlu0 %v601, 16
    %v612 = vpop.permute.xlu0 %611
    %613 = vrot.lane.b32.xlu0 %v602, 16
    %v614 = vpop.permute.xlu0 %613
    %v619 = vadd.f32 %v595, %v608
    %v620 = vadd.f32 %v596, %v610
    %v621 = vadd.f32 %v597, %v612
    %v622 = vadd.f32 %v598, %v614
    %623 = vrot.lane.b32.xlu0 %v391, 96
    %v624 = vpop.permute.xlu0 %623
    %625 = vrot.lane.b32.xlu0 %v392, 96
    %v626 = vpop.permute.xlu0 %625
    %627 = vrot.lane.b32.xlu0 %v393, 96
    %v628 = vpop.permute.xlu0 %627
    %629 = vrot.lane.b32.xlu0 %v394, 96
    %v630 = vpop.permute.xlu0 %629
    %v635 = vsel %vm395, %v624, 0.0
    %636 = vadd.xlane.f32.xlu0 %v635
    %v637 = vpop.xlane.xlu0 %636
    %v638 = vsel %vm395, %v626, 0.0
    %639 = vadd.xlane.f32.xlu0 %v638
    %v640 = vpop.xlane.xlu0 %639
    %v641 = vsel %vm395, %v628, 0.0
    %642 = vadd.xlane.f32.xlu0 %v641
    %v643 = vpop.xlane.xlu0 %642
    %v644 = vsel %vm395, %v630, 0.0
    %645 = vadd.xlane.f32.xlu0 %v644
    %v646 = vpop.xlane.xlu0 %645
    %v647 = vmul.f32 %v637, %v408
    %v648 = vmul.f32 %v640, %v408
    %v649 = vmul.f32 %v643, %v408
    %v650 = vmul.f32 %v646, %v408
    %v651 = vadd.f32 %v647, 1e-06
    %v652 = vadd.f32 %v648, 1e-06
    %v653 = vadd.f32 %v649, 1e-06
    %v654 = vadd.f32 %v650, 1e-06
    %v655 = vrsqrt.pop %v651
    %v656 = vrsqrt.pop %v652
    %v657 = vrsqrt.pop %v653
    %v658 = vrsqrt.pop %v654
    %v659 = vmul.f32 %v198, %v655
    %v660 = vmul.f32 %v203, %v656
    %v661 = vmul.f32 %v208, %v657
    %v662 = vmul.f32 %v213, %v658
    %663 = vrot.lane.b32.xlu0 %v429, 32
    %v664 = vpop.permute.xlu0 %663
    %v666 = vmul.f32 %v659, %v664
    %v667 = vmul.f32 %v660, %v664
    %v668 = vmul.f32 %v661, %v664
    %v669 = vmul.f32 %v662, %v664
    %v670 = vsub.f32 0.0, %v666
    %v671 = vsub.f32 0.0, %v667
    %v672 = vsub.f32 0.0, %v668
    %v673 = vsub.f32 0.0, %v669
    %678 = vrot.lane.b32.xlu0 %v670, 88
    %v679 = vpop.permute.xlu0 %678
    %680 = vrot.lane.b32.xlu0 %v671, 88
    %v681 = vpop.permute.xlu0 %680
    %682 = vrot.lane.b32.xlu0 %v672, 88
    %v683 = vpop.permute.xlu0 %682
    %684 = vrot.lane.b32.xlu0 %v673, 88
    %v685 = vpop.permute.xlu0 %684
    %694 = vrot.lane.b32.xlu0 %v666, 104
    %v695 = vpop.permute.xlu0 %694
    %696 = vrot.lane.b32.xlu0 %v667, 104
    %v697 = vpop.permute.xlu0 %696
    %698 = vrot.lane.b32.xlu0 %v668, 104
    %v699 = vpop.permute.xlu0 %698
    %700 = vrot.lane.b32.xlu0 %v669, 104
    %v701 = vpop.permute.xlu0 %700
    %v706 = vsel %vm471, %v679, %v695
    %v707 = vsel %vm471, %v681, %v697
    %v708 = vsel %vm471, %v683, %v699
    %v709 = vsel %vm471, %v685, %v701
    %710 = vrot.lane.b32.xlu0 %v381, 32
    %v711 = vpop.permute.xlu0 %710
    %712 = vrot.lane.b32.xlu0 %v382, 32
    %v713 = vpop.permute.xlu0 %712
    %714 = vrot.lane.b32.xlu0 %v383, 32
    %v715 = vpop.permute.xlu0 %714
    %716 = vrot.lane.b32.xlu0 %v384, 32
    %v717 = vpop.permute.xlu0 %716
    %v722 = vmul.f32 %v666, %v711
    %v723 = vmul.f32 %v667, %v713
    %v724 = vmul.f32 %v668, %v715
    %v725 = vmul.f32 %v669, %v717
    %v726 = vmul.f32 %v706, %v385
    %v727 = vmul.f32 %v707, %v386
    %v728 = vmul.f32 %v708, %v387
    %v729 = vmul.f32 %v709, %v388
    %734 = vrot.lane.b32.xlu0 %v726, 32
    %v735 = vpop.permute.xlu0 %734
    %736 = vrot.lane.b32.xlu0 %v727, 32
    %v737 = vpop.permute.xlu0 %736
    %738 = vrot.lane.b32.xlu0 %v728, 32
    %v739 = vpop.permute.xlu0 %738
    %740 = vrot.lane.b32.xlu0 %v729, 32
    %v741 = vpop.permute.xlu0 %740
    %v746 = vadd.f32 %v722, %v735
    %v747 = vadd.f32 %v723, %v737
    %v748 = vadd.f32 %v724, %v739
    %v749 = vadd.f32 %v725, %v741
    %750 = vrot.lane.b32.xlu0 %v391, 80
    %v751 = vpop.permute.xlu0 %750
    %752 = vrot.lane.b32.xlu0 %v392, 80
    %v753 = vpop.permute.xlu0 %752
    %754 = vrot.lane.b32.xlu0 %v393, 80
    %v755 = vpop.permute.xlu0 %754
    %756 = vrot.lane.b32.xlu0 %v394, 80
    %v757 = vpop.permute.xlu0 %756
    %v762 = vsel %vm395, %v751, 0.0
    %763 = vadd.xlane.f32.xlu0 %v762
    %v764 = vpop.xlane.xlu0 %763
    %v765 = vsel %vm395, %v753, 0.0
    %766 = vadd.xlane.f32.xlu0 %v765
    %v767 = vpop.xlane.xlu0 %766
    %v768 = vsel %vm395, %v755, 0.0
    %769 = vadd.xlane.f32.xlu0 %v768
    %v770 = vpop.xlane.xlu0 %769
    %v771 = vsel %vm395, %v757, 0.0
    %772 = vadd.xlane.f32.xlu0 %v771
    %v773 = vpop.xlane.xlu0 %772
    %v774 = vmul.f32 %v764, %v408
    %v775 = vmul.f32 %v767, %v408
    %v776 = vmul.f32 %v770, %v408
    %v777 = vmul.f32 %v773, %v408
    %v778 = vadd.f32 %v774, 1e-06
    %v779 = vadd.f32 %v775, 1e-06
    %v780 = vadd.f32 %v776, 1e-06
    %v781 = vadd.f32 %v777, 1e-06
    %v782 = vrsqrt.pop %v778
    %v783 = vrsqrt.pop %v779
    %v784 = vrsqrt.pop %v780
    %v785 = vrsqrt.pop %v781
    %v786 = vmul.f32 %v198, %v782
    %v787 = vmul.f32 %v203, %v783
    %v788 = vmul.f32 %v208, %v784
    %v789 = vmul.f32 %v213, %v785
    %790 = vrot.lane.b32.xlu0 %v429, 48
    %v791 = vpop.permute.xlu0 %790
    %v793 = vmul.f32 %v786, %v791
    %v794 = vmul.f32 %v787, %v791
    %v795 = vmul.f32 %v788, %v791
    %v796 = vmul.f32 %v789, %v791
    %v797 = vsub.f32 0.0, %v793
    %v798 = vsub.f32 0.0, %v794
    %v799 = vsub.f32 0.0, %v795
    %v800 = vsub.f32 0.0, %v796
    %805 = vrot.lane.b32.xlu0 %v797, 72
    %v806 = vpop.permute.xlu0 %805
    %807 = vrot.lane.b32.xlu0 %v798, 72
    %v808 = vpop.permute.xlu0 %807
    %809 = vrot.lane.b32.xlu0 %v799, 72
    %v810 = vpop.permute.xlu0 %809
    %811 = vrot.lane.b32.xlu0 %v800, 72
    %v812 = vpop.permute.xlu0 %811
    %821 = vrot.lane.b32.xlu0 %v793, 88
    %v822 = vpop.permute.xlu0 %821
    %823 = vrot.lane.b32.xlu0 %v794, 88
    %v824 = vpop.permute.xlu0 %823
    %825 = vrot.lane.b32.xlu0 %v795, 88
    %v826 = vpop.permute.xlu0 %825
    %827 = vrot.lane.b32.xlu0 %v796, 88
    %v828 = vpop.permute.xlu0 %827
    %v833 = vsel %vm471, %v806, %v822
    %v834 = vsel %vm471, %v808, %v824
    %v835 = vsel %vm471, %v810, %v826
    %v836 = vsel %vm471, %v812, %v828
    %837 = vrot.lane.b32.xlu0 %v381, 48
    %v838 = vpop.permute.xlu0 %837
    %839 = vrot.lane.b32.xlu0 %v382, 48
    %v840 = vpop.permute.xlu0 %839
    %841 = vrot.lane.b32.xlu0 %v383, 48
    %v842 = vpop.permute.xlu0 %841
    %843 = vrot.lane.b32.xlu0 %v384, 48
    %v844 = vpop.permute.xlu0 %843
    %v849 = vmul.f32 %v793, %v838
    %v850 = vmul.f32 %v794, %v840
    %v851 = vmul.f32 %v795, %v842
    %v852 = vmul.f32 %v796, %v844
    %v853 = vmul.f32 %v833, %v385
    %v854 = vmul.f32 %v834, %v386
    %v855 = vmul.f32 %v835, %v387
    %v856 = vmul.f32 %v836, %v388
    %861 = vrot.lane.b32.xlu0 %v853, 48
    %v862 = vpop.permute.xlu0 %861
    %863 = vrot.lane.b32.xlu0 %v854, 48
    %v864 = vpop.permute.xlu0 %863
    %865 = vrot.lane.b32.xlu0 %v855, 48
    %v866 = vpop.permute.xlu0 %865
    %867 = vrot.lane.b32.xlu0 %v856, 48
    %v868 = vpop.permute.xlu0 %867
    %v873 = vadd.f32 %v849, %v862
    %v874 = vadd.f32 %v850, %v864
    %v875 = vadd.f32 %v851, %v866
    %v876 = vadd.f32 %v852, %v868
    %877 = vrot.lane.b32.xlu0 %v391, 64
    %v878 = vpop.permute.xlu0 %877
    %879 = vrot.lane.b32.xlu0 %v392, 64
    %v880 = vpop.permute.xlu0 %879
    %881 = vrot.lane.b32.xlu0 %v393, 64
    %v882 = vpop.permute.xlu0 %881
    %883 = vrot.lane.b32.xlu0 %v394, 64
    %v884 = vpop.permute.xlu0 %883
    %v889 = vsel %vm395, %v878, 0.0
    %890 = vadd.xlane.f32.xlu0 %v889
    %v891 = vpop.xlane.xlu0 %890
    %v892 = vsel %vm395, %v880, 0.0
    %893 = vadd.xlane.f32.xlu0 %v892
    %v894 = vpop.xlane.xlu0 %893
    %v895 = vsel %vm395, %v882, 0.0
    %896 = vadd.xlane.f32.xlu0 %v895
    %v897 = vpop.xlane.xlu0 %896
    %v898 = vsel %vm395, %v884, 0.0
    %899 = vadd.xlane.f32.xlu0 %v898
    %v900 = vpop.xlane.xlu0 %899
    %v901 = vmul.f32 %v891, %v408
    %v902 = vmul.f32 %v894, %v408
    %v903 = vmul.f32 %v897, %v408
    %v904 = vmul.f32 %v900, %v408
    %v905 = vadd.f32 %v901, 1e-06
    %v906 = vadd.f32 %v902, 1e-06
    %v907 = vadd.f32 %v903, 1e-06
    %v908 = vadd.f32 %v904, 1e-06
    %v909 = vrsqrt.pop %v905
    %v910 = vrsqrt.pop %v906
    %v911 = vrsqrt.pop %v907
    %v912 = vrsqrt.pop %v908
    %v913 = vmul.f32 %v198, %v909
    %v914 = vmul.f32 %v203, %v910
    %v915 = vmul.f32 %v208, %v911
    %v916 = vmul.f32 %v213, %v912
    %v918 = vlaneseq
    %v919 = vshrl.u32 %v918, 7
    %v920 = vsub.s32 0, %v919
    %v921 = vrot.slane %v390, %v920
    %922 = vrot.lane.b32.xlu0 %v921, 64
    %v923 = vpop.permute.xlu0 %922
    %v925 = vmul.f32 %v913, %v923
    %v926 = vmul.f32 %v914, %v923
    %v927 = vmul.f32 %v915, %v923
    %v928 = vmul.f32 %v916, %v923
    %v929 = vsub.f32 0.0, %v925
    %v930 = vsub.f32 0.0, %v926
    %v931 = vsub.f32 0.0, %v927
    %v932 = vsub.f32 0.0, %v928
    %937 = vrot.lane.b32.xlu0 %v929, 56
    %v938 = vpop.permute.xlu0 %937
    %939 = vrot.lane.b32.xlu0 %v930, 56
    %v940 = vpop.permute.xlu0 %939
    %941 = vrot.lane.b32.xlu0 %v931, 56
    %v942 = vpop.permute.xlu0 %941
    %943 = vrot.lane.b32.xlu0 %v932, 56
    %v944 = vpop.permute.xlu0 %943
    %953 = vrot.lane.b32.xlu0 %v925, 72
    %v954 = vpop.permute.xlu0 %953
    %955 = vrot.lane.b32.xlu0 %v926, 72
    %v956 = vpop.permute.xlu0 %955
    %957 = vrot.lane.b32.xlu0 %v927, 72
    %v958 = vpop.permute.xlu0 %957
    %959 = vrot.lane.b32.xlu0 %v928, 72
    %v960 = vpop.permute.xlu0 %959
    %v965 = vsel %vm471, %v938, %v954
    %v966 = vsel %vm471, %v940, %v956
    %v967 = vsel %vm471, %v942, %v958
    %v968 = vsel %vm471, %v944, %v960
    %969 = vrot.lane.b32.xlu0 %v381, 64
    %v970 = vpop.permute.xlu0 %969
    %971 = vrot.lane.b32.xlu0 %v382, 64
    %v972 = vpop.permute.xlu0 %971
    %973 = vrot.lane.b32.xlu0 %v383, 64
    %v974 = vpop.permute.xlu0 %973
    %975 = vrot.lane.b32.xlu0 %v384, 64
    %v976 = vpop.permute.xlu0 %975
    %v981 = vmul.f32 %v925, %v970
    %v982 = vmul.f32 %v926, %v972
    %v983 = vmul.f32 %v927, %v974
    %v984 = vmul.f32 %v928, %v976
    %v985 = vmul.f32 %v965, %v385
    %v986 = vmul.f32 %v966, %v386
    %v987 = vmul.f32 %v967, %v387
    %v988 = vmul.f32 %v968, %v388
    %993 = vrot.lane.b32.xlu0 %v985, 64
    %v994 = vpop.permute.xlu0 %993
    %995 = vrot.lane.b32.xlu0 %v986, 64
    %v996 = vpop.permute.xlu0 %995
    %997 = vrot.lane.b32.xlu0 %v987, 64
    %v998 = vpop.permute.xlu0 %997
    %999 = vrot.lane.b32.xlu0 %v988, 64
    %v1000 = vpop.permute.xlu0 %999
    %v1005 = vadd.f32 %v981, %v994
    %v1006 = vadd.f32 %v982, %v996
    %v1007 = vadd.f32 %v983, %v998
    %v1008 = vadd.f32 %v984, %v1000
    %1009 = vrot.lane.b32.xlu0 %v391, 48
    %v1010 = vpop.permute.xlu0 %1009
    %1011 = vrot.lane.b32.xlu0 %v392, 48
    %v1012 = vpop.permute.xlu0 %1011
    %1013 = vrot.lane.b32.xlu0 %v393, 48
    %v1014 = vpop.permute.xlu0 %1013
    %1015 = vrot.lane.b32.xlu0 %v394, 48
    %v1016 = vpop.permute.xlu0 %1015
    %v1021 = vsel %vm395, %v1010, 0.0
    %1022 = vadd.xlane.f32.xlu0 %v1021
    %v1023 = vpop.xlane.xlu0 %1022
    %v1024 = vsel %vm395, %v1012, 0.0
    %1025 = vadd.xlane.f32.xlu0 %v1024
    %v1026 = vpop.xlane.xlu0 %1025
    %v1027 = vsel %vm395, %v1014, 0.0
    %1028 = vadd.xlane.f32.xlu0 %v1027
    %v1029 = vpop.xlane.xlu0 %1028
    %v1030 = vsel %vm395, %v1016, 0.0
    %1031 = vadd.xlane.f32.xlu0 %v1030
    %v1032 = vpop.xlane.xlu0 %1031
    %v1033 = vmul.f32 %v1023, %v408
    %v1034 = vmul.f32 %v1026, %v408
    %v1035 = vmul.f32 %v1029, %v408
    %v1036 = vmul.f32 %v1032, %v408
    %v1037 = vadd.f32 %v1033, 1e-06
    %v1038 = vadd.f32 %v1034, 1e-06
    %v1039 = vadd.f32 %v1035, 1e-06
    %v1040 = vadd.f32 %v1036, 1e-06
    %v1041 = vrsqrt.pop %v1037
    %v1042 = vrsqrt.pop %v1038
    %v1043 = vrsqrt.pop %v1039
    %v1044 = vrsqrt.pop %v1040
    %v1045 = vmul.f32 %v198, %v1041
    %v1046 = vmul.f32 %v203, %v1042
    %v1047 = vmul.f32 %v208, %v1043
    %v1048 = vmul.f32 %v213, %v1044
    %1049 = vrot.lane.b32.xlu0 %v921, 80
    %v1050 = vpop.permute.xlu0 %1049
    %v1052 = vmul.f32 %v1045, %v1050
    %v1053 = vmul.f32 %v1046, %v1050
    %v1054 = vmul.f32 %v1047, %v1050
    %v1055 = vmul.f32 %v1048, %v1050
    %v1056 = vsub.f32 0.0, %v1052
    %v1057 = vsub.f32 0.0, %v1053
    %v1058 = vsub.f32 0.0, %v1054
    %v1059 = vsub.f32 0.0, %v1055
    %1064 = vrot.lane.b32.xlu0 %v1056, 40
    %v1065 = vpop.permute.xlu0 %1064
    %1066 = vrot.lane.b32.xlu0 %v1057, 40
    %v1067 = vpop.permute.xlu0 %1066
    %1068 = vrot.lane.b32.xlu0 %v1058, 40
    %v1069 = vpop.permute.xlu0 %1068
    %1070 = vrot.lane.b32.xlu0 %v1059, 40
    %v1071 = vpop.permute.xlu0 %1070
    %1080 = vrot.lane.b32.xlu0 %v1052, 56
    %v1081 = vpop.permute.xlu0 %1080
    %1082 = vrot.lane.b32.xlu0 %v1053, 56
    %v1083 = vpop.permute.xlu0 %1082
    %1084 = vrot.lane.b32.xlu0 %v1054, 56
    %v1085 = vpop.permute.xlu0 %1084
    %1086 = vrot.lane.b32.xlu0 %v1055, 56
    %v1087 = vpop.permute.xlu0 %1086
    %v1092 = vsel %vm471, %v1065, %v1081
    %v1093 = vsel %vm471, %v1067, %v1083
    %v1094 = vsel %vm471, %v1069, %v1085
    %v1095 = vsel %vm471, %v1071, %v1087
    %1096 = vrot.lane.b32.xlu0 %v381, 80
    %v1097 = vpop.permute.xlu0 %1096
    %1098 = vrot.lane.b32.xlu0 %v382, 80
    %v1099 = vpop.permute.xlu0 %1098
    %1100 = vrot.lane.b32.xlu0 %v383, 80
    %v1101 = vpop.permute.xlu0 %1100
    %1102 = vrot.lane.b32.xlu0 %v384, 80
    %v1103 = vpop.permute.xlu0 %1102
    %v1108 = vmul.f32 %v1052, %v1097
    %v1109 = vmul.f32 %v1053, %v1099
    %v1110 = vmul.f32 %v1054, %v1101
    %v1111 = vmul.f32 %v1055, %v1103
    %v1112 = vmul.f32 %v1092, %v385
    %v1113 = vmul.f32 %v1093, %v386
    %v1114 = vmul.f32 %v1094, %v387
    %v1115 = vmul.f32 %v1095, %v388
    %1120 = vrot.lane.b32.xlu0 %v1112, 80
    %v1121 = vpop.permute.xlu0 %1120
    %1122 = vrot.lane.b32.xlu0 %v1113, 80
    %v1123 = vpop.permute.xlu0 %1122
    %1124 = vrot.lane.b32.xlu0 %v1114, 80
    %v1125 = vpop.permute.xlu0 %1124
    %1126 = vrot.lane.b32.xlu0 %v1115, 80
    %v1127 = vpop.permute.xlu0 %1126
    %v1132 = vadd.f32 %v1108, %v1121
    %v1133 = vadd.f32 %v1109, %v1123
    %v1134 = vadd.f32 %v1110, %v1125
    %v1135 = vadd.f32 %v1111, %v1127
    %v1136 = vld [vmem:[#allocation10] sm:$0xff]
    %v1137 = vld [vmem:[#allocation10 + $0x8] sm:$0xff]
    %v1138 = vld [vmem:[#allocation10 + $0x10] sm:$0xff]
    %v1139 = vld [vmem:[#allocation10 + $0x18] sm:$0xff]
    %1142 = vrot.lane.b32.xlu0 %v619, 112
    %v1143 = vpop.permute.xlu0 %1142
    %1144 = vrot.lane.b32.xlu0 %v620, 112
    %v1145 = vpop.permute.xlu0 %1144
    %v1148 = vsel %vm395, %v484, 1.0
    %v1149 = vsel %vm395, %v485, 1.0
    %v1150 = vsel %vm395, %v1143, 1.0
    %v1151 = vsel %vm395, %v1145, 1.0
    %v1152 = vmul.f32 %v374, 4.0
    %v1153 = vmul.f32 %v376, 4.0
    %1156 = vrot.lane.b32.xlu0 %v1005, 64
    %v1157 = vpop.permute.xlu0 %1156
    %1158 = vrot.lane.b32.xlu0 %v1006, 64
    %v1159 = vpop.permute.xlu0 %1158
    %1164 = vrot.lane.b32.xlu0 %v1152, 16
    %v1165 = vpop.permute.xlu0 %1164
    %1166 = vrot.lane.b32.xlu0 %v1153, 16
    %v1167 = vpop.permute.xlu0 %1166
    %v1170 = vsel %vm395, %v1157, %v1165
    %v1171 = vsel %vm395, %v1159, %v1167
    %vm1172 = vcmask 138240
    %v1174 = vsel %vm1172, %v1148, 0
    %v1177 = vsel %vm1172, %v1149, 0
    %v1180 = vsel %vm1172, %v1150, 0
    %v1183 = vsel %vm1172, %v1151, 0
    %v1186 = vsel %vm1172, %v1170, 0
    %v1189 = vsel %vm1172, %v1171, 0
    %1191 = vmatprep.subr.mxu0 0.0
    %1192 = vmatpush1.xpose.msra.mxu0 0.0
    %1193 = vmatprep.subr.mxu0 0.0
    %1194 = vmatpush1.xpose.msra.mxu0 0.0
    %1195 = vmatprep.subr.mxu0 0.0
    %1196 = vmatpush1.xpose.msra.mxu0 0.0
    %1197 = vmatprep.subr.mxu0 0.0
    %1198 = vmatpush1.xpose.msra.mxu0 0.0
    %1199 = vmatprep.subr.mxu0 0.0
    %1200 = vmatpush1.xpose.msra.mxu0 0.0
    %1201 = vmatprep.subr.mxu0 0.0
    %1202 = vmatpush1.xpose.msra.mxu0 0.0
    %1203 = vmatprep.subr.mxu0 0.0
    %1204 = vmatpush1.xpose.msra.mxu0 0.0
    %1205 = vmatprep.subr.mxu0 0.0
    %1206 = vmatpush1.xpose.msra.mxu0 0.0
    %1207 = vmatprep.subr.mxu0 0.0
    %1208 = vmatpush1.xpose.msra.mxu0 0.0
    %1209 = vmatprep.subr.mxu0 0.0
    %1210 = vmatpush1.xpose.msra.mxu0 0.0
    %1211 = vmatprep.subr.mxu0 0.0
    %1212 = vmatpush1.xpose.msra.mxu0 0.0
    %1213 = vmatprep.subr.mxu0 0.0
    %1214 = vmatpush1.xpose.msra.mxu0 0.0
    %1215 = vmatprep.subr.mxu0 0.0
    %1216 = vmatpush1.xpose.msra.mxu0 0.0
    %1217 = vmatprep.subr.mxu0 0.0
    %1218 = vmatpush1.xpose.msra.mxu0 0.0
    %1219 = vmatprep.subr.mxu0 0.0
    %1220 = vmatpush1.xpose.msra.mxu0 %v1189
    %1221 = vmatprep.subr.mxu0 0.0
    %1222 = vmatpush1.xpose.msra.mxu0 %v1186
    %1223 = vmatprep.subr.mxu0 0.0
    %1224 = vmatpush2.xpose.msra.mxu0 0.0
    %1225 = vmatprep.subr.mxu0 0.0
    %1226 = vmatpush2.xpose.msra.mxu0 0.0
    %1227 = vmatprep.subr.mxu0 0.0
    %1228 = vmatpush2.xpose.msra.mxu0 0.0
    %1229 = vmatprep.subr.mxu0 0.0
    %1230 = vmatpush2.xpose.msra.mxu0 0.0
    %1231 = vmatprep.subr.mxu0 0.0
    %1232 = vmatpush2.xpose.msra.mxu0 0.0
    %1233 = vmatprep.subr.mxu0 0.0
    %1234 = vmatpush2.xpose.msra.mxu0 0.0
    %1235 = vmatprep.subr.mxu0 0.0
    %1236 = vmatpush2.xpose.msra.mxu0 0.0
    %1237 = vmatprep.subr.mxu0 0.0
    %1238 = vmatpush2.xpose.msra.mxu0 0.0
    %1239 = vmatprep.subr.mxu0 0.0
    %1240 = vmatpush2.xpose.msra.mxu0 0.0
    %1241 = vmatprep.subr.mxu0 0.0
    %1242 = vmatpush2.xpose.msra.mxu0 0.0
    %1243 = vmatprep.subr.mxu0 0.0
    %1244 = vmatpush2.xpose.msra.mxu0 0.0
    %1245 = vmatprep.subr.mxu0 0.0
    %1246 = vmatpush2.xpose.msra.mxu0 0.0
    %1247 = vmatprep.subr.mxu0 0.0
    %1248 = vmatpush2.xpose.msra.mxu0 0.0
    %1249 = vmatprep.subr.mxu0 0.0
    %1250 = vmatpush2.xpose.msra.mxu0 0.0
    %1251 = vmatprep.subr.mxu0 0.0
    %1252 = vmatpush2.xpose.msra.mxu0 0.0
    %1253 = vmatprep.subr.mxu0 0.0
    %1254 = vmatpush2.xpose.msra.mxu0 0.0
    %1255 = vmatprep.mubr.f32.mxu0 0.0
    %1256 = vmatmul.mubr.f32.gmra.mxu0 %v1174
    %v1257 = vpop.f32.mrf.mxu0
    %v1258 = vadd.f32 0.0, %v1257
    %v1259 = vpop.f32.mrf.mxu0
    %1260 = vmatprep.mubr.f32.mxu0 0.0
    %1261 = vmatmul.mubr.f32.gmra.mxu0 %v1177
    %v1262 = vpop.f32.mrf.mxu0
    %v1263 = vadd.f32 0.0, %v1262
    %v1264 = vpop.f32.mrf.mxu0
    %1265 = vmatprep.mubr.f32.mxu0 0.0
    %1266 = vmatmul.mubr.f32.gmra.mxu0 %v1180
    %v1267 = vpop.f32.mrf.mxu0
    %v1268 = vadd.f32 0.0, %v1267
    %v1269 = vpop.f32.mrf.mxu0
    %1270 = vmatprep.mubr.f32.mxu0 0.0
    %1271 = vmatmul.mubr.f32.gmra.mxu0 %v1183
    %v1272 = vpop.f32.mrf.mxu0
    %v1273 = vadd.f32 0.0, %v1272
    %v1274 = vpop.f32.mrf.mxu0
    %1275 = vdwg.mxu0
    %v1276 = vmul.f32 %v1258, 0.25
    %v1277 = vmul.f32 %v1263, 0.25
    %v1278 = vmul.f32 %v1268, 0.25
    %v1279 = vmul.f32 %v1273, 0.25
    %vm1280 = vcmp.ne.f32.partialorder %v1136, 0.0
    %vm1281 = vcmp.ne.f32.partialorder %v1137, 0.0
    %v1282 = vsel %vm1280, -3.4028235e+38, %v1276
    %v1283 = vsel %vm1281, -3.4028235e+38, %v1277
    %v1284 = vsel %vm1280, -3.4028235e+38, %v1278
    %v1285 = vsel %vm1281, -3.4028235e+38, %v1279
    %v1286 = vsel %vm395, %v1282, -inf
    %1287 = vmax.xlane.f32.xlu0 %v1286
    %v1288 = vpop.xlane.xlu0 %1287
    %v1289 = vsel %vm395, %v1283, -inf
    %1290 = vmax.xlane.f32.xlu0 %v1289
    %v1291 = vpop.xlane.xlu0 %1290
    %v1292 = vsel %vm395, %v1284, -inf
    %1293 = vmax.xlane.f32.xlu0 %v1292
    %v1294 = vpop.xlane.xlu0 %1293
    %v1295 = vsel %vm395, %v1285, -inf
    %1296 = vmax.xlane.f32.xlu0 %v1295
    %v1297 = vpop.xlane.xlu0 %1296
    %v1298 = vsub.f32 %v1282, %v1288
    %v1299 = vsub.f32 %v1283, %v1291
    %v1300 = vsub.f32 %v1284, %v1294
    %v1301 = vsub.f32 %v1285, %v1297
    %v1302 = vmul.f32 %v1298, 1.442695
    %v1303 = vpow.pop %v1302
    %v1304 = vmul.f32 %v1299, 1.442695
    %v1305 = vpow.pop %v1304
    %v1306 = vmul.f32 %v1300, 1.442695
    %v1307 = vpow.pop %v1306
    %v1308 = vmul.f32 %v1301, 1.442695
    %v1309 = vpow.pop %v1308
    %v1310 = vsel %vm395, %v1303, 0.0
    %1311 = vadd.xlane.f32.xlu0 %v1310
    %v1312 = vpop.xlane.xlu0 %1311
    %v1313 = vsel %vm395, %v1305, 0.0
    %1314 = vadd.xlane.f32.xlu0 %v1313
    %v1315 = vpop.xlane.xlu0 %1314
    %v1316 = vsel %vm395, %v1307, 0.0
    %1317 = vadd.xlane.f32.xlu0 %v1316
    %v1318 = vpop.xlane.xlu0 %1317
    %v1319 = vsel %vm395, %v1309, 0.0
    %1320 = vadd.xlane.f32.xlu0 %v1319
    %v1321 = vpop.xlane.xlu0 %1320
    %v1322 = vrcp.pop %v1312
    %v1323 = vmul.f32 %v1303, %v1322
    %v1324 = vrcp.pop %v1315
    %v1325 = vmul.f32 %v1305, %v1324
    %v1326 = vrcp.pop %v1318
    %v1327 = vmul.f32 %v1307, %v1326
    %v1328 = vrcp.pop %v1321
    %v1329 = vmul.f32 %v1309, %v1328
    %v1333 = vsel %vm395, %v1323, 0
    %v1336 = vsel %vm395, %v1325, 0
    %v1339 = vsel %vm395, %v1327, 0
    %v1342 = vsel %vm395, %v1329, 0
    %1344 = vmatprep.subr.mxu0 0.0
    %1345 = vmatpush1.msra.mxu0 0.0
    %1346 = vmatprep.subr.mxu0 0.0
    %1347 = vmatpush1.msra.mxu0 0.0
    %1348 = vmatprep.subr.mxu0 0.0
    %1349 = vmatpush1.msra.mxu0 0.0
    %1350 = vmatprep.subr.mxu0 0.0
    %1351 = vmatpush1.msra.mxu0 0.0
    %1352 = vmatprep.subr.mxu0 0.0
    %1353 = vmatpush1.msra.mxu0 0.0
    %1354 = vmatprep.subr.mxu0 0.0
    %1355 = vmatpush1.msra.mxu0 0.0
    %1356 = vmatprep.subr.mxu0 0.0
    %1357 = vmatpush1.msra.mxu0 0.0
    %1358 = vmatprep.subr.mxu0 0.0
    %1359 = vmatpush1.msra.mxu0 0.0
    %1360 = vmatprep.subr.mxu0 0.0
    %1361 = vmatpush1.msra.mxu0 0.0
    %1362 = vmatprep.subr.mxu0 0.0
    %1363 = vmatpush1.msra.mxu0 0.0
    %1364 = vmatprep.subr.mxu0 0.0
    %1365 = vmatpush1.msra.mxu0 0.0
    %1366 = vmatprep.subr.mxu0 0.0
    %1367 = vmatpush1.msra.mxu0 0.0
    %1368 = vmatprep.subr.mxu0 0.0
    %1369 = vmatpush1.msra.mxu0 0.0
    %1370 = vmatprep.subr.mxu0 0.0
    %1371 = vmatpush1.msra.mxu0 0.0
    %1372 = vmatprep.subr.mxu0 0.0
    %1373 = vmatpush1.msra.mxu0 %v227
    %1374 = vmatprep.subr.mxu0 0.0
    %1375 = vmatpush1.msra.mxu0 %v225
    %1376 = vmatprep.subr.mxu0 0.0
    %1377 = vmatpush2.msra.mxu0 0.0
    %1378 = vmatprep.subr.mxu0 0.0
    %1379 = vmatpush2.msra.mxu0 0.0
    %1380 = vmatprep.subr.mxu0 0.0
    %1381 = vmatpush2.msra.mxu0 0.0
    %1382 = vmatprep.subr.mxu0 0.0
    %1383 = vmatpush2.msra.mxu0 0.0
    %1384 = vmatprep.subr.mxu0 0.0
    %1385 = vmatpush2.msra.mxu0 0.0
    %1386 = vmatprep.subr.mxu0 0.0
    %1387 = vmatpush2.msra.mxu0 0.0
    %1388 = vmatprep.subr.mxu0 0.0
    %1389 = vmatpush2.msra.mxu0 0.0
    %1390 = vmatprep.subr.mxu0 0.0
    %1391 = vmatpush2.msra.mxu0 0.0
    %1392 = vmatprep.subr.mxu0 0.0
    %1393 = vmatpush2.msra.mxu0 0.0
    %1394 = vmatprep.subr.mxu0 0.0
    %1395 = vmatpush2.msra.mxu0 0.0
    %1396 = vmatprep.subr.mxu0 0.0
    %1397 = vmatpush2.msra.mxu0 0.0
    %1398 = vmatprep.subr.mxu0 0.0
    %1399 = vmatpush2.msra.mxu0 0.0
    %1400 = vmatprep.subr.mxu0 0.0
    %1401 = vmatpush2.msra.mxu0 0.0
    %1402 = vmatprep.subr.mxu0 0.0
    %1403 = vmatpush2.msra.mxu0 0.0
    %1404 = vmatprep.subr.mxu0 0.0
    %1405 = vmatpush2.msra.mxu0 0.0
    %1406 = vmatprep.subr.mxu0 0.0
    %1407 = vmatpush2.msra.mxu0 0.0
    %1408 = vmatprep.mubr.f32.mxu0 0.0
    %1409 = vmatmul.mubr.f32.gmra.mxu0 %v1333
    %v1410 = vpop.f32.mrf.mxu0
    %v1411 = vadd.f32 0.0, %v1410
    %v1412 = vpop.f32.mrf.mxu0
    %1413 = vmatprep.mubr.f32.mxu0 0.0
    %1414 = vmatmul.mubr.f32.gmra.mxu0 %v1336
    %v1415 = vpop.f32.mrf.mxu0
    %v1416 = vadd.f32 0.0, %v1415
    %v1417 = vpop.f32.mrf.mxu0
    %1418 = vmatprep.mubr.f32.mxu0 0.0
    %1419 = vmatmul.mubr.f32.gmra.mxu0 %v1339
    %v1420 = vpop.f32.mrf.mxu0
    %v1421 = vadd.f32 0.0, %v1420
    %v1422 = vpop.f32.mrf.mxu0
    %1423 = vmatprep.mubr.f32.mxu0 0.0
    %1424 = vmatmul.mubr.f32.gmra.mxu0 %v1342
    %v1425 = vpop.f32.mrf.mxu0
    %v1426 = vadd.f32 0.0, %v1425
    %v1427 = vpop.f32.mrf.mxu0
    %1428 = vdwg.mxu0
    %v1429 = vrot.slane %v1323, 1
    %1430 = vrot.lane.b32.xlu0 %v1429, 16
    %v1431 = vpop.permute.xlu0 %1430
    %v1433 = vrot.slane %v1323, 2
    %1434 = vrot.lane.b32.xlu0 %v1433, 32
    %v1435 = vpop.permute.xlu0 %1434
    %v1437 = vrot.slane %v1323, 3
    %1438 = vrot.lane.b32.xlu0 %v1437, 48
    %v1439 = vpop.permute.xlu0 %1438
    %v1441 = vrot.slane %v1323, 4
    %1442 = vrot.lane.b32.xlu0 %v1441, 64
    %v1443 = vpop.permute.xlu0 %1442
    %v1445 = vrot.slane %v1323, 5
    %1446 = vrot.lane.b32.xlu0 %v1445, 80
    %v1447 = vpop.permute.xlu0 %1446
    %v1449 = vrot.slane %v1323, 6
    %1450 = vrot.lane.b32.xlu0 %v1449, 96
    %v1451 = vpop.permute.xlu0 %1450
    %v1453 = vrot.slane %v1323, 7
    %1454 = vrot.lane.b32.xlu0 %v1453, 112
    %v1455 = vpop.permute.xlu0 %1454
    %v1457 = vrot.slane %v1325, 1
    %1458 = vrot.lane.b32.xlu0 %v1457, 16
    %v1459 = vpop.permute.xlu0 %1458
    %v1461 = vrot.slane %v1325, 2
    %1462 = vrot.lane.b32.xlu0 %v1461, 32
    %v1463 = vpop.permute.xlu0 %1462
    %v1465 = vrot.slane %v1325, 3
    %1466 = vrot.lane.b32.xlu0 %v1465, 48
    %v1467 = vpop.permute.xlu0 %1466
    %v1469 = vrot.slane %v1325, 4
    %1470 = vrot.lane.b32.xlu0 %v1469, 64
    %v1471 = vpop.permute.xlu0 %1470
    %v1473 = vrot.slane %v1325, 5
    %1474 = vrot.lane.b32.xlu0 %v1473, 80
    %v1475 = vpop.permute.xlu0 %1474
    %v1477 = vrot.slane %v1325, 6
    %1478 = vrot.lane.b32.xlu0 %v1477, 96
    %v1479 = vpop.permute.xlu0 %1478
    %v1481 = vrot.slane %v1325, 7
    %1482 = vrot.lane.b32.xlu0 %v1481, 112
    %v1483 = vpop.permute.xlu0 %1482
    %v1485 = vsel %vm395, %v1323, %v1431
    %v1486 = vsel %vm232, %v1485, %v1435
    %vm1487 = vcmask 392192
    %v1488 = vsel %vm1487, %v1486, %v1439
    %v1489 = vsel %vm118, %v1488, %v1443
    %vm1490 = vcmask 654336
    %v1491 = vsel %vm1490, %v1489, %v1447
    %vm1492 = vcmask 785408
    %v1493 = vsel %vm1492, %v1491, %v1451
    %vm1494 = vcmask 916480
    %v1495 = vsel %vm1494, %v1493, %v1455
    %v1496 = vsel %vm395, %v1325, %v1459
    %v1497 = vsel %vm232, %v1496, %v1463
    %v1498 = vsel %vm1487, %v1497, %v1467
    %v1499 = vsel %vm118, %v1498, %v1471
    %v1500 = vsel %vm1490, %v1499, %v1475
    %v1501 = vsel %vm1492, %v1500, %v1479
    %v1502 = vsel %vm1494, %v1501, %v1483
    %v1503 = vrot.slane %v1327, 1
    %1504 = vrot.lane.b32.xlu0 %v1503, 16
    %v1505 = vpop.permute.xlu0 %1504
    %v1507 = vrot.slane %v1327, 2
    %1508 = vrot.lane.b32.xlu0 %v1507, 32
    %v1509 = vpop.permute.xlu0 %1508
    %v1511 = vrot.slane %v1327, 3
    %1512 = vrot.lane.b32.xlu0 %v1511, 48
    %v1513 = vpop.permute.xlu0 %1512
    %v1515 = vrot.slane %v1327, 4
    %1516 = vrot.lane.b32.xlu0 %v1515, 64
    %v1517 = vpop.permute.xlu0 %1516
    %v1519 = vrot.slane %v1327, 5
    %1520 = vrot.lane.b32.xlu0 %v1519, 80
    %v1521 = vpop.permute.xlu0 %1520
    %v1523 = vrot.slane %v1327, 6
    %1524 = vrot.lane.b32.xlu0 %v1523, 96
    %v1525 = vpop.permute.xlu0 %1524
    %v1527 = vrot.slane %v1327, 7
    %1528 = vrot.lane.b32.xlu0 %v1527, 112
    %v1529 = vpop.permute.xlu0 %1528
    %v1531 = vrot.slane %v1329, 1
    %1532 = vrot.lane.b32.xlu0 %v1531, 16
    %v1533 = vpop.permute.xlu0 %1532
    %v1535 = vrot.slane %v1329, 2
    %1536 = vrot.lane.b32.xlu0 %v1535, 32
    %v1537 = vpop.permute.xlu0 %1536
    %v1539 = vrot.slane %v1329, 3
    %1540 = vrot.lane.b32.xlu0 %v1539, 48
    %v1541 = vpop.permute.xlu0 %1540
    %v1543 = vrot.slane %v1329, 4
    %1544 = vrot.lane.b32.xlu0 %v1543, 64
    %v1545 = vpop.permute.xlu0 %1544
    %v1547 = vrot.slane %v1329, 5
    %1548 = vrot.lane.b32.xlu0 %v1547, 80
    %v1549 = vpop.permute.xlu0 %1548
    %v1551 = vrot.slane %v1329, 6
    %1552 = vrot.lane.b32.xlu0 %v1551, 96
    %v1553 = vpop.permute.xlu0 %1552
    %v1555 = vrot.slane %v1329, 7
    %1556 = vrot.lane.b32.xlu0 %v1555, 112
    %v1557 = vpop.permute.xlu0 %1556
    %v1559 = vsel %vm395, %v1327, %v1505
    %v1560 = vsel %vm232, %v1559, %v1509
    %v1561 = vsel %vm1487, %v1560, %v1513
    %v1562 = vsel %vm118, %v1561, %v1517
    %v1563 = vsel %vm1490, %v1562, %v1521
    %v1564 = vsel %vm1492, %v1563, %v1525
    %v1565 = vsel %vm1494, %v1564, %v1529
    %v1566 = vsel %vm395, %v1329, %v1533
    %v1567 = vsel %vm232, %v1566, %v1537
    %v1568 = vsel %vm1487, %v1567, %v1541
    %v1569 = vsel %vm118, %v1568, %v1545
    %v1570 = vsel %vm1490, %v1569, %v1549
    %v1571 = vsel %vm1492, %v1570, %v1553
    %v1572 = vsel %vm1494, %v1571, %v1557
    %1575 = vrot.lane.b32.xlu0 %v873, 112
    %v1576 = vpop.permute.xlu0 %1575
    %1577 = vrot.lane.b32.xlu0 %v874, 112
    %v1578 = vpop.permute.xlu0 %1577
    %1581 = vrot.lane.b32.xlu0 %v746, 96
    %v1582 = vpop.permute.xlu0 %1581
    %1583 = vrot.lane.b32.xlu0 %v747, 96
    %v1584 = vpop.permute.xlu0 %1583
    %1585 = vrot.lane.b32.xlu0 %v1576, 96
    %v1586 = vpop.permute.xlu0 %1585
    %1587 = vrot.lane.b32.xlu0 %v1578, 96
    %v1588 = vpop.permute.xlu0 %1587
    %v1593 = vsel %vm395, %v1582, 1.0
    %v1594 = vsel %vm395, %v1584, 1.0
    %v1595 = vsel %vm395, %v1586, 1.0
    %v1596 = vsel %vm395, %v1588, 1.0
    %1599 = vrot.lane.b32.xlu0 %v1132, 48
    %v1600 = vpop.permute.xlu0 %1599
    %1601 = vrot.lane.b32.xlu0 %v1133, 48
    %v1602 = vpop.permute.xlu0 %1601
    %1605 = vrot.lane.b32.xlu0 %v1152, 15
    %v1606 = vpop.permute.xlu0 %1605
    %1607 = vrot.lane.b32.xlu0 %v1153, 15
    %v1608 = vpop.permute.xlu0 %1607
    %v1611 = vsel %vm395, %v1600, %v1606
    %v1612 = vsel %vm395, %v1602, %v1608
    %v1614 = vsel %vm1172, %v1593, 0
    %v1617 = vsel %vm1172, %v1594, 0
    %v1620 = vsel %vm1172, %v1595, 0
    %v1623 = vsel %vm1172, %v1596, 0
    %v1626 = vsel %vm1172, %v1611, 0
    %v1629 = vsel %vm1172, %v1612, 0
    %1631 = vmatprep.subr.mxu0 0.0
    %1632 = vmatpush1.xpose.msra.mxu0 0.0
    %1633 = vmatprep.subr.mxu0 0.0
    %1634 = vmatpush1.xpose.msra.mxu0 0.0
    %1635 = vmatprep.subr.mxu0 0.0
    %1636 = vmatpush1.xpose.msra.mxu0 0.0
    %1637 = vmatprep.subr.mxu0 0.0
    %1638 = vmatpush1.xpose.msra.mxu0 0.0
    %1639 = vmatprep.subr.mxu0 0.0
    %1640 = vmatpush1.xpose.msra.mxu0 0.0
    %1641 = vmatprep.subr.mxu0 0.0
    %1642 = vmatpush1.xpose.msra.mxu0 0.0
    %1643 = vmatprep.subr.mxu0 0.0
    %1644 = vmatpush1.xpose.msra.mxu0 0.0
    %1645 = vmatprep.subr.mxu0 0.0
    %1646 = vmatpush1.xpose.msra.mxu0 0.0
    %1647 = vmatprep.subr.mxu0 0.0
    %1648 = vmatpush1.xpose.msra.mxu0 0.0
    %1649 = vmatprep.subr.mxu0 0.0
    %1650 = vmatpush1.xpose.msra.mxu0 0.0
    %1651 = vmatprep.subr.mxu0 0.0
    %1652 = vmatpush1.xpose.msra.mxu0 0.0
    %1653 = vmatprep.subr.mxu0 0.0
    %1654 = vmatpush1.xpose.msra.mxu0 0.0
    %1655 = vmatprep.subr.mxu0 0.0
    %1656 = vmatpush1.xpose.msra.mxu0 0.0
    %1657 = vmatprep.subr.mxu0 0.0
    %1658 = vmatpush1.xpose.msra.mxu0 0.0
    %1659 = vmatprep.subr.mxu0 0.0
    %1660 = vmatpush1.xpose.msra.mxu0 %v1629
    %1661 = vmatprep.subr.mxu0 0.0
    %1662 = vmatpush1.xpose.msra.mxu0 %v1626
    %1663 = vmatprep.subr.mxu0 0.0
    %1664 = vmatpush2.xpose.msra.mxu0 0.0
    %1665 = vmatprep.subr.mxu0 0.0
    %1666 = vmatpush2.xpose.msra.mxu0 0.0
    %1667 = vmatprep.subr.mxu0 0.0
    %1668 = vmatpush2.xpose.msra.mxu0 0.0
    %1669 = vmatprep.subr.mxu0 0.0
    %1670 = vmatpush2.xpose.msra.mxu0 0.0
    %1671 = vmatprep.subr.mxu0 0.0
    %1672 = vmatpush2.xpose.msra.mxu0 0.0
    %1673 = vmatprep.subr.mxu0 0.0
    %1674 = vmatpush2.xpose.msra.mxu0 0.0
    %1675 = vmatprep.subr.mxu0 0.0
    %1676 = vmatpush2.xpose.msra.mxu0 0.0
    %1677 = vmatprep.subr.mxu0 0.0
    %1678 = vmatpush2.xpose.msra.mxu0 0.0
    %1679 = vmatprep.subr.mxu0 0.0
    %1680 = vmatpush2.xpose.msra.mxu0 0.0
    %1681 = vmatprep.subr.mxu0 0.0
    %1682 = vmatpush2.xpose.msra.mxu0 0.0
    %1683 = vmatprep.subr.mxu0 0.0
    %1684 = vmatpush2.xpose.msra.mxu0 0.0
    %1685 = vmatprep.subr.mxu0 0.0
    %1686 = vmatpush2.xpose.msra.mxu0 0.0
    %1687 = vmatprep.subr.mxu0 0.0
    %1688 = vmatpush2.xpose.msra.mxu0 0.0
    %1689 = vmatprep.subr.mxu0 0.0
    %1690 = vmatpush2.xpose.msra.mxu0 0.0
    %1691 = vmatprep.subr.mxu0 0.0
    %1692 = vmatpush2.xpose.msra.mxu0 0.0
    %1693 = vmatprep.subr.mxu0 0.0
    %1694 = vmatpush2.xpose.msra.mxu0 0.0
    %1695 = vmatprep.mubr.f32.mxu0 0.0
    %1696 = vmatmul.mubr.f32.gmra.mxu0 %v1614
    %v1697 = vpop.f32.mrf.mxu0
    %v1698 = vadd.f32 0.0, %v1697
    %v1699 = vpop.f32.mrf.mxu0
    %1700 = vmatprep.mubr.f32.mxu0 0.0
    %1701 = vmatmul.mubr.f32.gmra.mxu0 %v1617
    %v1702 = vpop.f32.mrf.mxu0
    %v1703 = vadd.f32 0.0, %v1702
    %v1704 = vpop.f32.mrf.mxu0
    %1705 = vmatprep.mubr.f32.mxu0 0.0
    %1706 = vmatmul.mubr.f32.gmra.mxu0 %v1620
    %v1707 = vpop.f32.mrf.mxu0
    %v1708 = vadd.f32 0.0, %v1707
    %v1709 = vpop.f32.mrf.mxu0
    %1710 = vmatprep.mubr.f32.mxu0 0.0
    %1711 = vmatmul.mubr.f32.gmra.mxu0 %v1623
    %v1712 = vpop.f32.mrf.mxu0
    %v1713 = vadd.f32 0.0, %v1712
    %v1714 = vpop.f32.mrf.mxu0
    %1715 = vdwg.mxu0
    %v1716 = vmul.f32 %v1698, 0.25
    %v1717 = vmul.f32 %v1703, 0.25
    %v1718 = vmul.f32 %v1708, 0.25
    %v1719 = vmul.f32 %v1713, 0.25
    %v1720 = vsel %vm1280, -3.4028235e+38, %v1716
    %v1721 = vsel %vm1281, -3.4028235e+38, %v1717
    %v1722 = vsel %vm1280, -3.4028235e+38, %v1718
    %v1723 = vsel %vm1281, -3.4028235e+38, %v1719
    %v1724 = vsel %vm395, %v1720, -inf
    %1725 = vmax.xlane.f32.xlu0 %v1724
    %v1726 = vpop.xlane.xlu0 %1725
    %v1727 = vsel %vm395, %v1721, -inf
    %1728 = vmax.xlane.f32.xlu0 %v1727
    %v1729 = vpop.xlane.xlu0 %1728
    %v1730 = vsel %vm395, %v1722, -inf
    %1731 = vmax.xlane.f32.xlu0 %v1730
    %v1732 = vpop.xlane.xlu0 %1731
    %v1733 = vsel %vm395, %v1723, -inf
    %1734 = vmax.xlane.f32.xlu0 %v1733
    %v1735 = vpop.xlane.xlu0 %1734
    %v1736 = vsub.f32 %v1720, %v1726
    %v1737 = vsub.f32 %v1721, %v1729
    %v1738 = vsub.f32 %v1722, %v1732
    %v1739 = vsub.f32 %v1723, %v1735
    %v1740 = vmul.f32 %v1736, 1.442695
    %v1741 = vpow.pop %v1740
    %v1742 = vmul.f32 %v1737, 1.442695
    %v1743 = vpow.pop %v1742
    %v1744 = vmul.f32 %v1738, 1.442695
    %v1745 = vpow.pop %v1744
    %v1746 = vmul.f32 %v1739, 1.442695
    %v1747 = vpow.pop %v1746
    %v1748 = vsel %vm395, %v1741, 0.0
    %1749 = vadd.xlane.f32.xlu0 %v1748
    %v1750 = vpop.xlane.xlu0 %1749
    %v1751 = vsel %vm395, %v1743, 0.0
    %1752 = vadd.xlane.f32.xlu0 %v1751
    %v1753 = vpop.xlane.xlu0 %1752
    %v1754 = vsel %vm395, %v1745, 0.0
    %1755 = vadd.xlane.f32.xlu0 %v1754
    %v1756 = vpop.xlane.xlu0 %1755
    %v1757 = vsel %vm395, %v1747, 0.0
    %1758 = vadd.xlane.f32.xlu0 %v1757
    %v1759 = vpop.xlane.xlu0 %1758
    %v1760 = vrcp.pop %v1750
    %v1761 = vmul.f32 %v1741, %v1760
    %v1762 = vrcp.pop %v1753
    %v1763 = vmul.f32 %v1743, %v1762
    %v1764 = vrcp.pop %v1756
    %v1765 = vmul.f32 %v1745, %v1764
    %v1766 = vrcp.pop %v1759
    %v1767 = vmul.f32 %v1747, %v1766
    %1768 = vrot.lane.b32.xlu0 %v198, 16
    %v1769 = vpop.permute.xlu0 %1768
    %1770 = vrot.lane.b32.xlu0 %v203, 16
    %v1771 = vpop.permute.xlu0 %1770
    %v1775 = vsel %vm395, %v1761, 0
    %v1778 = vsel %vm395, %v1763, 0
    %v1781 = vsel %vm395, %v1765, 0
    %v1784 = vsel %vm395, %v1767, 0
    %1786 = vmatprep.subr.mxu0 0.0
    %1787 = vmatpush1.msra.mxu0 0.0
    %1788 = vmatprep.subr.mxu0 0.0
    %1789 = vmatpush1.msra.mxu0 0.0
    %1790 = vmatprep.subr.mxu0 0.0
    %1791 = vmatpush1.msra.mxu0 0.0
    %1792 = vmatprep.subr.mxu0 0.0
    %1793 = vmatpush1.msra.mxu0 0.0
    %1794 = vmatprep.subr.mxu0 0.0
    %1795 = vmatpush1.msra.mxu0 0.0
    %1796 = vmatprep.subr.mxu0 0.0
    %1797 = vmatpush1.msra.mxu0 0.0
    %1798 = vmatprep.subr.mxu0 0.0
    %1799 = vmatpush1.msra.mxu0 0.0
    %1800 = vmatprep.subr.mxu0 0.0
    %1801 = vmatpush1.msra.mxu0 0.0
    %1802 = vmatprep.subr.mxu0 0.0
    %1803 = vmatpush1.msra.mxu0 0.0
    %1804 = vmatprep.subr.mxu0 0.0
    %1805 = vmatpush1.msra.mxu0 0.0
    %1806 = vmatprep.subr.mxu0 0.0
    %1807 = vmatpush1.msra.mxu0 0.0
    %1808 = vmatprep.subr.mxu0 0.0
    %1809 = vmatpush1.msra.mxu0 0.0
    %1810 = vmatprep.subr.mxu0 0.0
    %1811 = vmatpush1.msra.mxu0 0.0
    %1812 = vmatprep.subr.mxu0 0.0
    %1813 = vmatpush1.msra.mxu0 0.0
    %1814 = vmatprep.subr.mxu0 0.0
    %1815 = vmatpush1.msra.mxu0 %v1771
    %1816 = vmatprep.subr.mxu0 0.0
    %1817 = vmatpush1.msra.mxu0 %v1769
    %1818 = vmatprep.subr.mxu0 0.0
    %1819 = vmatpush2.msra.mxu0 0.0
    %1820 = vmatprep.subr.mxu0 0.0
    %1821 = vmatpush2.msra.mxu0 0.0
    %1822 = vmatprep.subr.mxu0 0.0
    %1823 = vmatpush2.msra.mxu0 0.0
    %1824 = vmatprep.subr.mxu0 0.0
    %1825 = vmatpush2.msra.mxu0 0.0
    %1826 = vmatprep.subr.mxu0 0.0
    %1827 = vmatpush2.msra.mxu0 0.0
    %1828 = vmatprep.subr.mxu0 0.0
    %1829 = vmatpush2.msra.mxu0 0.0
    %1830 = vmatprep.subr.mxu0 0.0
    %1831 = vmatpush2.msra.mxu0 0.0
    %1832 = vmatprep.subr.mxu0 0.0
    %1833 = vmatpush2.msra.mxu0 0.0
    %1834 = vmatprep.subr.mxu0 0.0
    %1835 = vmatpush2.msra.mxu0 0.0
    %1836 = vmatprep.subr.mxu0 0.0
    %1837 = vmatpush2.msra.mxu0 0.0
    %1838 = vmatprep.subr.mxu0 0.0
    %1839 = vmatpush2.msra.mxu0 0.0
    %1840 = vmatprep.subr.mxu0 0.0
    %1841 = vmatpush2.msra.mxu0 0.0
    %1842 = vmatprep.subr.mxu0 0.0
    %1843 = vmatpush2.msra.mxu0 0.0
    %1844 = vmatprep.subr.mxu0 0.0
    %1845 = vmatpush2.msra.mxu0 0.0
    %1846 = vmatprep.subr.mxu0 0.0
    %1847 = vmatpush2.msra.mxu0 0.0
    %1848 = vmatprep.subr.mxu0 0.0
    %1849 = vmatpush2.msra.mxu0 0.0
    %1850 = vmatprep.mubr.f32.mxu0 0.0
    %1851 = vmatmul.mubr.f32.gmra.mxu0 %v1775
    %v1852 = vpop.f32.mrf.mxu0
    %v1853 = vadd.f32 0.0, %v1852
    %v1854 = vpop.f32.mrf.mxu0
    %1855 = vmatprep.mubr.f32.mxu0 0.0
    %1856 = vmatmul.mubr.f32.gmra.mxu0 %v1778
    %v1857 = vpop.f32.mrf.mxu0
    %v1858 = vadd.f32 0.0, %v1857
    %v1859 = vpop.f32.mrf.mxu0
    %1860 = vmatprep.mubr.f32.mxu0 0.0
    %1861 = vmatmul.mubr.f32.gmra.mxu0 %v1781
    %v1862 = vpop.f32.mrf.mxu0
    %v1863 = vadd.f32 0.0, %v1862
    %v1864 = vpop.f32.mrf.mxu0
    %1865 = vmatprep.mubr.f32.mxu0 0.0
    %1866 = vmatmul.mubr.f32.gmra.mxu0 %v1784
    %v1867 = vpop.f32.mrf.mxu0
    %v1868 = vadd.f32 0.0, %v1867
    %v1869 = vpop.f32.mrf.mxu0
    %1870 = vdwg.mxu0
    %v1871 = vrot.slane %v1761, 1
    %1872 = vrot.lane.b32.xlu0 %v1871, 16
    %v1873 = vpop.permute.xlu0 %1872
    %v1875 = vrot.slane %v1761, 2
    %1876 = vrot.lane.b32.xlu0 %v1875, 32
    %v1877 = vpop.permute.xlu0 %1876
    %v1879 = vrot.slane %v1761, 3
    %1880 = vrot.lane.b32.xlu0 %v1879, 48
    %v1881 = vpop.permute.xlu0 %1880
    %v1883 = vrot.slane %v1761, 4
    %1884 = vrot.lane.b32.xlu0 %v1883, 64
    %v1885 = vpop.permute.xlu0 %1884
    %v1887 = vrot.slane %v1761, 5
    %1888 = vrot.lane.b32.xlu0 %v1887, 80
    %v1889 = vpop.permute.xlu0 %1888
    %v1891 = vrot.slane %v1761, 6
    %1892 = vrot.lane.b32.xlu0 %v1891, 96
    %v1893 = vpop.permute.xlu0 %1892
    %v1895 = vrot.slane %v1761, 7
    %1896 = vrot.lane.b32.xlu0 %v1895, 112
    %v1897 = vpop.permute.xlu0 %1896
    %v1899 = vrot.slane %v1763, 1
    %1900 = vrot.lane.b32.xlu0 %v1899, 16
    %v1901 = vpop.permute.xlu0 %1900
    %v1903 = vrot.slane %v1763, 2
    %1904 = vrot.lane.b32.xlu0 %v1903, 32
    %v1905 = vpop.permute.xlu0 %1904
    %v1907 = vrot.slane %v1763, 3
    %1908 = vrot.lane.b32.xlu0 %v1907, 48
    %v1909 = vpop.permute.xlu0 %1908
    %v1911 = vrot.slane %v1763, 4
    %1912 = vrot.lane.b32.xlu0 %v1911, 64
    %v1913 = vpop.permute.xlu0 %1912
    %v1915 = vrot.slane %v1763, 5
    %1916 = vrot.lane.b32.xlu0 %v1915, 80
    %v1917 = vpop.permute.xlu0 %1916
    %v1919 = vrot.slane %v1763, 6
    %1920 = vrot.lane.b32.xlu0 %v1919, 96
    %v1921 = vpop.permute.xlu0 %1920
    %v1923 = vrot.slane %v1763, 7
    %1924 = vrot.lane.b32.xlu0 %v1923, 112
    %v1925 = vpop.permute.xlu0 %1924
    %v1927 = vsel %vm395, %v1761, %v1873
    %v1928 = vsel %vm232, %v1927, %v1877
    %v1929 = vsel %vm1487, %v1928, %v1881
    %v1930 = vsel %vm118, %v1929, %v1885
    %v1931 = vsel %vm1490, %v1930, %v1889
    %v1932 = vsel %vm1492, %v1931, %v1893
    %v1933 = vsel %vm1494, %v1932, %v1897
    %v1934 = vsel %vm395, %v1763, %v1901
    %v1935 = vsel %vm232, %v1934, %v1905
    %v1936 = vsel %vm1487, %v1935, %v1909
    %v1937 = vsel %vm118, %v1936, %v1913
    %v1938 = vsel %vm1490, %v1937, %v1917
    %v1939 = vsel %vm1492, %v1938, %v1921
    %v1940 = vsel %vm1494, %v1939, %v1925
    %v1941 = vrot.slane %v1765, 1
    %1942 = vrot.lane.b32.xlu0 %v1941, 16
    %v1943 = vpop.permute.xlu0 %1942
    %v1945 = vrot.slane %v1765, 2
    %1946 = vrot.lane.b32.xlu0 %v1945, 32
    %v1947 = vpop.permute.xlu0 %1946
    %v1949 = vrot.slane %v1765, 3
    %1950 = vrot.lane.b32.xlu0 %v1949, 48
    %v1951 = vpop.permute.xlu0 %1950
    %v1953 = vrot.slane %v1765, 4
    %1954 = vrot.lane.b32.xlu0 %v1953, 64
    %v1955 = vpop.permute.xlu0 %1954
    %v1957 = vrot.slane %v1765, 5
    %1958 = vrot.lane.b32.xlu0 %v1957, 80
    %v1959 = vpop.permute.xlu0 %1958
    %v1961 = vrot.slane %v1765, 6
    %1962 = vrot.lane.b32.xlu0 %v1961, 96
    %v1963 = vpop.permute.xlu0 %1962
    %v1965 = vrot.slane %v1765, 7
    %1966 = vrot.lane.b32.xlu0 %v1965, 112
    %v1967 = vpop.permute.xlu0 %1966
    %v1969 = vrot.slane %v1767, 1
    %1970 = vrot.lane.b32.xlu0 %v1969, 16
    %v1971 = vpop.permute.xlu0 %1970
    %v1973 = vrot.slane %v1767, 2
    %1974 = vrot.lane.b32.xlu0 %v1973, 32
    %v1975 = vpop.permute.xlu0 %1974
    %v1977 = vrot.slane %v1767, 3
    %1978 = vrot.lane.b32.xlu0 %v1977, 48
    %v1979 = vpop.permute.xlu0 %1978
    %v1981 = vrot.slane %v1767, 4
    %1982 = vrot.lane.b32.xlu0 %v1981, 64
    %v1983 = vpop.permute.xlu0 %1982
    %v1985 = vrot.slane %v1767, 5
    %1986 = vrot.lane.b32.xlu0 %v1985, 80
    %v1987 = vpop.permute.xlu0 %1986
    %v1989 = vrot.slane %v1767, 6
    %1990 = vrot.lane.b32.xlu0 %v1989, 96
    %v1991 = vpop.permute.xlu0 %1990
    %v1993 = vrot.slane %v1767, 7
    %1994 = vrot.lane.b32.xlu0 %v1993, 112
    %v1995 = vpop.permute.xlu0 %1994
    %v1997 = vsel %vm395, %v1765, %v1943
    %v1998 = vsel %vm232, %v1997, %v1947
    %v1999 = vsel %vm1487, %v1998, %v1951
    %v2000 = vsel %vm118, %v1999, %v1955
    %v2001 = vsel %vm1490, %v2000, %v1959
    %v2002 = vsel %vm1492, %v2001, %v1963
    %v2003 = vsel %vm1494, %v2002, %v1967
    %v2004 = vsel %vm395, %v1767, %v1971
    %v2005 = vsel %vm232, %v2004, %v1975
    %v2006 = vsel %vm1487, %v2005, %v1979
    %v2007 = vsel %vm118, %v2006, %v1983
    %v2008 = vsel %vm1490, %v2007, %v1987
    %v2009 = vsel %vm1492, %v2008, %v1991
    %v2010 = vsel %vm1494, %v2009, %v1995
    %2013 = vrot.lane.b32.xlu0 %v621, 112
    %v2014 = vpop.permute.xlu0 %2013
    %2015 = vrot.lane.b32.xlu0 %v622, 112
    %v2016 = vpop.permute.xlu0 %2015
    %v2019 = vsel %vm395, %v486, 1.0
    %v2020 = vsel %vm395, %v487, 1.0
    %v2021 = vsel %vm395, %v2014, 1.0
    %v2022 = vsel %vm395, %v2016, 1.0
    %v2023 = vmul.f32 %v378, 4.0
    %v2024 = vmul.f32 %v380, 4.0
    %2027 = vrot.lane.b32.xlu0 %v1007, 64
    %v2028 = vpop.permute.xlu0 %2027
    %2029 = vrot.lane.b32.xlu0 %v1008, 64
    %v2030 = vpop.permute.xlu0 %2029
    %2035 = vrot.lane.b32.xlu0 %v2023, 16
    %v2036 = vpop.permute.xlu0 %2035
    %2037 = vrot.lane.b32.xlu0 %v2024, 16
    %v2038 = vpop.permute.xlu0 %2037
    %v2041 = vsel %vm395, %v2028, %v2036
    %v2042 = vsel %vm395, %v2030, %v2038
    %v2044 = vsel %vm1172, %v2019, 0
    %v2047 = vsel %vm1172, %v2020, 0
    %v2050 = vsel %vm1172, %v2021, 0
    %v2053 = vsel %vm1172, %v2022, 0
    %v2056 = vsel %vm1172, %v2041, 0
    %v2059 = vsel %vm1172, %v2042, 0
    %2061 = vmatprep.subr.mxu0 0.0
    %2062 = vmatpush1.xpose.msra.mxu0 0.0
    %2063 = vmatprep.subr.mxu0 0.0
    %2064 = vmatpush1.xpose.msra.mxu0 0.0
    %2065 = vmatprep.subr.mxu0 0.0
    %2066 = vmatpush1.xpose.msra.mxu0 0.0
    %2067 = vmatprep.subr.mxu0 0.0
    %2068 = vmatpush1.xpose.msra.mxu0 0.0
    %2069 = vmatprep.subr.mxu0 0.0
    %2070 = vmatpush1.xpose.msra.mxu0 0.0
    %2071 = vmatprep.subr.mxu0 0.0
    %2072 = vmatpush1.xpose.msra.mxu0 0.0
    %2073 = vmatprep.subr.mxu0 0.0
    %2074 = vmatpush1.xpose.msra.mxu0 0.0
    %2075 = vmatprep.subr.mxu0 0.0
    %2076 = vmatpush1.xpose.msra.mxu0 0.0
    %2077 = vmatprep.subr.mxu0 0.0
    %2078 = vmatpush1.xpose.msra.mxu0 0.0
    %2079 = vmatprep.subr.mxu0 0.0
    %2080 = vmatpush1.xpose.msra.mxu0 0.0
    %2081 = vmatprep.subr.mxu0 0.0
    %2082 = vmatpush1.xpose.msra.mxu0 0.0
    %2083 = vmatprep.subr.mxu0 0.0
    %2084 = vmatpush1.xpose.msra.mxu0 0.0
    %2085 = vmatprep.subr.mxu0 0.0
    %2086 = vmatpush1.xpose.msra.mxu0 0.0
    %2087 = vmatprep.subr.mxu0 0.0
    %2088 = vmatpush1.xpose.msra.mxu0 0.0
    %2089 = vmatprep.subr.mxu0 0.0
    %2090 = vmatpush1.xpose.msra.mxu0 %v2059
    %2091 = vmatprep.subr.mxu0 0.0
    %2092 = vmatpush1.xpose.msra.mxu0 %v2056
    %2093 = vmatprep.subr.mxu0 0.0
    %2094 = vmatpush2.xpose.msra.mxu0 0.0
    %2095 = vmatprep.subr.mxu0 0.0
    %2096 = vmatpush2.xpose.msra.mxu0 0.0
    %2097 = vmatprep.subr.mxu0 0.0
    %2098 = vmatpush2.xpose.msra.mxu0 0.0
    %2099 = vmatprep.subr.mxu0 0.0
    %2100 = vmatpush2.xpose.msra.mxu0 0.0
    %2101 = vmatprep.subr.mxu0 0.0
    %2102 = vmatpush2.xpose.msra.mxu0 0.0
    %2103 = vmatprep.subr.mxu0 0.0
    %2104 = vmatpush2.xpose.msra.mxu0 0.0
    %2105 = vmatprep.subr.mxu0 0.0
    %2106 = vmatpush2.xpose.msra.mxu0 0.0
    %2107 = vmatprep.subr.mxu0 0.0
    %2108 = vmatpush2.xpose.msra.mxu0 0.0
    %2109 = vmatprep.subr.mxu0 0.0
    %2110 = vmatpush2.xpose.msra.mxu0 0.0
    %2111 = vmatprep.subr.mxu0 0.0
    %2112 = vmatpush2.xpose.msra.mxu0 0.0
    %2113 = vmatprep.subr.mxu0 0.0
    %2114 = vmatpush2.xpose.msra.mxu0 0.0
    %2115 = vmatprep.subr.mxu0 0.0
    %2116 = vmatpush2.xpose.msra.mxu0 0.0
    %2117 = vmatprep.subr.mxu0 0.0
    %2118 = vmatpush2.xpose.msra.mxu0 0.0
    %2119 = vmatprep.subr.mxu0 0.0
    %2120 = vmatpush2.xpose.msra.mxu0 0.0
    %2121 = vmatprep.subr.mxu0 0.0
    %2122 = vmatpush2.xpose.msra.mxu0 0.0
    %2123 = vmatprep.subr.mxu0 0.0
    %2124 = vmatpush2.xpose.msra.mxu0 0.0
    %2125 = vmatprep.mubr.f32.mxu0 0.0
    %2126 = vmatmul.mubr.f32.gmra.mxu0 %v2044
    %v2127 = vpop.f32.mrf.mxu0
    %v2128 = vadd.f32 0.0, %v2127
    %v2129 = vpop.f32.mrf.mxu0
    %2130 = vmatprep.mubr.f32.mxu0 0.0
    %2131 = vmatmul.mubr.f32.gmra.mxu0 %v2047
    %v2132 = vpop.f32.mrf.mxu0
    %v2133 = vadd.f32 0.0, %v2132
    %v2134 = vpop.f32.mrf.mxu0
    %2135 = vmatprep.mubr.f32.mxu0 0.0
    %2136 = vmatmul.mubr.f32.gmra.mxu0 %v2050
    %v2137 = vpop.f32.mrf.mxu0
    %v2138 = vadd.f32 0.0, %v2137
    %v2139 = vpop.f32.mrf.mxu0
    %2140 = vmatprep.mubr.f32.mxu0 0.0
    %2141 = vmatmul.mubr.f32.gmra.mxu0 %v2053
    %v2142 = vpop.f32.mrf.mxu0
    %v2143 = vadd.f32 0.0, %v2142
    %v2144 = vpop.f32.mrf.mxu0
    %2145 = vdwg.mxu0
    %v2146 = vmul.f32 %v2128, 0.25
    %v2147 = vmul.f32 %v2133, 0.25
    %v2148 = vmul.f32 %v2138, 0.25
    %v2149 = vmul.f32 %v2143, 0.25
    %vm2150 = vcmp.ne.f32.partialorder %v1138, 0.0
    %vm2151 = vcmp.ne.f32.partialorder %v1139, 0.0
    %v2152 = vsel %vm2150, -3.4028235e+38, %v2146
    %v2153 = vsel %vm2151, -3.4028235e+38, %v2147
    %v2154 = vsel %vm2150, -3.4028235e+38, %v2148
    %v2155 = vsel %vm2151, -3.4028235e+38, %v2149
    %v2156 = vsel %vm395, %v2152, -inf
    %2157 = vmax.xlane.f32.xlu0 %v2156
    %v2158 = vpop.xlane.xlu0 %2157
    %v2159 = vsel %vm395, %v2153, -inf
    %2160 = vmax.xlane.f32.xlu0 %v2159
    %v2161 = vpop.xlane.xlu0 %2160
    %v2162 = vsel %vm395, %v2154, -inf
    %2163 = vmax.xlane.f32.xlu0 %v2162
    %v2164 = vpop.xlane.xlu0 %2163
    %v2165 = vsel %vm395, %v2155, -inf
    %2166 = vmax.xlane.f32.xlu0 %v2165
    %v2167 = vpop.xlane.xlu0 %2166
    %v2168 = vsub.f32 %v2152, %v2158
    %v2169 = vsub.f32 %v2153, %v2161
    %v2170 = vsub.f32 %v2154, %v2164
    %v2171 = vsub.f32 %v2155, %v2167
    %v2172 = vmul.f32 %v2168, 1.442695
    %v2173 = vpow.pop %v2172
    %v2174 = vmul.f32 %v2169, 1.442695
    %v2175 = vpow.pop %v2174
    %v2176 = vmul.f32 %v2170, 1.442695
    %v2177 = vpow.pop %v2176
    %v2178 = vmul.f32 %v2171, 1.442695
    %v2179 = vpow.pop %v2178
    %v2180 = vsel %vm395, %v2173, 0.0
    %2181 = vadd.xlane.f32.xlu0 %v2180
    %v2182 = vpop.xlane.xlu0 %2181
    %v2183 = vsel %vm395, %v2175, 0.0
    %2184 = vadd.xlane.f32.xlu0 %v2183
    %v2185 = vpop.xlane.xlu0 %2184
    %v2186 = vsel %vm395, %v2177, 0.0
    %2187 = vadd.xlane.f32.xlu0 %v2186
    %v2188 = vpop.xlane.xlu0 %2187
    %v2189 = vsel %vm395, %v2179, 0.0
    %2190 = vadd.xlane.f32.xlu0 %v2189
    %v2191 = vpop.xlane.xlu0 %2190
    %v2192 = vrcp.pop %v2182
    %v2193 = vmul.f32 %v2173, %v2192
    %v2194 = vrcp.pop %v2185
    %v2195 = vmul.f32 %v2175, %v2194
    %v2196 = vrcp.pop %v2188
    %v2197 = vmul.f32 %v2177, %v2196
    %v2198 = vrcp.pop %v2191
    %v2199 = vmul.f32 %v2179, %v2198
    %v2203 = vsel %vm395, %v2193, 0
    %v2206 = vsel %vm395, %v2195, 0
    %v2209 = vsel %vm395, %v2197, 0
    %v2212 = vsel %vm395, %v2199, 0
    %2214 = vmatprep.subr.mxu0 0.0
    %2215 = vmatpush1.msra.mxu0 0.0
    %2216 = vmatprep.subr.mxu0 0.0
    %2217 = vmatpush1.msra.mxu0 0.0
    %2218 = vmatprep.subr.mxu0 0.0
    %2219 = vmatpush1.msra.mxu0 0.0
    %2220 = vmatprep.subr.mxu0 0.0
    %2221 = vmatpush1.msra.mxu0 0.0
    %2222 = vmatprep.subr.mxu0 0.0
    %2223 = vmatpush1.msra.mxu0 0.0
    %2224 = vmatprep.subr.mxu0 0.0
    %2225 = vmatpush1.msra.mxu0 0.0
    %2226 = vmatprep.subr.mxu0 0.0
    %2227 = vmatpush1.msra.mxu0 0.0
    %2228 = vmatprep.subr.mxu0 0.0
    %2229 = vmatpush1.msra.mxu0 0.0
    %2230 = vmatprep.subr.mxu0 0.0
    %2231 = vmatpush1.msra.mxu0 0.0
    %2232 = vmatprep.subr.mxu0 0.0
    %2233 = vmatpush1.msra.mxu0 0.0
    %2234 = vmatprep.subr.mxu0 0.0
    %2235 = vmatpush1.msra.mxu0 0.0
    %2236 = vmatprep.subr.mxu0 0.0
    %2237 = vmatpush1.msra.mxu0 0.0
    %2238 = vmatprep.subr.mxu0 0.0
    %2239 = vmatpush1.msra.mxu0 0.0
    %2240 = vmatprep.subr.mxu0 0.0
    %2241 = vmatpush1.msra.mxu0 0.0
    %2242 = vmatprep.subr.mxu0 0.0
    %2243 = vmatpush1.msra.mxu0 %v231
    %2244 = vmatprep.subr.mxu0 0.0
    %2245 = vmatpush1.msra.mxu0 %v229
    %2246 = vmatprep.subr.mxu0 0.0
    %2247 = vmatpush2.msra.mxu0 0.0
    %2248 = vmatprep.subr.mxu0 0.0
    %2249 = vmatpush2.msra.mxu0 0.0
    %2250 = vmatprep.subr.mxu0 0.0
    %2251 = vmatpush2.msra.mxu0 0.0
    %2252 = vmatprep.subr.mxu0 0.0
    %2253 = vmatpush2.msra.mxu0 0.0
    %2254 = vmatprep.subr.mxu0 0.0
    %2255 = vmatpush2.msra.mxu0 0.0
    %2256 = vmatprep.subr.mxu0 0.0
    %2257 = vmatpush2.msra.mxu0 0.0
    %2258 = vmatprep.subr.mxu0 0.0
    %2259 = vmatpush2.msra.mxu0 0.0
    %2260 = vmatprep.subr.mxu0 0.0
    %2261 = vmatpush2.msra.mxu0 0.0
    %2262 = vmatprep.subr.mxu0 0.0
    %2263 = vmatpush2.msra.mxu0 0.0
    %2264 = vmatprep.subr.mxu0 0.0
    %2265 = vmatpush2.msra.mxu0 0.0
    %2266 = vmatprep.subr.mxu0 0.0
    %2267 = vmatpush2.msra.mxu0 0.0
    %2268 = vmatprep.subr.mxu0 0.0
    %2269 = vmatpush2.msra.mxu0 0.0
    %2270 = vmatprep.subr.mxu0 0.0
    %2271 = vmatpush2.msra.mxu0 0.0
    %2272 = vmatprep.subr.mxu0 0.0
    %2273 = vmatpush2.msra.mxu0 0.0
    %2274 = vmatprep.subr.mxu0 0.0
    %2275 = vmatpush2.msra.mxu0 0.0
    %2276 = vmatprep.subr.mxu0 0.0
    %2277 = vmatpush2.msra.mxu0 0.0
    %2278 = vmatprep.mubr.f32.mxu0 0.0
    %2279 = vmatmul.mubr.f32.gmra.mxu0 %v2203
    %v2280 = vpop.f32.mrf.mxu0
    %v2281 = vadd.f32 0.0, %v2280
    %v2282 = vpop.f32.mrf.mxu0
    %2283 = vmatprep.mubr.f32.mxu0 0.0
    %2284 = vmatmul.mubr.f32.gmra.mxu0 %v2206
    %v2285 = vpop.f32.mrf.mxu0
    %v2286 = vadd.f32 0.0, %v2285
    %v2287 = vpop.f32.mrf.mxu0
    %2288 = vmatprep.mubr.f32.mxu0 0.0
    %2289 = vmatmul.mubr.f32.gmra.mxu0 %v2209
    %v2290 = vpop.f32.mrf.mxu0
    %v2291 = vadd.f32 0.0, %v2290
    %v2292 = vpop.f32.mrf.mxu0
    %2293 = vmatprep.mubr.f32.mxu0 0.0
    %2294 = vmatmul.mubr.f32.gmra.mxu0 %v2212
    %v2295 = vpop.f32.mrf.mxu0
    %v2296 = vadd.f32 0.0, %v2295
    %v2297 = vpop.f32.mrf.mxu0
    %2298 = vdwg.mxu0
    %v2299 = vrot.slane %v2193, 1
    %2300 = vrot.lane.b32.xlu0 %v2299, 16
    %v2301 = vpop.permute.xlu0 %2300
    %v2303 = vrot.slane %v2193, 2
    %2304 = vrot.lane.b32.xlu0 %v2303, 32
    %v2305 = vpop.permute.xlu0 %2304
    %v2307 = vrot.slane %v2193, 3
    %2308 = vrot.lane.b32.xlu0 %v2307, 48
    %v2309 = vpop.permute.xlu0 %2308
    %v2311 = vrot.slane %v2193, 4
    %2312 = vrot.lane.b32.xlu0 %v2311, 64
    %v2313 = vpop.permute.xlu0 %2312
    %v2315 = vrot.slane %v2193, 5
    %2316 = vrot.lane.b32.xlu0 %v2315, 80
    %v2317 = vpop.permute.xlu0 %2316
    %v2319 = vrot.slane %v2193, 6
    %2320 = vrot.lane.b32.xlu0 %v2319, 96
    %v2321 = vpop.permute.xlu0 %2320
    %v2323 = vrot.slane %v2193, 7
    %2324 = vrot.lane.b32.xlu0 %v2323, 112
    %v2325 = vpop.permute.xlu0 %2324
    %v2327 = vrot.slane %v2195, 1
    %2328 = vrot.lane.b32.xlu0 %v2327, 16
    %v2329 = vpop.permute.xlu0 %2328
    %v2331 = vrot.slane %v2195, 2
    %2332 = vrot.lane.b32.xlu0 %v2331, 32
    %v2333 = vpop.permute.xlu0 %2332
    %v2335 = vrot.slane %v2195, 3
    %2336 = vrot.lane.b32.xlu0 %v2335, 48
    %v2337 = vpop.permute.xlu0 %2336
    %v2339 = vrot.slane %v2195, 4
    %2340 = vrot.lane.b32.xlu0 %v2339, 64
    %v2341 = vpop.permute.xlu0 %2340
    %v2343 = vrot.slane %v2195, 5
    %2344 = vrot.lane.b32.xlu0 %v2343, 80
    %v2345 = vpop.permute.xlu0 %2344
    %v2347 = vrot.slane %v2195, 6
    %2348 = vrot.lane.b32.xlu0 %v2347, 96
    %v2349 = vpop.permute.xlu0 %2348
    %v2351 = vrot.slane %v2195, 7
    %2352 = vrot.lane.b32.xlu0 %v2351, 112
    %v2353 = vpop.permute.xlu0 %2352
    %v2355 = vsel %vm395, %v2193, %v2301
    %v2356 = vsel %vm232, %v2355, %v2305
    %v2357 = vsel %vm1487, %v2356, %v2309
    %v2358 = vsel %vm118, %v2357, %v2313
    %v2359 = vsel %vm1490, %v2358, %v2317
    %v2360 = vsel %vm1492, %v2359, %v2321
    %v2361 = vsel %vm1494, %v2360, %v2325
    %v2362 = vsel %vm395, %v2195, %v2329
    %v2363 = vsel %vm232, %v2362, %v2333
    %v2364 = vsel %vm1487, %v2363, %v2337
    %v2365 = vsel %vm118, %v2364, %v2341
    %v2366 = vsel %vm1490, %v2365, %v2345
    %v2367 = vsel %vm1492, %v2366, %v2349
    %v2368 = vsel %vm1494, %v2367, %v2353
    %v2369 = vrot.slane %v2197, 1
    %2370 = vrot.lane.b32.xlu0 %v2369, 16
    %v2371 = vpop.permute.xlu0 %2370
    %v2373 = vrot.slane %v2197, 2
    %2374 = vrot.lane.b32.xlu0 %v2373, 32
    %v2375 = vpop.permute.xlu0 %2374
    %v2377 = vrot.slane %v2197, 3
    %2378 = vrot.lane.b32.xlu0 %v2377, 48
    %v2379 = vpop.permute.xlu0 %2378
    %v2381 = vrot.slane %v2197, 4
    %2382 = vrot.lane.b32.xlu0 %v2381, 64
    %v2383 = vpop.permute.xlu0 %2382
    %v2385 = vrot.slane %v2197, 5
    %2386 = vrot.lane.b32.xlu0 %v2385, 80
    %v2387 = vpop.permute.xlu0 %2386
    %v2389 = vrot.slane %v2197, 6
    %2390 = vrot.lane.b32.xlu0 %v2389, 96
    %v2391 = vpop.permute.xlu0 %2390
    %v2393 = vrot.slane %v2197, 7
    %2394 = vrot.lane.b32.xlu0 %v2393, 112
    %v2395 = vpop.permute.xlu0 %2394
    %v2397 = vrot.slane %v2199, 1
    %2398 = vrot.lane.b32.xlu0 %v2397, 16
    %v2399 = vpop.permute.xlu0 %2398
    %v2401 = vrot.slane %v2199, 2
    %2402 = vrot.lane.b32.xlu0 %v2401, 32
    %v2403 = vpop.permute.xlu0 %2402
    %v2405 = vrot.slane %v2199, 3
    %2406 = vrot.lane.b32.xlu0 %v2405, 48
    %v2407 = vpop.permute.xlu0 %2406
    %v2409 = vrot.slane %v2199, 4
    %2410 = vrot.lane.b32.xlu0 %v2409, 64
    %v2411 = vpop.permute.xlu0 %2410
    %v2413 = vrot.slane %v2199, 5
    %2414 = vrot.lane.b32.xlu0 %v2413, 80
    %v2415 = vpop.permute.xlu0 %2414
    %v2417 = vrot.slane %v2199, 6
    %2418 = vrot.lane.b32.xlu0 %v2417, 96
    %v2419 = vpop.permute.xlu0 %2418
    %v2421 = vrot.slane %v2199, 7
    %2422 = vrot.lane.b32.xlu0 %v2421, 112
    %v2423 = vpop.permute.xlu0 %2422
    %v2425 = vsel %vm395, %v2197, %v2371
    %v2426 = vsel %vm232, %v2425, %v2375
    %v2427 = vsel %vm1487, %v2426, %v2379
    %v2428 = vsel %vm118, %v2427, %v2383
    %v2429 = vsel %vm1490, %v2428, %v2387
    %v2430 = vsel %vm1492, %v2429, %v2391
    %v2431 = vsel %vm1494, %v2430, %v2395
    %v2432 = vsel %vm395, %v2199, %v2399
    %v2433 = vsel %vm232, %v2432, %v2403
    %v2434 = vsel %vm1487, %v2433, %v2407
    %v2435 = vsel %vm118, %v2434, %v2411
    %v2436 = vsel %vm1490, %v2435, %v2415
    %v2437 = vsel %vm1492, %v2436, %v2419
    %v2438 = vsel %vm1494, %v2437, %v2423
    %2441 = vrot.lane.b32.xlu0 %v875, 112
    %v2442 = vpop.permute.xlu0 %2441
    %2443 = vrot.lane.b32.xlu0 %v876, 112
    %v2444 = vpop.permute.xlu0 %2443
    %2447 = vrot.lane.b32.xlu0 %v748, 96
    %v2448 = vpop.permute.xlu0 %2447
    %2449 = vrot.lane.b32.xlu0 %v749, 96
    %v2450 = vpop.permute.xlu0 %2449
    %2451 = vrot.lane.b32.xlu0 %v2442, 96
    %v2452 = vpop.permute.xlu0 %2451
    %2453 = vrot.lane.b32.xlu0 %v2444, 96
    %v2454 = vpop.permute.xlu0 %2453
    %v2459 = vsel %vm395, %v2448, 1.0
    %v2460 = vsel %vm395, %v2450, 1.0
    %v2461 = vsel %vm395, %v2452, 1.0
    %v2462 = vsel %vm395, %v2454, 1.0
    %2465 = vrot.lane.b32.xlu0 %v1134, 48
    %v2466 = vpop.permute.xlu0 %2465
    %2467 = vrot.lane.b32.xlu0 %v1135, 48
    %v2468 = vpop.permute.xlu0 %2467
    %2471 = vrot.lane.b32.xlu0 %v2023, 15
    %v2472 = vpop.permute.xlu0 %2471
    %2473 = vrot.lane.b32.xlu0 %v2024, 15
    %v2474 = vpop.permute.xlu0 %2473
    %v2477 = vsel %vm395, %v2466, %v2472
    %v2478 = vsel %vm395, %v2468, %v2474
    %v2480 = vsel %vm1172, %v2459, 0
    %v2483 = vsel %vm1172, %v2460, 0
    %v2486 = vsel %vm1172, %v2461, 0
    %v2489 = vsel %vm1172, %v2462, 0
    %v2492 = vsel %vm1172, %v2477, 0
    %v2495 = vsel %vm1172, %v2478, 0
    %2497 = vmatprep.subr.mxu0 0.0
    %2498 = vmatpush1.xpose.msra.mxu0 0.0
    %2499 = vmatprep.subr.mxu0 0.0
    %2500 = vmatpush1.xpose.msra.mxu0 0.0
    %2501 = vmatprep.subr.mxu0 0.0
    %2502 = vmatpush1.xpose.msra.mxu0 0.0
    %2503 = vmatprep.subr.mxu0 0.0
    %2504 = vmatpush1.xpose.msra.mxu0 0.0
    %2505 = vmatprep.subr.mxu0 0.0
    %2506 = vmatpush1.xpose.msra.mxu0 0.0
    %2507 = vmatprep.subr.mxu0 0.0
    %2508 = vmatpush1.xpose.msra.mxu0 0.0
    %2509 = vmatprep.subr.mxu0 0.0
    %2510 = vmatpush1.xpose.msra.mxu0 0.0
    %2511 = vmatprep.subr.mxu0 0.0
    %2512 = vmatpush1.xpose.msra.mxu0 0.0
    %2513 = vmatprep.subr.mxu0 0.0
    %2514 = vmatpush1.xpose.msra.mxu0 0.0
    %2515 = vmatprep.subr.mxu0 0.0
    %2516 = vmatpush1.xpose.msra.mxu0 0.0
    %2517 = vmatprep.subr.mxu0 0.0
    %2518 = vmatpush1.xpose.msra.mxu0 0.0
    %2519 = vmatprep.subr.mxu0 0.0
    %2520 = vmatpush1.xpose.msra.mxu0 0.0
    %2521 = vmatprep.subr.mxu0 0.0
    %2522 = vmatpush1.xpose.msra.mxu0 0.0
    %2523 = vmatprep.subr.mxu0 0.0
    %2524 = vmatpush1.xpose.msra.mxu0 0.0
    %2525 = vmatprep.subr.mxu0 0.0
    %2526 = vmatpush1.xpose.msra.mxu0 %v2495
    %2527 = vmatprep.subr.mxu0 0.0
    %2528 = vmatpush1.xpose.msra.mxu0 %v2492
    %2529 = vmatprep.subr.mxu0 0.0
    %2530 = vmatpush2.xpose.msra.mxu0 0.0
    %2531 = vmatprep.subr.mxu0 0.0
    %2532 = vmatpush2.xpose.msra.mxu0 0.0
    %2533 = vmatprep.subr.mxu0 0.0
    %2534 = vmatpush2.xpose.msra.mxu0 0.0
    %2535 = vmatprep.subr.mxu0 0.0
    %2536 = vmatpush2.xpose.msra.mxu0 0.0
    %2537 = vmatprep.subr.mxu0 0.0
    %2538 = vmatpush2.xpose.msra.mxu0 0.0
    %2539 = vmatprep.subr.mxu0 0.0
    %2540 = vmatpush2.xpose.msra.mxu0 0.0
    %2541 = vmatprep.subr.mxu0 0.0
    %2542 = vmatpush2.xpose.msra.mxu0 0.0
    %2543 = vmatprep.subr.mxu0 0.0
    %2544 = vmatpush2.xpose.msra.mxu0 0.0
    %2545 = vmatprep.subr.mxu0 0.0
    %2546 = vmatpush2.xpose.msra.mxu0 0.0
    %2547 = vmatprep.subr.mxu0 0.0
    %2548 = vmatpush2.xpose.msra.mxu0 0.0
    %2549 = vmatprep.subr.mxu0 0.0
    %2550 = vmatpush2.xpose.msra.mxu0 0.0
    %2551 = vmatprep.subr.mxu0 0.0
    %2552 = vmatpush2.xpose.msra.mxu0 0.0
    %2553 = vmatprep.subr.mxu0 0.0
    %2554 = vmatpush2.xpose.msra.mxu0 0.0
    %2555 = vmatprep.subr.mxu0 0.0
    %2556 = vmatpush2.xpose.msra.mxu0 0.0
    %2557 = vmatprep.subr.mxu0 0.0
    %2558 = vmatpush2.xpose.msra.mxu0 0.0
    %2559 = vmatprep.subr.mxu0 0.0
    %2560 = vmatpush2.xpose.msra.mxu0 0.0
    %2561 = vmatprep.mubr.f32.mxu0 0.0
    %2562 = vmatmul.mubr.f32.gmra.mxu0 %v2480
    %v2563 = vpop.f32.mrf.mxu0
    %v2564 = vadd.f32 0.0, %v2563
    %v2565 = vpop.f32.mrf.mxu0
    %2566 = vmatprep.mubr.f32.mxu0 0.0
    %2567 = vmatmul.mubr.f32.gmra.mxu0 %v2483
    %v2568 = vpop.f32.mrf.mxu0
    %v2569 = vadd.f32 0.0, %v2568
    %v2570 = vpop.f32.mrf.mxu0
    %2571 = vmatprep.mubr.f32.mxu0 0.0
    %2572 = vmatmul.mubr.f32.gmra.mxu0 %v2486
    %v2573 = vpop.f32.mrf.mxu0
    %v2574 = vadd.f32 0.0, %v2573
    %v2575 = vpop.f32.mrf.mxu0
    %2576 = vmatprep.mubr.f32.mxu0 0.0
    %2577 = vmatmul.mubr.f32.gmra.mxu0 %v2489
    %v2578 = vpop.f32.mrf.mxu0
    %v2579 = vadd.f32 0.0, %v2578
    %v2580 = vpop.f32.mrf.mxu0
    %2581 = vdwg.mxu0
    %v2582 = vmul.f32 %v2564, 0.25
    %v2583 = vmul.f32 %v2569, 0.25
    %v2584 = vmul.f32 %v2574, 0.25
    %v2585 = vmul.f32 %v2579, 0.25
    %v2586 = vsel %vm2150, -3.4028235e+38, %v2582
    %v2587 = vsel %vm2151, -3.4028235e+38, %v2583
    %v2588 = vsel %vm2150, -3.4028235e+38, %v2584
    %v2589 = vsel %vm2151, -3.4028235e+38, %v2585
    %v2590 = vsel %vm395, %v2586, -inf
    %2591 = vmax.xlane.f32.xlu0 %v2590
    %v2592 = vpop.xlane.xlu0 %2591
    %v2593 = vsel %vm395, %v2587, -inf
    %2594 = vmax.xlane.f32.xlu0 %v2593
    %v2595 = vpop.xlane.xlu0 %2594
    %v2596 = vsel %vm395, %v2588, -inf
    %2597 = vmax.xlane.f32.xlu0 %v2596
    %v2598 = vpop.xlane.xlu0 %2597
    %v2599 = vsel %vm395, %v2589, -inf
    %2600 = vmax.xlane.f32.xlu0 %v2599
    %v2601 = vpop.xlane.xlu0 %2600
    %v2602 = vsub.f32 %v2586, %v2592
    %v2603 = vsub.f32 %v2587, %v2595
    %v2604 = vsub.f32 %v2588, %v2598
    %v2605 = vsub.f32 %v2589, %v2601
    %v2606 = vmul.f32 %v2602, 1.442695
    %v2607 = vpow.pop %v2606
    %v2608 = vmul.f32 %v2603, 1.442695
    %v2609 = vpow.pop %v2608
    %v2610 = vmul.f32 %v2604, 1.442695
    %v2611 = vpow.pop %v2610
    %v2612 = vmul.f32 %v2605, 1.442695
    %v2613 = vpow.pop %v2612
    %v2614 = vsel %vm395, %v2607, 0.0
    %2615 = vadd.xlane.f32.xlu0 %v2614
    %v2616 = vpop.xlane.xlu0 %2615
    %v2617 = vsel %vm395, %v2609, 0.0
    %2618 = vadd.xlane.f32.xlu0 %v2617
    %v2619 = vpop.xlane.xlu0 %2618
    %v2620 = vsel %vm395, %v2611, 0.0
    %2621 = vadd.xlane.f32.xlu0 %v2620
    %v2622 = vpop.xlane.xlu0 %2621
    %v2623 = vsel %vm395, %v2613, 0.0
    %2624 = vadd.xlane.f32.xlu0 %v2623
    %v2625 = vpop.xlane.xlu0 %2624
    %v2626 = vrcp.pop %v2616
    %v2627 = vmul.f32 %v2607, %v2626
    %v2628 = vrcp.pop %v2619
    %v2629 = vmul.f32 %v2609, %v2628
    %v2630 = vrcp.pop %v2622
    %v2631 = vmul.f32 %v2611, %v2630
    %v2632 = vrcp.pop %v2625
    %v2633 = vmul.f32 %v2613, %v2632
    %2634 = vrot.lane.b32.xlu0 %v208, 16
    %v2635 = vpop.permute.xlu0 %2634
    %2636 = vrot.lane.b32.xlu0 %v213, 16
    %v2637 = vpop.permute.xlu0 %2636
    %v2641 = vsel %vm395, %v2627, 0
    %v2644 = vsel %vm395, %v2629, 0
    %v2647 = vsel %vm395, %v2631, 0
    %v2650 = vsel %vm395, %v2633, 0
    %2652 = vmatprep.subr.mxu0 0.0
    %2653 = vmatpush1.msra.mxu0 0.0
    %2654 = vmatprep.subr.mxu0 0.0
    %2655 = vmatpush1.msra.mxu0 0.0
    %2656 = vmatprep.subr.mxu0 0.0
    %2657 = vmatpush1.msra.mxu0 0.0
    %2658 = vmatprep.subr.mxu0 0.0
    %2659 = vmatpush1.msra.mxu0 0.0
    %2660 = vmatprep.subr.mxu0 0.0
    %2661 = vmatpush1.msra.mxu0 0.0
    %2662 = vmatprep.subr.mxu0 0.0
    %2663 = vmatpush1.msra.mxu0 0.0
    %2664 = vmatprep.subr.mxu0 0.0
    %2665 = vmatpush1.msra.mxu0 0.0
    %2666 = vmatprep.subr.mxu0 0.0
    %2667 = vmatpush1.msra.mxu0 0.0
    %2668 = vmatprep.subr.mxu0 0.0
    %2669 = vmatpush1.msra.mxu0 0.0
    %2670 = vmatprep.subr.mxu0 0.0
    %2671 = vmatpush1.msra.mxu0 0.0
    %2672 = vmatprep.subr.mxu0 0.0
    %2673 = vmatpush1.msra.mxu0 0.0
    %2674 = vmatprep.subr.mxu0 0.0
    %2675 = vmatpush1.msra.mxu0 0.0
    %2676 = vmatprep.subr.mxu0 0.0
    %2677 = vmatpush1.msra.mxu0 0.0
    %2678 = vmatprep.subr.mxu0 0.0
    %2679 = vmatpush1.msra.mxu0 0.0
    %2680 = vmatprep.subr.mxu0 0.0
    %2681 = vmatpush1.msra.mxu0 %v2637
    %2682 = vmatprep.subr.mxu0 0.0
    %2683 = vmatpush1.msra.mxu0 %v2635
    %2684 = vmatprep.subr.mxu0 0.0
    %2685 = vmatpush2.msra.mxu0 0.0
    %2686 = vmatprep.subr.mxu0 0.0
    %2687 = vmatpush2.msra.mxu0 0.0
    %2688 = vmatprep.subr.mxu0 0.0
    %2689 = vmatpush2.msra.mxu0 0.0
    %2690 = vmatprep.subr.mxu0 0.0
    %2691 = vmatpush2.msra.mxu0 0.0
    %2692 = vmatprep.subr.mxu0 0.0
    %2693 = vmatpush2.msra.mxu0 0.0
    %2694 = vmatprep.subr.mxu0 0.0
    %2695 = vmatpush2.msra.mxu0 0.0
    %2696 = vmatprep.subr.mxu0 0.0
    %2697 = vmatpush2.msra.mxu0 0.0
    %2698 = vmatprep.subr.mxu0 0.0
    %2699 = vmatpush2.msra.mxu0 0.0
    %2700 = vmatprep.subr.mxu0 0.0
    %2701 = vmatpush2.msra.mxu0 0.0
    %2702 = vmatprep.subr.mxu0 0.0
    %2703 = vmatpush2.msra.mxu0 0.0
    %2704 = vmatprep.subr.mxu0 0.0
    %2705 = vmatpush2.msra.mxu0 0.0
    %2706 = vmatprep.subr.mxu0 0.0
    %2707 = vmatpush2.msra.mxu0 0.0
    %2708 = vmatprep.subr.mxu0 0.0
    %2709 = vmatpush2.msra.mxu0 0.0
    %2710 = vmatprep.subr.mxu0 0.0
    %2711 = vmatpush2.msra.mxu0 0.0
    %2712 = vmatprep.subr.mxu0 0.0
    %2713 = vmatpush2.msra.mxu0 0.0
    %2714 = vmatprep.subr.mxu0 0.0
    %2715 = vmatpush2.msra.mxu0 0.0
    %2716 = vmatprep.mubr.f32.mxu0 0.0
    %2717 = vmatmul.mubr.f32.gmra.mxu0 %v2641
    %v2718 = vpop.f32.mrf.mxu0
    %v2719 = vadd.f32 0.0, %v2718
    %v2720 = vpop.f32.mrf.mxu0
    %2721 = vmatprep.mubr.f32.mxu0 0.0
    %2722 = vmatmul.mubr.f32.gmra.mxu0 %v2644
    %v2723 = vpop.f32.mrf.mxu0
    %v2724 = vadd.f32 0.0, %v2723
    %v2725 = vpop.f32.mrf.mxu0
    %2726 = vmatprep.mubr.f32.mxu0 0.0
    %2727 = vmatmul.mubr.f32.gmra.mxu0 %v2647
    %v2728 = vpop.f32.mrf.mxu0
    %v2729 = vadd.f32 0.0, %v2728
    %v2730 = vpop.f32.mrf.mxu0
    %2731 = vmatprep.mubr.f32.mxu0 0.0
    %2732 = vmatmul.mubr.f32.gmra.mxu0 %v2650
    %v2733 = vpop.f32.mrf.mxu0
    %v2734 = vadd.f32 0.0, %v2733
    %v2735 = vpop.f32.mrf.mxu0
    %2736 = vdwg.mxu0
    %v2737 = vrot.slane %v2627, 1
    %2738 = vrot.lane.b32.xlu0 %v2737, 16
    %v2739 = vpop.permute.xlu0 %2738
    %v2741 = vrot.slane %v2627, 2
    %2742 = vrot.lane.b32.xlu0 %v2741, 32
    %v2743 = vpop.permute.xlu0 %2742
    %v2745 = vrot.slane %v2627, 3
    %2746 = vrot.lane.b32.xlu0 %v2745, 48
    %v2747 = vpop.permute.xlu0 %2746
    %v2749 = vrot.slane %v2627, 4
    %2750 = vrot.lane.b32.xlu0 %v2749, 64
    %v2751 = vpop.permute.xlu0 %2750
    %v2753 = vrot.slane %v2627, 5
    %2754 = vrot.lane.b32.xlu0 %v2753, 80
    %v2755 = vpop.permute.xlu0 %2754
    %v2757 = vrot.slane %v2627, 6
    %2758 = vrot.lane.b32.xlu0 %v2757, 96
    %v2759 = vpop.permute.xlu0 %2758
    %v2761 = vrot.slane %v2627, 7
    %2762 = vrot.lane.b32.xlu0 %v2761, 112
    %v2763 = vpop.permute.xlu0 %2762
    %v2765 = vrot.slane %v2629, 1
    %2766 = vrot.lane.b32.xlu0 %v2765, 16
    %v2767 = vpop.permute.xlu0 %2766
    %v2769 = vrot.slane %v2629, 2
    %2770 = vrot.lane.b32.xlu0 %v2769, 32
    %v2771 = vpop.permute.xlu0 %2770
    %v2773 = vrot.slane %v2629, 3
    %2774 = vrot.lane.b32.xlu0 %v2773, 48
    %v2775 = vpop.permute.xlu0 %2774
    %v2777 = vrot.slane %v2629, 4
    %2778 = vrot.lane.b32.xlu0 %v2777, 64
    %v2779 = vpop.permute.xlu0 %2778
    %v2781 = vrot.slane %v2629, 5
    %2782 = vrot.lane.b32.xlu0 %v2781, 80
    %v2783 = vpop.permute.xlu0 %2782
    %v2785 = vrot.slane %v2629, 6
    %2786 = vrot.lane.b32.xlu0 %v2785, 96
    %v2787 = vpop.permute.xlu0 %2786
    %v2789 = vrot.slane %v2629, 7
    %2790 = vrot.lane.b32.xlu0 %v2789, 112
    %v2791 = vpop.permute.xlu0 %2790
    %v2793 = vsel %vm395, %v2627, %v2739
    %v2794 = vsel %vm232, %v2793, %v2743
    %v2795 = vsel %vm1487, %v2794, %v2747
    %v2796 = vsel %vm118, %v2795, %v2751
    %v2797 = vsel %vm1490, %v2796, %v2755
    %v2798 = vsel %vm1492, %v2797, %v2759
    %v2799 = vsel %vm1494, %v2798, %v2763
    %v2800 = vsel %vm395, %v2629, %v2767
    %v2801 = vsel %vm232, %v2800, %v2771
    %v2802 = vsel %vm1487, %v2801, %v2775
    %v2803 = vsel %vm118, %v2802, %v2779
    %v2804 = vsel %vm1490, %v2803, %v2783
    %v2805 = vsel %vm1492, %v2804, %v2787
    %v2806 = vsel %vm1494, %v2805, %v2791
    %v2807 = vrot.slane %v2631, 1
    %2808 = vrot.lane.b32.xlu0 %v2807, 16
    %v2809 = vpop.permute.xlu0 %2808
    %v2811 = vrot.slane %v2631, 2
    %2812 = vrot.lane.b32.xlu0 %v2811, 32
    %v2813 = vpop.permute.xlu0 %2812
    %v2815 = vrot.slane %v2631, 3
    %2816 = vrot.lane.b32.xlu0 %v2815, 48
    %v2817 = vpop.permute.xlu0 %2816
    %v2819 = vrot.slane %v2631, 4
    %2820 = vrot.lane.b32.xlu0 %v2819, 64
    %v2821 = vpop.permute.xlu0 %2820
    %v2823 = vrot.slane %v2631, 5
    %2824 = vrot.lane.b32.xlu0 %v2823, 80
    %v2825 = vpop.permute.xlu0 %2824
    %v2827 = vrot.slane %v2631, 6
    %2828 = vrot.lane.b32.xlu0 %v2827, 96
    %v2829 = vpop.permute.xlu0 %2828
    %v2831 = vrot.slane %v2631, 7
    %2832 = vrot.lane.b32.xlu0 %v2831, 112
    %v2833 = vpop.permute.xlu0 %2832
    %v2835 = vrot.slane %v2633, 1
    %2836 = vrot.lane.b32.xlu0 %v2835, 16
    %v2837 = vpop.permute.xlu0 %2836
    %v2839 = vrot.slane %v2633, 2
    %2840 = vrot.lane.b32.xlu0 %v2839, 32
    %v2841 = vpop.permute.xlu0 %2840
    %v2843 = vrot.slane %v2633, 3
    %2844 = vrot.lane.b32.xlu0 %v2843, 48
    %v2845 = vpop.permute.xlu0 %2844
    %v2847 = vrot.slane %v2633, 4
    %2848 = vrot.lane.b32.xlu0 %v2847, 64
    %v2849 = vpop.permute.xlu0 %2848
    %v2851 = vrot.slane %v2633, 5
    %2852 = vrot.lane.b32.xlu0 %v2851, 80
    %v2853 = vpop.permute.xlu0 %2852
    %v2855 = vrot.slane %v2633, 6
    %2856 = vrot.lane.b32.xlu0 %v2855, 96
    %v2857 = vpop.permute.xlu0 %2856
    %v2859 = vrot.slane %v2633, 7
    %2860 = vrot.lane.b32.xlu0 %v2859, 112
    %v2861 = vpop.permute.xlu0 %2860
    %v2863 = vsel %vm395, %v2631, %v2809
    %v2864 = vsel %vm232, %v2863, %v2813
    %v2865 = vsel %vm1487, %v2864, %v2817
    %v2866 = vsel %vm118, %v2865, %v2821
    %v2867 = vsel %vm1490, %v2866, %v2825
    %v2868 = vsel %vm1492, %v2867, %v2829
    %v2869 = vsel %vm1494, %v2868, %v2833
    %v2870 = vsel %vm395, %v2633, %v2837
    %v2871 = vsel %vm232, %v2870, %v2841
    %v2872 = vsel %vm1487, %v2871, %v2845
    %v2873 = vsel %vm118, %v2872, %v2849
    %v2874 = vsel %vm1490, %v2873, %v2853
    %v2875 = vsel %vm1492, %v2874, %v2857
    %v2876 = vsel %vm1494, %v2875, %v2861
    %v2879 = vrot.slane %v1565, 7
    %v2880 = vrot.slane %v1572, 7
    %v2885 = vrot.slane %v1933, 6
    %v2886 = vrot.slane %v1940, 6
    %v2891 = vrot.slane %v2003, 5
    %v2892 = vrot.slane %v2010, 5
    %v2897 = vrot.slane %v2361, 4
    %v2898 = vrot.slane %v2368, 4
    %v2903 = vrot.slane %v2431, 3
    %v2904 = vrot.slane %v2438, 3
    %v2909 = vrot.slane %v2799, 2
    %v2910 = vrot.slane %v2806, 2
    %v2915 = vrot.slane %v2869, 1
    %v2916 = vrot.slane %v2876, 1
    %vm2919 = vcmask 1040384
    %v2920 = vsel %vm2919, %v1495, %v2879
    %v2921 = vsel %vm2919, %v1502, %v2880
    %vm2922 = vcmask 1041408
    %v2923 = vsel %vm2922, %v2920, %v2885
    %v2924 = vsel %vm2922, %v2921, %v2886
    %vm2925 = vcmask 1042432
    %v2926 = vsel %vm2925, %v2923, %v2891
    %v2927 = vsel %vm2925, %v2924, %v2892
    %vm2928 = vcmask 1043456
    %v2929 = vsel %vm2928, %v2926, %v2897
    %v2930 = vsel %vm2928, %v2927, %v2898
    %vm2931 = vcmask 1044480
    %v2932 = vsel %vm2931, %v2929, %v2903
    %v2933 = vsel %vm2931, %v2930, %v2904
    %vm2934 = vcmask 1045504
    %v2935 = vsel %vm2934, %v2932, %v2909
    %v2936 = vsel %vm2934, %v2933, %v2910
    %vm2937 = vcmask 1046528
    %v2938 = vsel %vm2937, %v2935, %v2915
    %v2939 = vsel %vm2937, %v2936, %v2916
    %2940 = vst [vmem:[%s11] sm:$0xff] %v2938
    %2941 = vst [vmem:[%s11 + $0x8] sm:$0xff] %v2939
    %2944 = vrot.lane.b32.xlu0 %v1421, 16
    %v2945 = vpop.permute.xlu0 %2944
    %2946 = vrot.lane.b32.xlu0 %v1426, 16
    %v2947 = vpop.permute.xlu0 %2946
    %2952 = vrot.lane.b32.xlu0 %v1853, 32
    %v2953 = vpop.permute.xlu0 %2952
    %2954 = vrot.lane.b32.xlu0 %v1858, 32
    %v2955 = vpop.permute.xlu0 %2954
    %2960 = vrot.lane.b32.xlu0 %v1863, 48
    %v2961 = vpop.permute.xlu0 %2960
    %2962 = vrot.lane.b32.xlu0 %v1868, 48
    %v2963 = vpop.permute.xlu0 %2962
    %v2966 = vsel %vm395, %v1411, %v2945
    %v2967 = vsel %vm395, %v1416, %v2947
    %v2968 = vsel %vm232, %v2966, %v2953
    %v2969 = vsel %vm232, %v2967, %v2955
    %v2970 = vsel %vm1487, %v2968, %v2961
    %v2971 = vsel %vm1487, %v2969, %v2963
    %2974 = vrot.lane.b32.xlu0 %v2291, 16
    %v2975 = vpop.permute.xlu0 %2974
    %2976 = vrot.lane.b32.xlu0 %v2296, 16
    %v2977 = vpop.permute.xlu0 %2976
    %2982 = vrot.lane.b32.xlu0 %v2719, 32
    %v2983 = vpop.permute.xlu0 %2982
    %2984 = vrot.lane.b32.xlu0 %v2724, 32
    %v2985 = vpop.permute.xlu0 %2984
    %2990 = vrot.lane.b32.xlu0 %v2729, 48
    %v2991 = vpop.permute.xlu0 %2990
    %2992 = vrot.lane.b32.xlu0 %v2734, 48
    %v2993 = vpop.permute.xlu0 %2992
    %v2996 = vsel %vm395, %v2281, %v2975
    %v2997 = vsel %vm395, %v2286, %v2977
    %v2998 = vsel %vm232, %v2996, %v2983
    %v2999 = vsel %vm232, %v2997, %v2985
    %v3000 = vsel %vm1487, %v2998, %v2991
    %v3001 = vsel %vm1487, %v2999, %v2993
    %v3002 = vld [vmem:[#allocation5] sm:$0xff]
    %v3003 = vld [vmem:[#allocation5 + $0x8] sm:$0xff]
    %v3004 = vld [vmem:[#allocation5 + $0x10] sm:$0xff]
    %v3005 = vld [vmem:[#allocation5 + $0x18] sm:$0xff]
    %v3006 = vld [vmem:[#allocation5 + $0x20] sm:$0xff]
    %v3007 = vld [vmem:[#allocation5 + $0x28] sm:$0xff]
    %v3008 = vld [vmem:[#allocation5 + $0x30] sm:$0xff]
    %v3009 = vld [vmem:[#allocation5 + $0x38] sm:$0xff]
    %v3011 = vsel %vm118, %v2970, 0
    %v3014 = vsel %vm118, %v2971, 0
    %v3017 = vsel %vm118, %v3000, 0
    %v3020 = vsel %vm118, %v3001, 0
    %3022 = vmatprep.subr.mxu0 0.0
    %3023 = vmatpush1.msra.mxu0 0.0
    %3024 = vmatprep.subr.mxu0 0.0
    %3025 = vmatpush1.msra.mxu0 0.0
    %3026 = vmatprep.subr.mxu0 0.0
    %3027 = vmatpush1.msra.mxu0 0.0
    %3028 = vmatprep.subr.mxu0 0.0
    %3029 = vmatpush1.msra.mxu0 0.0
    %3030 = vmatprep.subr.mxu0 0.0
    %3031 = vmatpush1.msra.mxu0 0.0
    %3032 = vmatprep.subr.mxu0 0.0
    %3033 = vmatpush1.msra.mxu0 0.0
    %3034 = vmatprep.subr.mxu0 0.0
    %3035 = vmatpush1.msra.mxu0 0.0
    %3036 = vmatprep.subr.mxu0 0.0
    %3037 = vmatpush1.msra.mxu0 0.0
    %3038 = vmatprep.subr.mxu0 0.0
    %3039 = vmatpush1.msra.mxu0 %v3009
    %3040 = vmatprep.subr.mxu0 0.0
    %3041 = vmatpush1.msra.mxu0 %v3008
    %3042 = vmatprep.subr.mxu0 0.0
    %3043 = vmatpush1.msra.mxu0 %v3007
    %3044 = vmatprep.subr.mxu0 0.0
    %3045 = vmatpush1.msra.mxu0 %v3006
    %3046 = vmatprep.subr.mxu0 0.0
    %3047 = vmatpush1.msra.mxu0 %v3005
    %3048 = vmatprep.subr.mxu0 0.0
    %3049 = vmatpush1.msra.mxu0 %v3004
    %3050 = vmatprep.subr.mxu0 0.0
    %3051 = vmatpush1.msra.mxu0 %v3003
    %3052 = vmatprep.subr.mxu0 0.0
    %3053 = vmatpush1.msra.mxu0 %v3002
    %3054 = vmatprep.subr.mxu0 0.0
    %3055 = vmatpush2.msra.mxu0 0.0
    %3056 = vmatprep.subr.mxu0 0.0
    %3057 = vmatpush2.msra.mxu0 0.0
    %3058 = vmatprep.subr.mxu0 0.0
    %3059 = vmatpush2.msra.mxu0 0.0
    %3060 = vmatprep.subr.mxu0 0.0
    %3061 = vmatpush2.msra.mxu0 0.0
    %3062 = vmatprep.subr.mxu0 0.0
    %3063 = vmatpush2.msra.mxu0 0.0
    %3064 = vmatprep.subr.mxu0 0.0
    %3065 = vmatpush2.msra.mxu0 0.0
    %3066 = vmatprep.subr.mxu0 0.0
    %3067 = vmatpush2.msra.mxu0 0.0
    %3068 = vmatprep.subr.mxu0 0.0
    %3069 = vmatpush2.msra.mxu0 0.0
    %3070 = vmatprep.subr.mxu0 0.0
    %3071 = vmatpush2.msra.mxu0 0.0
    %3072 = vmatprep.subr.mxu0 0.0
    %3073 = vmatpush2.msra.mxu0 0.0
    %3074 = vmatprep.subr.mxu0 0.0
    %3075 = vmatpush2.msra.mxu0 0.0
    %3076 = vmatprep.subr.mxu0 0.0
    %3077 = vmatpush2.msra.mxu0 0.0
    %3078 = vmatprep.subr.mxu0 0.0
    %3079 = vmatpush2.msra.mxu0 0.0
    %3080 = vmatprep.subr.mxu0 0.0
    %3081 = vmatpush2.msra.mxu0 0.0
    %3082 = vmatprep.subr.mxu0 0.0
    %3083 = vmatpush2.msra.mxu0 0.0
    %3084 = vmatprep.subr.mxu0 0.0
    %3085 = vmatpush2.msra.mxu0 0.0
    %3086 = vmatprep.mubr.f32.mxu0 0.0
    %3087 = vmatmul.mubr.f32.gmra.mxu0 %v3011
    %v3088 = vpop.f32.mrf.mxu0
    %v3089 = vadd.f32 0.0, %v3088
    %v3090 = vpop.f32.mrf.mxu0
    %3091 = vmatprep.mubr.f32.mxu0 0.0
    %3092 = vmatmul.mubr.f32.gmra.mxu0 %v3014
    %v3093 = vpop.f32.mrf.mxu0
    %v3094 = vadd.f32 0.0, %v3093
    %v3095 = vpop.f32.mrf.mxu0
    %3096 = vmatprep.mubr.f32.mxu0 0.0
    %3097 = vmatmul.mubr.f32.gmra.mxu0 %v3017
    %v3098 = vpop.f32.mrf.mxu0
    %v3099 = vadd.f32 0.0, %v3098
    %v3100 = vpop.f32.mrf.mxu0
    %3101 = vmatprep.mubr.f32.mxu0 0.0
    %3102 = vmatmul.mubr.f32.gmra.mxu0 %v3020
    %v3103 = vpop.f32.mrf.mxu0
    %v3104 = vadd.f32 0.0, %v3103
    %v3105 = vpop.f32.mrf.mxu0
    %3106 = vdwg.mxu0
    %3107 = vst.msk [vmem:[#allocation11] sm:$0xff] %vm118, %v3089
    %3108 = vst.msk [vmem:[#allocation11 + $0x8] sm:$0xff] %vm118, %v3094
    %3109 = vst.msk [vmem:[#allocation11 + $0x10] sm:$0xff] %vm118, %v3099
    %3110 = vst.msk [vmem:[#allocation11 + $0x18] sm:$0xff] %vm118, %v3104
    // Predicated region
    $region62: #{doge_attention_forward.1} parent=1 // pred_check
      _
    $region63: #{doge_attention_forward.1} parent=1 // pred_check_branch
      %3112 = sbr.rel (0) target = $region65
    $region64: #{doge_attention_forward.1} parent=1 // pred_region
      %s3114 = ssub.s32 512, 512
      %3115 = vsyncadd [#allocation4], %s3114
      %s3116 = sshll.u32 [#allocation11], 4
      %s3117 = int_to_ptr.vmem [resolvable:$true] %s3116
      %3122 = dma.vmem_to_hbm [thread:$0]  %s3117, 512, %s10, [#allocation4], 128, 128, 8
    $region65: #{doge_attention_forward.1} parent=1 // pred_fallthru
      _
    // Predicated region
    $region66: #{doge_attention_forward.1} parent=1 // pred_check
      _
    $region67: #{doge_attention_forward.1} parent=1 // pred_check_branch
      %3124 = sbr.rel (0) target = $region69
    $region68: #{doge_attention_forward.1} parent=1 // pred_region
      _
    $region69: #{doge_attention_forward.1} parent=1 // pred_fallthru
      _
    // Predicated region
    $region70: #{doge_attention_forward.1} parent=1 // pred_check
      _
    $region71: #{doge_attention_forward.1} parent=1 // pred_check_branch
      %3126 = sbr.rel (0) target = $region73
    $region72: #{doge_attention_forward.1} parent=1 // pred_region
      %3127 = dma.done [#allocation4], 512
    $region73: #{doge_attention_forward.1} parent=1 // pred_fallthru
      _
    // Predicated region
    $region74: #{doge_attention_forward.1} parent=1 // pred_check
      _
    $region75: #{doge_attention_forward.1} parent=1 // pred_check_branch
      %3129 = sbr.rel (0) target = $region77
    $region76: #{doge_attention_forward.1} parent=1 // pred_region
      _
    $region77: #{doge_attention_forward.1} parent=1 // pred_fallthru
      _
    %3130 = vsyncpa [#allocation3], 1
    %3131 = vsyncpa [#allocation6], 1
    %3132 = vsyncpa [#allocation9], 1
    %3133 = vsyncpa [#allocation4], 1

</llo_original>
